<compile_context>
chip_gen: v7x
topology: tpu7x:2x2x1
jax: 0.10.0
libtpu: 0.0.40
codegen_flags: <defaults>
</compile_context>

<pallas_src>
import jax
import jax.numpy as jnp
import numpy as np
from jax.experimental import pallas as pl
from jax.experimental.pallas import tpu as pltpu


# ----------------------------------------------------------------------------- kernels


def vasc_main_kernel(expr_ref, dropm_ref, invtau_ref, gdt_ref, eps_ref,
                     w1_ref, b1_ref, w2_ref, b2_ref, w3_ref, b3_ref,
                     wp1_ref, bp1_ref,
                     wd1_ref, bd1_ref, wd2_ref, bd2_ref, wd3_ref, bd3_ref,
                     wd4_ref, bd4_ref,
                     zmean_ref, y1_ref):
    """One batch tile: dropout -> encoder -> reparam -> decoder -> channel-1 logit / tau."""
    f32 = jnp.float32

    # nn.Dropout(0.5), training mode: mask already scaled by 1/keep_prob host-side.
    expr = expr_ref[...] * dropm_ref[...]

    # encoder: Linear(in,512) -> Linear(512,128) -> ReLU -> Linear(128,32) -> ReLU
    h1 = jnp.dot(expr, w1_ref[...], preferred_element_type=f32) + b1_ref[...]
    h2 = jnp.maximum(jnp.dot(h1, w2_ref[...], preferred_element_type=f32) + b2_ref[...], 0.0)
    h3 = jnp.maximum(jnp.dot(h2, w3_ref[...], preferred_element_type=f32) + b3_ref[...], 0.0)

    # fc_parm1 -> z_mean (latent dim zero-padded to 128 lanes; extra columns are exactly 0)
    z_mean_p = jnp.dot(h3, wp1_ref[...], preferred_element_type=f32) + bp1_ref[...]
    zmean_ref[...] = z_mean_p

    # reparameterize_normal with z_log_var == 1  ->  std = exp(0.5); eps padded with zeros
    z_p = z_mean_p + eps_ref[...] * jnp.exp(f32(0.5))

    # decoder: Linear ReLU x3, Linear, Sigmoid (wd1 padded with zero rows beyond L)
    d1 = jnp.maximum(jnp.dot(z_p, wd1_ref[...], preferred_element_type=f32) + bd1_ref[...], 0.0)
    d2 = jnp.maximum(jnp.dot(d1, wd2_ref[...], preferred_element_type=f32) + bd2_ref[...], 0.0)
    d3 = jnp.maximum(jnp.dot(d2, wd3_ref[...], preferred_element_type=f32) + bd3_ref[...], 0.0)
    xn = jax.nn.sigmoid(jnp.dot(d3, wd4_ref[...], preferred_element_type=f32) + bd4_ref[...])

    # sc_dropout_imitation channel 1 ("non-dropout" logit); Gumbel noise / tau precomputed
    # host-side, so only one log + one exp remain here:  y1 = (l1 + g)/tau = l1*inv_tau + g/tau
    l1 = jnp.log(1.0 - jnp.exp(-(xn * xn)) + 1e-20)
    y1_ref[...] = l1 * invtau_ref[...] + gdt_ref[...]


def vasc_softmax_mul_kernel(expr_ref, dropm_ref, y1_ref, out_ref):
    """One feature tile (full batch): exact softmax over axis=0 (batch) then out = expr * samples."""
    expr = expr_ref[...] * dropm_ref[...]
    y1 = y1_ref[...]
    m = jnp.max(y1, axis=0, keepdims=True)
    ey = jnp.exp(y1 - m)
    denom = jnp.sum(ey, axis=0, keepdims=True)
    out_ref[...] = expr * ey * pl.reciprocal(denom, approx=True)


# ----------------------------------------------------------------------------- wrapper


def init_params(key, in_dim, latent):
    """Deterministic nn.Linear-style init (uniform +-1/sqrt(fan_in)); biases stored as [1, out]."""
    layer_defs = [
        ("w1", "b1", in_dim, 512), ("w2", "b2", 512, 128), ("w3", "b3", 128, 32),
        ("wp1", "bp1", 32, latent),
        ("wd1", "bd1", latent, 32), ("wd2", "bd2", 32, 128),
        ("wd3", "bd3", 128, 512), ("wd4", "bd4", 512, in_dim),
    ]
    params = {}
    for i, (wn, bn, fin, fout) in enumerate(layer_defs):
        kw, kb = jax.random.split(jax.random.fold_in(key, i))
        bound = 1.0 / np.sqrt(fin)
        params[wn] = jax.random.uniform(kw, (fin, fout), jnp.float32, -bound, bound)
        params[bn] = jax.random.uniform(kb, (1, fout), jnp.float32, -bound, bound)
    return params


def _pick_tile(extent, preferred):
    return preferred if extent % preferred == 0 else extent


def vasc_forward_pallas(expr_ori, tau, drop_mask, eps_noise, u1, params,
                        *, block_m=128, block_d=128):
    N, D = expr_ori.shape
    L = params["wp1"].shape[1]
    LP = ((L + 127) // 128) * 128          # latent padded to lane width

    # --- host-side precompute (perf feedback: trim the EUP-bound elementwise tail) ---
    inv_tau = 1.0 / tau
    gumbel = -jnp.log(-jnp.log(u1 + 1e-8) + 1e-8)
    g_over_tau = gumbel * inv_tau
    eps_pad = jnp.pad(eps_noise, ((0, 0), (0, LP - L)))

    # latent-dim padding of the tiny weight matrices (extra rows/cols are exact zeros)
    wp1p = jnp.pad(params["wp1"], ((0, 0), (0, LP - L)))
    bp1p = jnp.pad(params["bp1"], ((0, 0), (0, LP - L)))
    wd1p = jnp.pad(params["wd1"], ((0, LP - L), (0, 0)))

    weights = [
        params["w1"], params["b1"], params["w2"], params["b2"],
        params["w3"], params["b3"], wp1p, bp1p,
        wd1p, params["bd1"], params["wd2"], params["bd2"],
        params["wd3"], params["bd3"], params["wd4"], params["bd4"],
    ]

    # ------------------------------- kernel 1: batch-tiled encoder/decoder -------------------------------
    tm = _pick_tile(N, block_m)
    grid_m = N // tm

    row_map = lambda i: (i, 0)
    whole_map = lambda i: (0, 0)
    stream_spec = lambda cols: pl.BlockSpec((tm, cols), row_map)
    in_specs = ([stream_spec(D)] * 4 + [stream_spec(LP)] +
                [pl.BlockSpec(w.shape, whole_map) for w in weights])
    out_specs = (pl.BlockSpec((tm, LP), row_map), pl.BlockSpec((tm, D), row_map))
    out_shape = (jax.ShapeDtypeStruct((N, LP), jnp.float32),   # z_mean (padded slab)
                 jax.ShapeDtypeStruct((N, D), jnp.float32))    # y1 = (l1 + gumbel)/tau

    weight_bytes = sum(int(np.prod(w.shape)) * 4 for w in weights)
    stream_tile_bytes = 4 * (4 * tm * D + tm * LP)
    out_tile_bytes = 4 * (tm * LP + tm * D)
    vmem_limit1 = int(min(96 * 2**20,
                          max(32 * 2**20,
                              weight_bytes + 2 * (stream_tile_bytes + out_tile_bytes) + (8 << 20))))

    z_mean_pad, y1 = pl.pallas_call(
        vasc_main_kernel,
        out_shape=out_shape,
        grid=(grid_m,),
        in_specs=in_specs,
        out_specs=out_specs,
        compiler_params=pltpu.CompilerParams(
            dimension_semantics=("parallel",),
            vmem_limit_bytes=vmem_limit1),
    )(expr_ori, drop_mask, inv_tau, g_over_tau, eps_pad, *weights)

    # ------------------------------- kernel 2: axis-0 softmax * expr, feature-tiled -------------------------------
    td = _pick_tile(D, block_d)
    grid_d = D // td
    col_spec = pl.BlockSpec((N, td), lambda j: (0, j))
    vmem_limit2 = int(min(96 * 2**20, max(32 * 2**20, 2 * 4 * 4 * N * td + (8 << 20))))

    out = pl.pallas_call(
        vasc_softmax_mul_kernel,
        out_shape=jax.ShapeDtypeStruct((N, D), jnp.float32),
        grid=(grid_d,),
        in_specs=[col_spec, col_spec, col_spec],
        out_specs=col_spec,
        compiler_params=pltpu.CompilerParams(
            dimension_semantics=("parallel",),
            vmem_limit_bytes=vmem_limit2),
    )(expr_ori, drop_mask, y1)

    # cheap epilogue in the wrapper (avoids lane-sparse (N, 2) kernel outputs)
    z_mean = z_mean_pad[:, :L]
    z = z_mean + eps_noise * jnp.exp(jnp.float32(0.5))
    z_log_var = jnp.ones((N, L), jnp.float32)

    # forward() returns [expr_ori, z, z_mean, z_log_var, out]
    return [expr_ori, z, z_mean, z_log_var, out]


def vasc_forward_ref(expr_ori, tau, drop_mask, eps_noise, u1, p):
    """Pure-JAX reference of the same forward pass (for a sanity check)."""
    expr = expr_ori * drop_mask
    h1 = expr @ p["w1"] + p["b1"]
    h2 = jnp.maximum(h1 @ p["w2"] + p["b2"], 0.0)
    h3 = jnp.maximum(h2 @ p["w3"] + p["b3"], 0.0)
    z_mean = h3 @ p["wp1"] + p["bp1"]
    z = z_mean + eps_noise * jnp.exp(0.5)
    d1 = jnp.maximum(z @ p["wd1"] + p["bd1"], 0.0)
    d2 = jnp.maximum(d1 @ p["wd2"] + p["bd2"], 0.0)
    d3 = jnp.maximum(d2 @ p["wd3"] + p["bd3"], 0.0)
    xn = jax.nn.sigmoid(d3 @ p["wd4"] + p["bd4"])
    e = jnp.exp(-(xn ** 2))
    l1 = jnp.log(1.0 - e + 1e-20)
    g1 = -jnp.log(-jnp.log(u1 + 1e-8) + 1e-8)
    y1 = (l1 + g1) / tau
    samples = jax.nn.softmax(y1, axis=0)   # PyTorch implicit dim for a 3-D tensor == dim 0
    out = expr * samples
    return z_mean, z, out


if __name__ == "__main__":
    IN_DIM, LATENT, N = 256, 2, 256   # N multiple of 128 so the batch grid is exercised

    key = jax.random.PRNGKey(0)
    k_param, k_x, k_tau, k_drop, k_eps, k_u = jax.random.split(key, 6)

    params = init_params(k_param, IN_DIM, LATENT)
    expr_ori = jax.random.uniform(k_x, (N, IN_DIM), jnp.float32)             # expression-like input
    tau = jax.random.uniform(k_tau, (N, IN_DIM), jnp.float32, 0.5, 1.5)      # temperature per entry

    # deterministic randomness matching forward(): dropout mask, reparam eps, gumbel uniform
    keep = jax.random.bernoulli(k_drop, 0.5, (N, IN_DIM)).astype(jnp.float32)
    drop_mask = keep / 0.5
    eps_noise = jax.random.normal(k_eps, (N, LATENT), jnp.float32)
    u1 = jax.random.uniform(k_u, (N, IN_DIM), jnp.float32)                   # channel-1 uniform noise

    outs = vasc_forward_pallas(expr_ori, tau, drop_mask, eps_noise, u1, params)
    outs = jax.block_until_ready(outs)
    _, z, z_mean, z_log_var, out = outs

    # sanity check against pure-JAX reference
    zm_r, z_r, out_r = vasc_forward_ref(expr_ori, tau, drop_mask, eps_noise, u1, params)
    ok = (np.allclose(np.asarray(z_mean), np.asarray(zm_r), atol=1e-2, rtol=1e-2)
          and np.allclose(np.asarray(z), np.asarray(z_r), atol=1e-2, rtol=1e-2)
          and np.allclose(np.asarray(out), np.asarray(out_r), atol=1e-2, rtol=1e-2))
    if not ok:
        raise AssertionError("Pallas kernel mismatch vs JAX reference")
    print("KERNEL_OK")
</pallas_src>

<mosaic_0001>
module attributes {stable_mosaic.version = 11 : i64} {
  func.func @vasc_main_kernel(%arg0: i32, %arg1: memref<128x256xf32, #tpu.memory_space<vmem>>, %arg2: memref<128x256xf32, #tpu.memory_space<vmem>>, %arg3: memref<128x256xf32, #tpu.memory_space<vmem>>, %arg4: memref<128x256xf32, #tpu.memory_space<vmem>>, %arg5: memref<128x128xf32, #tpu.memory_space<vmem>>, %arg6: memref<256x512xf32, #tpu.memory_space<vmem>>, %arg7: memref<1x512xf32, #tpu.memory_space<vmem>>, %arg8: memref<512x128xf32, #tpu.memory_space<vmem>>, %arg9: memref<1x128xf32, #tpu.memory_space<vmem>>, %arg10: memref<128x32xf32, #tpu.memory_space<vmem>>, %arg11: memref<1x32xf32, #tpu.memory_space<vmem>>, %arg12: memref<32x128xf32, #tpu.memory_space<vmem>>, %arg13: memref<1x128xf32, #tpu.memory_space<vmem>>, %arg14: memref<128x32xf32, #tpu.memory_space<vmem>>, %arg15: memref<1x32xf32, #tpu.memory_space<vmem>>, %arg16: memref<32x128xf32, #tpu.memory_space<vmem>>, %arg17: memref<1x128xf32, #tpu.memory_space<vmem>>, %arg18: memref<128x512xf32, #tpu.memory_space<vmem>>, %arg19: memref<1x512xf32, #tpu.memory_space<vmem>>, %arg20: memref<512x256xf32, #tpu.memory_space<vmem>>, %arg21: memref<1x256xf32, #tpu.memory_space<vmem>>, %arg22: memref<128x128xf32, #tpu.memory_space<vmem>>, %arg23: memref<128x256xf32, #tpu.memory_space<vmem>>) attributes {dimension_semantics = [#tpu.dimension_semantics<parallel>], iteration_bounds = array<i64: 2>, scalar_prefetch = 0 : i64, scratch_operands = 0 : i64, tpu.core_type = #tpu.core_type<tc>, window_params = [{transform_indices = @transform_0, window_bounds = array<i64: 128, 256>}, {transform_indices = @transform_1, window_bounds = array<i64: 128, 256>}, {transform_indices = @transform_2, window_bounds = array<i64: 128, 256>}, {transform_indices = @transform_3, window_bounds = array<i64: 128, 256>}, {transform_indices = @transform_4, window_bounds = array<i64: 128, 128>}, {pipeline_mode = #tpu.pipeline_mode<synchronous>, transform_indices = @transform_5, window_bounds = array<i64: 256, 512>}, {pipeline_mode = #tpu.pipeline_mode<synchronous>, transform_indices = @transform_6, window_bounds = array<i64: 1, 512>}, {pipeline_mode = #tpu.pipeline_mode<synchronous>, transform_indices = @transform_7, window_bounds = array<i64: 512, 128>}, {pipeline_mode = #tpu.pipeline_mode<synchronous>, transform_indices = @transform_8, window_bounds = array<i64: 1, 128>}, {pipeline_mode = #tpu.pipeline_mode<synchronous>, transform_indices = @transform_9, window_bounds = array<i64: 128, 32>}, {pipeline_mode = #tpu.pipeline_mode<synchronous>, transform_indices = @transform_10, window_bounds = array<i64: 1, 32>}, {pipeline_mode = #tpu.pipeline_mode<synchronous>, transform_indices = @transform_11, window_bounds = array<i64: 32, 128>}, {pipeline_mode = #tpu.pipeline_mode<synchronous>, transform_indices = @transform_12, window_bounds = array<i64: 1, 128>}, {pipeline_mode = #tpu.pipeline_mode<synchronous>, transform_indices = @transform_13, window_bounds = array<i64: 128, 32>}, {pipeline_mode = #tpu.pipeline_mode<synchronous>, transform_indices = @transform_14, window_bounds = array<i64: 1, 32>}, {pipeline_mode = #tpu.pipeline_mode<synchronous>, transform_indices = @transform_15, window_bounds = array<i64: 32, 128>}, {pipeline_mode = #tpu.pipeline_mode<synchronous>, transform_indices = @transform_16, window_bounds = array<i64: 1, 128>}, {pipeline_mode = #tpu.pipeline_mode<synchronous>, transform_indices = @transform_17, window_bounds = array<i64: 128, 512>}, {pipeline_mode = #tpu.pipeline_mode<synchronous>, transform_indices = @transform_18, window_bounds = array<i64: 1, 512>}, {pipeline_mode = #tpu.pipeline_mode<synchronous>, transform_indices = @transform_19, window_bounds = array<i64: 512, 256>}, {pipeline_mode = #tpu.pipeline_mode<synchronous>, transform_indices = @transform_20, window_bounds = array<i64: 1, 256>}, {transform_indices = @transform_21, window_bounds = array<i64: 128, 128>}, {transform_indices = @transform_22, window_bounds = array<i64: 128, 256>}]} {
    %c0 = arith.constant 0 : index
    %c0_0 = arith.constant 0 : index
    %0 = vector.load %arg1[%c0, %c0_0] : memref<128x256xf32, #tpu.memory_space<vmem>>, vector<128x256xf32>
    %c0_1 = arith.constant 0 : index
    %c0_2 = arith.constant 0 : index
    %1 = vector.load %arg2[%c0_1, %c0_2] : memref<128x256xf32, #tpu.memory_space<vmem>>, vector<128x256xf32>
    %2 = arith.mulf %0, %1 : vector<128x256xf32>
    %c0_3 = arith.constant 0 : index
    %c0_4 = arith.constant 0 : index
    %3 = vector.load %arg6[%c0_3, %c0_4] : memref<256x512xf32, #tpu.memory_space<vmem>>, vector<256x512xf32>
    %cst = arith.constant dense<0.000000e+00> : vector<128x512xf32>
    %4 = tpu.matmul %2, %3, %cst {dimension_numbers = #tpu.dot_dimension_numbers<[1], [0], [0], [1], [0, 0, 1, 1], [], []>} : vector<128x256xf32>, vector<256x512xf32>, vector<128x512xf32> -> vector<128x512xf32>
    %c0_5 = arith.constant 0 : index
    %c0_6 = arith.constant 0 : index
    %5 = vector.load %arg7[%c0_5, %c0_6] : memref<1x512xf32, #tpu.memory_space<vmem>>, vector<1x512xf32>
    %6 = vector.broadcast %5 : vector<1x512xf32> to vector<128x512xf32>
    %7 = arith.addf %4, %6 : vector<128x512xf32>
    %c0_7 = arith.constant 0 : index
    %c0_8 = arith.constant 0 : index
    %8 = vector.load %arg8[%c0_7, %c0_8] : memref<512x128xf32, #tpu.memory_space<vmem>>, vector<512x128xf32>
    %cst_9 = arith.constant dense<0.000000e+00> : vector<128x128xf32>
    %9 = tpu.matmul %7, %8, %cst_9 {dimension_numbers = #tpu.dot_dimension_numbers<[1], [0], [0], [1], [0, 0, 1, 1], [], []>} : vector<128x512xf32>, vector<512x128xf32>, vector<128x128xf32> -> vector<128x128xf32>
    %c0_10 = arith.constant 0 : index
    %c0_11 = arith.constant 0 : index
    %10 = vector.load %arg9[%c0_10, %c0_11] : memref<1x128xf32, #tpu.memory_space<vmem>>, vector<1x128xf32>
    %11 = vector.broadcast %10 : vector<1x128xf32> to vector<128x128xf32>
    %12 = arith.addf %9, %11 : vector<128x128xf32>
    %cst_12 = arith.constant 0.000000e+00 : f32
    %13 = vector.broadcast %cst_12 : f32 to vector<128x128xf32>
    %14 = arith.maximumf %12, %13 : vector<128x128xf32>
    %c0_13 = arith.constant 0 : index
    %c0_14 = arith.constant 0 : index
    %15 = vector.load %arg10[%c0_13, %c0_14] : memref<128x32xf32, #tpu.memory_space<vmem>>, vector<128x32xf32>
    %cst_15 = arith.constant dense<0.000000e+00> : vector<128x32xf32>
    %16 = tpu.matmul %14, %15, %cst_15 {dimension_numbers = #tpu.dot_dimension_numbers<[1], [0], [0], [1], [0, 0, 1, 1], [], []>} : vector<128x128xf32>, vector<128x32xf32>, vector<128x32xf32> -> vector<128x32xf32>
    %c0_16 = arith.constant 0 : index
    %c0_17 = arith.constant 0 : index
    %17 = vector.load %arg11[%c0_16, %c0_17] : memref<1x32xf32, #tpu.memory_space<vmem>>, vector<1x32xf32>
    %18 = vector.broadcast %17 : vector<1x32xf32> to vector<128x32xf32>
    %19 = arith.addf %16, %18 : vector<128x32xf32>
    %cst_18 = arith.constant 0.000000e+00 : f32
    %20 = vector.broadcast %cst_18 : f32 to vector<128x32xf32>
    %21 = arith.maximumf %19, %20 : vector<128x32xf32>
    %c0_19 = arith.constant 0 : index
    %c0_20 = arith.constant 0 : index
    %22 = vector.load %arg12[%c0_19, %c0_20] : memref<32x128xf32, #tpu.memory_space<vmem>>, vector<32x128xf32>
    %cst_21 = arith.constant dense<0.000000e+00> : vector<128x128xf32>
    %23 = tpu.matmul %21, %22, %cst_21 {dimension_numbers = #tpu.dot_dimension_numbers<[1], [0], [0], [1], [0, 0, 1, 1], [], []>} : vector<128x32xf32>, vector<32x128xf32>, vector<128x128xf32> -> vector<128x128xf32>
    %c0_22 = arith.constant 0 : index
    %c0_23 = arith.constant 0 : index
    %24 = vector.load %arg13[%c0_22, %c0_23] : memref<1x128xf32, #tpu.memory_space<vmem>>, vector<1x128xf32>
    %25 = vector.broadcast %24 : vector<1x128xf32> to vector<128x128xf32>
    %26 = arith.addf %23, %25 : vector<128x128xf32>
    %c0_24 = arith.constant 0 : index
    %c0_25 = arith.constant 0 : index
    %27 = vector.load %arg22[%c0_24, %c0_25] : memref<128x128xf32, #tpu.memory_space<vmem>>, vector<128x128xf32>
    tpu.vector_store %arg22[%c0_24, %c0_25], %26 {strides = array<i32>} : memref<128x128xf32, #tpu.memory_space<vmem>>, vector<128x128xf32>,
    %c0_26 = arith.constant 0 : index
    %c0_27 = arith.constant 0 : index
    %28 = vector.load %arg5[%c0_26, %c0_27] : memref<128x128xf32, #tpu.memory_space<vmem>>, vector<128x128xf32>
    %cst_28 = arith.constant 5.000000e-01 : f32
    %29 = math.exp %cst_28 : f32
    %30 = vector.broadcast %29 : f32 to vector<128x128xf32>
    %31 = arith.mulf %28, %30 : vector<128x128xf32>
    %32 = arith.addf %26, %31 : vector<128x128xf32>
    %c0_29 = arith.constant 0 : index
    %c0_30 = arith.constant 0 : index
    %33 = vector.load %arg14[%c0_29, %c0_30] : memref<128x32xf32, #tpu.memory_space<vmem>>, vector<128x32xf32>
    %cst_31 = arith.constant dense<0.000000e+00> : vector<128x32xf32>
    %34 = tpu.matmul %32, %33, %cst_31 {dimension_numbers = #tpu.dot_dimension_numbers<[1], [0], [0], [1], [0, 0, 1, 1], [], []>} : vector<128x128xf32>, vector<128x32xf32>, vector<128x32xf32> -> vector<128x32xf32>
    %c0_32 = arith.constant 0 : index
    %c0_33 = arith.constant 0 : index
    %35 = vector.load %arg15[%c0_32, %c0_33] : memref<1x32xf32, #tpu.memory_space<vmem>>, vector<1x32xf32>
    %36 = vector.broadcast %35 : vector<1x32xf32> to vector<128x32xf32>
    %37 = arith.addf %34, %36 : vector<128x32xf32>
    %cst_34 = arith.constant 0.000000e+00 : f32
    %38 = vector.broadcast %cst_34 : f32 to vector<128x32xf32>
    %39 = arith.maximumf %37, %38 : vector<128x32xf32>
    %c0_35 = arith.constant 0 : index
    %c0_36 = arith.constant 0 : index
    %40 = vector.load %arg16[%c0_35, %c0_36] : memref<32x128xf32, #tpu.memory_space<vmem>>, vector<32x128xf32>
    %cst_37 = arith.constant dense<0.000000e+00> : vector<128x128xf32>
    %41 = tpu.matmul %39, %40, %cst_37 {dimension_numbers = #tpu.dot_dimension_numbers<[1], [0], [0], [1], [0, 0, 1, 1], [], []>} : vector<128x32xf32>, vector<32x128xf32>, vector<128x128xf32> -> vector<128x128xf32>
    %c0_38 = arith.constant 0 : index
    %c0_39 = arith.constant 0 : index
    %42 = vector.load %arg17[%c0_38, %c0_39] : memref<1x128xf32, #tpu.memory_space<vmem>>, vector<1x128xf32>
    %43 = vector.broadcast %42 : vector<1x128xf32> to vector<128x128xf32>
    %44 = arith.addf %41, %43 : vector<128x128xf32>
    %cst_40 = arith.constant 0.000000e+00 : f32
    %45 = vector.broadcast %cst_40 : f32 to vector<128x128xf32>
    %46 = arith.maximumf %44, %45 : vector<128x128xf32>
    %c0_41 = arith.constant 0 : index
    %c0_42 = arith.constant 0 : index
    %47 = vector.load %arg18[%c0_41, %c0_42] : memref<128x512xf32, #tpu.memory_space<vmem>>, vector<128x512xf32>
    %cst_43 = arith.constant dense<0.000000e+00> : vector<128x512xf32>
    %48 = tpu.matmul %46, %47, %cst_43 {dimension_numbers = #tpu.dot_dimension_numbers<[1], [0], [0], [1], [0, 0, 1, 1], [], []>} : vector<128x128xf32>, vector<128x512xf32>, vector<128x512xf32> -> vector<128x512xf32>
    %c0_44 = arith.constant 0 : index
    %c0_45 = arith.constant 0 : index
    %49 = vector.load %arg19[%c0_44, %c0_45] : memref<1x512xf32, #tpu.memory_space<vmem>>, vector<1x512xf32>
    %50 = vector.broadcast %49 : vector<1x512xf32> to vector<128x512xf32>
    %51 = arith.addf %48, %50 : vector<128x512xf32>
    %cst_46 = arith.constant 0.000000e+00 : f32
    %52 = vector.broadcast %cst_46 : f32 to vector<128x512xf32>
    %53 = arith.maximumf %51, %52 : vector<128x512xf32>
    %c0_47 = arith.constant 0 : index
    %c0_48 = arith.constant 0 : index
    %54 = vector.load %arg20[%c0_47, %c0_48] : memref<512x256xf32, #tpu.memory_space<vmem>>, vector<512x256xf32>
    %cst_49 = arith.constant dense<0.000000e+00> : vector<128x256xf32>
    %55 = tpu.matmul %53, %54, %cst_49 {dimension_numbers = #tpu.dot_dimension_numbers<[1], [0], [0], [1], [0, 0, 1, 1], [], []>} : vector<128x512xf32>, vector<512x256xf32>, vector<128x256xf32> -> vector<128x256xf32>
    %c0_50 = arith.constant 0 : index
    %c0_51 = arith.constant 0 : index
    %56 = vector.load %arg21[%c0_50, %c0_51] : memref<1x256xf32, #tpu.memory_space<vmem>>, vector<1x256xf32>
    %57 = vector.broadcast %56 : vector<1x256xf32> to vector<128x256xf32>
    %58 = arith.addf %55, %57 : vector<128x256xf32>
    %59 = arith.negf %58 : vector<128x256xf32>
    %60 = math.exp %59 : vector<128x256xf32>
    %cst_52 = arith.constant 1.000000e+00 : f32
    %61 = vector.broadcast %cst_52 : f32 to vector<128x256xf32>
    %62 = arith.addf %61, %60 : vector<128x256xf32>
    %63 = arith.divf %61, %62 : vector<128x256xf32>
    %64 = arith.mulf %63, %63 : vector<128x256xf32>
    %cst_53 = arith.constant 0.000000e+00 : f32
    %65 = vector.broadcast %cst_53 : f32 to vector<128x256xf32>
    %66 = arith.subf %65, %64 : vector<128x256xf32>
    %67 = math.exp %66 : vector<128x256xf32>
    %cst_54 = arith.constant 1.000000e+00 : f32
    %68 = vector.broadcast %cst_54 : f32 to vector<128x256xf32>
    %69 = arith.subf %68, %67 : vector<128x256xf32>
    %cst_55 = arith.constant 9.99999968E-21 : f32
    %70 = vector.broadcast %cst_55 : f32 to vector<128x256xf32>
    %71 = arith.addf %69, %70 : vector<128x256xf32>
    %72 = math.log %71 : vector<128x256xf32>
    %c0_56 = arith.constant 0 : index
    %c0_57 = arith.constant 0 : index
    %73 = vector.load %arg3[%c0_56, %c0_57] : memref<128x256xf32, #tpu.memory_space<vmem>>, vector<128x256xf32>
    %74 = arith.mulf %72, %73 : vector<128x256xf32>
    %c0_58 = arith.constant 0 : index
    %c0_59 = arith.constant 0 : index
    %75 = vector.load %arg4[%c0_58, %c0_59] : memref<128x256xf32, #tpu.memory_space<vmem>>, vector<128x256xf32>
    %76 = arith.addf %74, %75 : vector<128x256xf32>
    %c0_60 = arith.constant 0 : index
    %c0_61 = arith.constant 0 : index
    %77 = vector.load %arg23[%c0_60, %c0_61] : memref<128x256xf32, #tpu.memory_space<vmem>>, vector<128x256xf32>
    tpu.vector_store %arg23[%c0_60, %c0_61], %76 {strides = array<i32>} : memref<128x256xf32, #tpu.memory_space<vmem>>, vector<128x256xf32>,
    return
  }
  func.func @transform_0(%arg0: i32) -> (i32, i32) {
    %c0_i32 = arith.constant 0 : i32
    %c0_i32_0 = arith.constant 0 : i32
    return %arg0, %c0_i32 : i32, i32
  }
  func.func @transform_1(%arg0: i32) -> (i32, i32) {
    %c0_i32 = arith.constant 0 : i32
    %c0_i32_0 = arith.constant 0 : i32
    return %arg0, %c0_i32 : i32, i32
  }
  func.func @transform_2(%arg0: i32) -> (i32, i32) {
    %c0_i32 = arith.constant 0 : i32
    %c0_i32_0 = arith.constant 0 : i32
    return %arg0, %c0_i32 : i32, i32
  }
  func.func @transform_3(%arg0: i32) -> (i32, i32) {
    %c0_i32 = arith.constant 0 : i32
    %c0_i32_0 = arith.constant 0 : i32
    return %arg0, %c0_i32 : i32, i32
  }
  func.func @transform_4(%arg0: i32) -> (i32, i32) {
    %c0_i32 = arith.constant 0 : i32
    %c0_i32_0 = arith.constant 0 : i32
    return %arg0, %c0_i32 : i32, i32
  }
  func.func @transform_5(%arg0: i32) -> (i32, i32) {
    %c0_i32 = arith.constant 0 : i32
    %c0_i32_0 = arith.constant 0 : i32
    %c0_i32_1 = arith.constant 0 : i32
    return %c0_i32, %c0_i32_0 : i32, i32
  }
  func.func @transform_6(%arg0: i32) -> (i32, i32) {
    %c0_i32 = arith.constant 0 : i32
    %c0_i32_0 = arith.constant 0 : i32
    %c0_i32_1 = arith.constant 0 : i32
    return %c0_i32, %c0_i32_0 : i32, i32
  }
  func.func @transform_7(%arg0: i32) -> (i32, i32) {
    %c0_i32 = arith.constant 0 : i32
    %c0_i32_0 = arith.constant 0 : i32
    %c0_i32_1 = arith.constant 0 : i32
    return %c0_i32, %c0_i32_0 : i32, i32
  }
  func.func @transform_8(%arg0: i32) -> (i32, i32) {
    %c0_i32 = arith.constant 0 : i32
    %c0_i32_0 = arith.constant 0 : i32
    %c0_i32_1 = arith.constant 0 : i32
    return %c0_i32, %c0_i32_0 : i32, i32
  }
  func.func @transform_9(%arg0: i32) -> (i32, i32) {
    %c0_i32 = arith.constant 0 : i32
    %c0_i32_0 = arith.constant 0 : i32
    %c0_i32_1 = arith.constant 0 : i32
    return %c0_i32, %c0_i32_0 : i32, i32
  }
  func.func @transform_10(%arg0: i32) -> (i32, i32) {
    %c0_i32 = arith.constant 0 : i32
    %c0_i32_0 = arith.constant 0 : i32
    %c0_i32_1 = arith.constant 0 : i32
    return %c0_i32, %c0_i32_0 : i32, i32
  }
  func.func @transform_11(%arg0: i32) -> (i32, i32) {
    %c0_i32 = arith.constant 0 : i32
    %c0_i32_0 = arith.constant 0 : i32
    %c0_i32_1 = arith.constant 0 : i32
    return %c0_i32, %c0_i32_0 : i32, i32
  }
  func.func @transform_12(%arg0: i32) -> (i32, i32) {
    %c0_i32 = arith.constant 0 : i32
    %c0_i32_0 = arith.constant 0 : i32
    %c0_i32_1 = arith.constant 0 : i32
    return %c0_i32, %c0_i32_0 : i32, i32
  }
  func.func @transform_13(%arg0: i32) -> (i32, i32) {
    %c0_i32 = arith.constant 0 : i32
    %c0_i32_0 = arith.constant 0 : i32
    %c0_i32_1 = arith.constant 0 : i32
    return %c0_i32, %c0_i32_0 : i32, i32
  }
  func.func @transform_14(%arg0: i32) -> (i32, i32) {
    %c0_i32 = arith.constant 0 : i32
    %c0_i32_0 = arith.constant 0 : i32
    %c0_i32_1 = arith.constant 0 : i32
    return %c0_i32, %c0_i32_0 : i32, i32
  }
  func.func @transform_15(%arg0: i32) -> (i32, i32) {
    %c0_i32 = arith.constant 0 : i32
    %c0_i32_0 = arith.constant 0 : i32
    %c0_i32_1 = arith.constant 0 : i32
    return %c0_i32, %c0_i32_0 : i32, i32
  }
  func.func @transform_16(%arg0: i32) -> (i32, i32) {
    %c0_i32 = arith.constant 0 : i32
    %c0_i32_0 = arith.constant 0 : i32
    %c0_i32_1 = arith.constant 0 : i32
    return %c0_i32, %c0_i32_0 : i32, i32
  }
  func.func @transform_17(%arg0: i32) -> (i32, i32) {
    %c0_i32 = arith.constant 0 : i32
    %c0_i32_0 = arith.constant 0 : i32
    %c0_i32_1 = arith.constant 0 : i32
    return %c0_i32, %c0_i32_0 : i32, i32
  }
  func.func @transform_18(%arg0: i32) -> (i32, i32) {
    %c0_i32 = arith.constant 0 : i32
    %c0_i32_0 = arith.constant 0 : i32
    %c0_i32_1 = arith.constant 0 : i32
    return %c0_i32, %c0_i32_0 : i32, i32
  }
  func.func @transform_19(%arg0: i32) -> (i32, i32) {
    %c0_i32 = arith.constant 0 : i32
    %c0_i32_0 = arith.constant 0 : i32
    %c0_i32_1 = arith.constant 0 : i32
    return %c0_i32, %c0_i32_0 : i32, i32
  }
  func.func @transform_20(%arg0: i32) -> (i32, i32) {
    %c0_i32 = arith.constant 0 : i32
    %c0_i32_0 = arith.constant 0 : i32
    %c0_i32_1 = arith.constant 0 : i32
    return %c0_i32, %c0_i32_0 : i32, i32
  }
  func.func @transform_21(%arg0: i32) -> (i32, i32) {
    %c0_i32 = arith.constant 0 : i32
    %c0_i32_0 = arith.constant 0 : i32
    return %arg0, %c0_i32 : i32, i32
  }
  func.func @transform_22(%arg0: i32) -> (i32, i32) {
    %c0_i32 = arith.constant 0 : i32
    %c0_i32_0 = arith.constant 0 : i32
    return %arg0, %c0_i32 : i32, i32
  }
}

</mosaic_0001>

<llo_original>
// kernel: tpu_custom_call.1
$region0: #{tpu_custom_call.1}
  #allocation0 [shape = 'u32[]', space=smem, size = 0x4, offset = 0x4, fixed_abs, tag = 'smem constant byte address 0x4 - core index']
  #allocation1 [shape = 'u32[144,128]{1,0:T(1,128)}', space=vmem, size = 0x12000, scoped, tag = 'internal scratch']
  %s0 = inlined_call_operand.hbm [shape: f32[256,256], index: 0, kind: input, shape index: {}]
  %s1 = inlined_call_operand.hbm [shape: f32[256,256], index: 1, kind: input, shape index: {}]
  %s2 = inlined_call_operand.hbm [shape: f32[256,256], index: 2, kind: input, shape index: {}]
  %s3 = inlined_call_operand.hbm [shape: f32[256,256], index: 3, kind: input, shape index: {}]
  %s4 = inlined_call_operand.vmem [shape: f32[256,128], index: 4, kind: input, shape index: {}]
  %s5 = inlined_call_operand.hbm [shape: f32[256,512], index: 5, kind: input, shape index: {}]
  %s6 = inlined_call_operand.hbm [shape: f32[1,512], index: 6, kind: input, shape index: {}]
  %s7 = inlined_call_operand.hbm [shape: f32[512,128], index: 7, kind: input, shape index: {}]
  %s8 = inlined_call_operand.vmem [shape: f32[1,128], index: 8, kind: input, shape index: {}]
  %s9 = inlined_call_operand.vmem [shape: f32[128,32], index: 9, kind: input, shape index: {}]
  %s10 = inlined_call_operand.hbm [shape: f32[1,32], index: 10, kind: input, shape index: {}]
  %s11 = inlined_call_operand.vmem [shape: f32[32,128], index: 11, kind: input, shape index: {}]
  %s12 = inlined_call_operand.vmem [shape: f32[1,128], index: 12, kind: input, shape index: {}]
  %s13 = inlined_call_operand.vmem [shape: f32[128,32], index: 13, kind: input, shape index: {}]
  %s14 = inlined_call_operand.vmem [shape: f32[1,32], index: 14, kind: input, shape index: {}]
  %s15 = inlined_call_operand.vmem [shape: f32[32,128], index: 15, kind: input, shape index: {}]
  %s16 = inlined_call_operand.vmem [shape: f32[1,128], index: 16, kind: input, shape index: {}]
  %s17 = inlined_call_operand.hbm [shape: f32[128,512], index: 17, kind: input, shape index: {}]
  %s18 = inlined_call_operand.vmem [shape: f32[1,512], index: 18, kind: input, shape index: {}]
  %s19 = inlined_call_operand.hbm [shape: f32[512,256], index: 19, kind: input, shape index: {}]
  %s20 = inlined_call_operand.vmem [shape: f32[1,256], index: 20, kind: input, shape index: {}]
  %s21 = inlined_call_operand.hbm [shape: f32[256,128], index: 21, kind: output, shape index: {0}]
  %s22 = inlined_call_operand.hbm [shape: f32[256,256], index: 22, kind: output, shape index: {1}]
  %23 = xla_tuple %s21, %s22
  %s24 = sld [smem:[#allocation0]]
  $region165: #{tpu_custom_call.1} parent=0
    _
  %s26 = ssub.s32 1, %s24
  %s27 = scalar_select 0, %s26, %s24
  $region1: #{tpu_custom_call.1} parent=0
    #allocation2 [shape = 'u8[262144]{0}', space=vmem, size = 0x40000, scoped, tag = 'input window, operand 0']
    #allocation3 [shape = 's32[2]{0}', space=sflag, size = 0x8, scoped, tag = 'scoped memory for tpu_custom_call.1']
    #allocation4 [shape = 's32[2]{0}', space=sflag, size = 0x8, scoped, tag = 'scoped memory for tpu_custom_call.1']
    #allocation5 [shape = 'u8[262144]{0}', space=vmem, size = 0x40000, scoped, tag = 'input window, operand 1']
    #allocation6 [shape = 's32[2]{0}', space=sflag, size = 0x8, scoped, tag = 'scoped memory for tpu_custom_call.1']
    #allocation7 [shape = 'u8[262144]{0}', space=vmem, size = 0x40000, scoped, tag = 'input window, operand 2']
    #allocation8 [shape = 'u8[262144]{0}', space=vmem, size = 0x40000, scoped, tag = 'input window, operand 3']
    #allocation9 [shape = 's32[2]{0}', space=sflag, size = 0x8, scoped, tag = 'scoped memory for tpu_custom_call.1']
    #allocation10 [shape = 'u8[524288]{0}', space=vmem, size = 0x80000, scoped, tag = 'input window, operand 5, single buffered']
    #allocation11 [shape = 'u8[2048]{0}', space=vmem, size = 0x800, scoped, tag = 'input window, operand 6, single buffered']
    #allocation12 [shape = 's32[1]{0}', space=sflag, size = 0x4, scoped, tag = 'scoped memory for tpu_custom_call.1']
    #allocation13 [shape = 'u8[262144]{0}', space=vmem, size = 0x40000, scoped, tag = 'input window, operand 7, single buffered']
    #allocation14 [shape = 'u8[512]{0}', space=vmem, size = 0x400, scoped, tag = 'input window, operand 10, single buffered']
    #allocation15 [shape = 's32[1]{0}', space=sflag, size = 0x4, scoped, tag = 'scoped memory for tpu_custom_call.1']
    #allocation16 [shape = 'u8[262144]{0}', space=vmem, size = 0x40000, scoped, tag = 'input window, operand 17, single buffered']
    #allocation17 [shape = 'u8[524288]{0}', space=vmem, size = 0x80000, scoped, tag = 'input window, operand 19, single buffered']
    #allocation18 [shape = 's32[1]{0}', space=sflag, size = 0x4, scoped, tag = 'scoped memory for tpu_custom_call.1']
    #allocation19 [shape = 'u8[131072]{0}', space=vmem, size = 0x20000, scoped, tag = 'output window, operand 0']
    #allocation20 [shape = 'u8[262144]{0}', space=vmem, size = 0x40000, scoped, tag = 'output window, operand 1']
    #allocation21 [shape = 's32[2]{0}', space=sflag, size = 0x8, scoped, tag = 'scoped memory for tpu_custom_call.1']
    %28 = vsyncpa [#allocation3], 0
    %s29 = scalar_lea.sflag [#allocation3], 1
    %30 = vsyncpa %s29, 0
    %31 = vsyncpa [#allocation6], 0
    %s32 = scalar_lea.sflag [#allocation6], 1
    %33 = vsyncpa %s32, 0
    %34 = vsyncpa [#allocation9], 0
    %s35 = scalar_lea.sflag [#allocation9], 1
    %36 = vsyncpa %s35, 0
    %37 = vsyncpa [#allocation12], 0
    %38 = vsyncpa [#allocation15], 0
    %39 = vsyncpa [#allocation18], 0
    %40 = vsyncpa [#allocation4], 0
    %s41 = scalar_lea.sflag [#allocation4], 1
    %42 = vsyncpa %s41, 0
    %43 = vsyncpa [#allocation21], 0
    %s44 = scalar_lea.sflag [#allocation21], 1
    %45 = vsyncpa %s44, 0
    loop: start=0, step=1, limit=4
    $region2: #{tpu_custom_call.1} parent=1 // loop_pre_header
      _
    $region3: #{tpu_custom_call.1} parent=1 // loop_header
      %s47 = sphi 0, %s51
      %p48 = scmp.ge.s32.totalorder %s47, 4
      %s57 = sphi 0, %s59
      %s60 = sphi 0, %s57
      %s61 = sphi 0, %s60
      %s77 = sphi 0, %s61
      %s83 = sphi 0, %s85
      %s86 = sphi 0, %s83
      %s87 = sphi 0, %s86
      %s103 = sphi 0, %s87
      %s109 = sphi 0, %s111
      %s112 = sphi 0, %s109
      %s113 = sphi 0, %s112
      %s129 = sphi 0, %s113
      %s135 = sphi 0, %s137
      %s138 = sphi 0, %s135
      %s139 = sphi 0, %s138
      %s155 = sphi 0, %s139
      %s161 = sphi 0, %s163
      %s164 = sphi 0, %s161
      %s165 = sphi 0, %s164
      %s181 = sphi 0, %s165
      %s185 = sphi 0, %s185
      %s187 = sphi 0, %s185
      %s188 = sphi 0, %s187
      %s202 = sphi 0, %s188
      %s206 = sphi 0, %s206
      %s208 = sphi 0, %s206
      %s209 = sphi 0, %s208
      %s223 = sphi 0, %s209
      %s227 = sphi 0, %s227
      %s229 = sphi 0, %s227
      %s230 = sphi 0, %s229
      %s244 = sphi 0, %s230
      %s248 = sphi 0, %s248
      %s250 = sphi 0, %s248
      %s251 = sphi 0, %s250
      %s265 = sphi 0, %s251
      %s269 = sphi 0, %s269
      %s271 = sphi 0, %s269
      %s272 = sphi 0, %s271
      %s286 = sphi 0, %s272
      %s290 = sphi 0, %s290
      %s292 = sphi 0, %s290
      %s293 = sphi 0, %s292
      %s307 = sphi 0, %s293
      %s311 = sphi 0, %s311
      %s313 = sphi 0, %s311
      %s314 = sphi 0, %s313
      %s328 = sphi 0, %s314
      %s332 = sphi 0, %s332
      %s334 = sphi 0, %s332
      %s335 = sphi 0, %s334
      %s349 = sphi 0, %s335
      %s353 = sphi 0, %s353
      %s355 = sphi 0, %s353
      %s356 = sphi 0, %s355
      %s370 = sphi 0, %s356
      %s374 = sphi 0, %s374
      %s376 = sphi 0, %s374
      %s377 = sphi 0, %s376
      %s391 = sphi 0, %s377
      %s395 = sphi 0, %s395
      %s397 = sphi 0, %s395
      %s398 = sphi 0, %s397
      %s412 = sphi 0, %s398
      %s416 = sphi 0, %s416
      %s418 = sphi 0, %s416
      %s419 = sphi 0, %s418
      %s433 = sphi 0, %s419
      %s437 = sphi 0, %s437
      %s439 = sphi 0, %s437
      %s440 = sphi 0, %s439
      %s454 = sphi 0, %s440
      %s458 = sphi 0, %s458
      %s460 = sphi 0, %s458
      %s461 = sphi 0, %s460
      %s475 = sphi 0, %s461
      %s479 = sphi 0, %s479
      %s481 = sphi 0, %s479
      %s482 = sphi 0, %s481
      %s496 = sphi 0, %s482
      %s500 = sphi 0, %s500
      %s502 = sphi 0, %s500
      %s503 = sphi 0, %s502
      %s517 = sphi 0, %s503
      %s523 = sphi 0, %s525
      %s526 = sphi 0, %s523
      %s527 = sphi 0, %s526
      %s543 = sphi 0, %s527
      %s549 = sphi 0, %s551
      %s552 = sphi 0, %s549
      %s553 = sphi 0, %s552
      %s569 = sphi 0, %s553
    $region4: #{tpu_custom_call.1} parent=1 // loop_header_branch
      %50 = sbr.rel (%p48) target = $region8
    $region5: #{tpu_custom_call.1} parent=1 // loop_body
      %s52 = ssub.s32 %s47, 1
      %s53 = ssub.s32 %s47, 2
      %s54 = sadd.s32 %s47, 1
      %s55 = ssub.s32 %s47, %s54
      %p56 = scmp.eq.s32.totalorder %s55, 0
      %s58 = sadd.s32 %s57, 1
      %s59 = scalar_select %p56, %s57, %s58
      %p62 = pneg %p56
      %p63 = scmp.eq.s32.totalorder %s47, 1
      %p64 = por %p62, %p63
      %p65 = scmp.ne.s32.totalorder %s57, %s60
      %p66 = scmp.eq.s32.totalorder %s47, 0
      %p67 = por %p65, %p66
      %p68 = scmp.ne.s32.totalorder %s57, %s60
      %p69 = scmp.eq.s32.totalorder %s52, 1
      %p70 = por %p68, %p69
      %p71 = scmp.ne.s32.totalorder %s60, %s61
      %p72 = scmp.eq.s32.totalorder %s52, 0
      %p73 = por %p71, %p72
      %p74 = scmp.ne.s32.totalorder %s60, %s61
      %p75 = scmp.eq.s32.totalorder %s53, 1
      %p76 = por %p74, %p75
      %p78 = scmp.ne.s32.totalorder %s61, %s77
      %p79 = scmp.eq.s32.totalorder %s53, 0
      %p80 = por %p78, %p79
      %s81 = ssub.s32 %s47, %s54
      %p82 = scmp.eq.s32.totalorder %s81, 0
      %s84 = sadd.s32 %s83, 1
      %s85 = scalar_select %p82, %s83, %s84
      %p88 = pneg %p82
      %p89 = scmp.eq.s32.totalorder %s47, 1
      %p90 = por %p88, %p89
      %p91 = scmp.ne.s32.totalorder %s83, %s86
      %p92 = scmp.eq.s32.totalorder %s47, 0
      %p93 = por %p91, %p92
      %p94 = scmp.ne.s32.totalorder %s83, %s86
      %p95 = scmp.eq.s32.totalorder %s52, 1
      %p96 = por %p94, %p95
      %p97 = scmp.ne.s32.totalorder %s86, %s87
      %p98 = scmp.eq.s32.totalorder %s52, 0
      %p99 = por %p97, %p98
      %p100 = scmp.ne.s32.totalorder %s86, %s87
      %p101 = scmp.eq.s32.totalorder %s53, 1
      %p102 = por %p100, %p101
      %p104 = scmp.ne.s32.totalorder %s87, %s103
      %p105 = scmp.eq.s32.totalorder %s53, 0
      %p106 = por %p104, %p105
      %s107 = ssub.s32 %s47, %s54
      %p108 = scmp.eq.s32.totalorder %s107, 0
      %s110 = sadd.s32 %s109, 1
      %s111 = scalar_select %p108, %s109, %s110
      %p114 = pneg %p108
      %p115 = scmp.eq.s32.totalorder %s47, 1
      %p116 = por %p114, %p115
      %p117 = scmp.ne.s32.totalorder %s109, %s112
      %p118 = scmp.eq.s32.totalorder %s47, 0
      %p119 = por %p117, %p118
      %p120 = scmp.ne.s32.totalorder %s109, %s112
      %p121 = scmp.eq.s32.totalorder %s52, 1
      %p122 = por %p120, %p121
      %p123 = scmp.ne.s32.totalorder %s112, %s113
      %p124 = scmp.eq.s32.totalorder %s52, 0
      %p125 = por %p123, %p124
      %p126 = scmp.ne.s32.totalorder %s112, %s113
      %p127 = scmp.eq.s32.totalorder %s53, 1
      %p128 = por %p126, %p127
      %p130 = scmp.ne.s32.totalorder %s113, %s129
      %p131 = scmp.eq.s32.totalorder %s53, 0
      %p132 = por %p130, %p131
      %s133 = ssub.s32 %s47, %s54
      %p134 = scmp.eq.s32.totalorder %s133, 0
      %s136 = sadd.s32 %s135, 1
      %s137 = scalar_select %p134, %s135, %s136
      %p140 = pneg %p134
      %p141 = scmp.eq.s32.totalorder %s47, 1
      %p142 = por %p140, %p141
      %p143 = scmp.ne.s32.totalorder %s135, %s138
      %p144 = scmp.eq.s32.totalorder %s47, 0
      %p145 = por %p143, %p144
      %p146 = scmp.ne.s32.totalorder %s135, %s138
      %p147 = scmp.eq.s32.totalorder %s52, 1
      %p148 = por %p146, %p147
      %p149 = scmp.ne.s32.totalorder %s138, %s139
      %p150 = scmp.eq.s32.totalorder %s52, 0
      %p151 = por %p149, %p150
      %p152 = scmp.ne.s32.totalorder %s138, %s139
      %p153 = scmp.eq.s32.totalorder %s53, 1
      %p154 = por %p152, %p153
      %p156 = scmp.ne.s32.totalorder %s139, %s155
      %p157 = scmp.eq.s32.totalorder %s53, 0
      %p158 = por %p156, %p157
      %s159 = ssub.s32 %s47, %s54
      %p160 = scmp.eq.s32.totalorder %s159, 0
      %s162 = sadd.s32 %s161, 1
      %s163 = scalar_select %p160, %s161, %s162
      %p166 = pneg %p160
      %p167 = scmp.eq.s32.totalorder %s47, 1
      %p168 = por %p166, %p167
      %p169 = scmp.ne.s32.totalorder %s161, %s164
      %p170 = scmp.eq.s32.totalorder %s47, 0
      %p171 = por %p169, %p170
      %p172 = scmp.ne.s32.totalorder %s161, %s164
      %p173 = scmp.eq.s32.totalorder %s52, 1
      %p174 = por %p172, %p173
      %p175 = scmp.ne.s32.totalorder %s164, %s165
      %p176 = scmp.eq.s32.totalorder %s52, 0
      %p177 = por %p175, %p176
      %p178 = scmp.ne.s32.totalorder %s164, %s165
      %p179 = scmp.eq.s32.totalorder %s53, 1
      %p180 = por %p178, %p179
      %p182 = scmp.ne.s32.totalorder %s165, %s181
      %p183 = scmp.eq.s32.totalorder %s53, 0
      %p184 = por %p182, %p183
      %s186 = sadd.s32 %s185, 1
      %p189 = scmp.eq.s32.totalorder %s47, 1
      %p190 = scmp.ne.s32.totalorder %s185, %s187
      %p191 = scmp.eq.s32.totalorder %s47, 0
      %p192 = por %p190, %p191
      %p193 = scmp.ne.s32.totalorder %s185, %s187
      %p194 = scmp.eq.s32.totalorder %s52, 1
      %p195 = por %p193, %p194
      %p196 = scmp.ne.s32.totalorder %s187, %s188
      %p197 = scmp.eq.s32.totalorder %s52, 0
      %p198 = por %p196, %p197
      %p199 = scmp.ne.s32.totalorder %s187, %s188
      %p200 = scmp.eq.s32.totalorder %s53, 1
      %p201 = por %p199, %p200
      %p203 = scmp.ne.s32.totalorder %s188, %s202
      %p204 = scmp.eq.s32.totalorder %s53, 0
      %p205 = por %p203, %p204
      %s207 = sadd.s32 %s206, 1
      %p210 = scmp.eq.s32.totalorder %s47, 1
      %p211 = scmp.ne.s32.totalorder %s206, %s208
      %p212 = scmp.eq.s32.totalorder %s47, 0
      %p213 = por %p211, %p212
      %p214 = scmp.ne.s32.totalorder %s206, %s208
      %p215 = scmp.eq.s32.totalorder %s52, 1
      %p216 = por %p214, %p215
      %p217 = scmp.ne.s32.totalorder %s208, %s209
      %p218 = scmp.eq.s32.totalorder %s52, 0
      %p219 = por %p217, %p218
      %p220 = scmp.ne.s32.totalorder %s208, %s209
      %p221 = scmp.eq.s32.totalorder %s53, 1
      %p222 = por %p220, %p221
      %p224 = scmp.ne.s32.totalorder %s209, %s223
      %p225 = scmp.eq.s32.totalorder %s53, 0
      %p226 = por %p224, %p225
      %s228 = sadd.s32 %s227, 1
      %p231 = scmp.eq.s32.totalorder %s47, 1
      %p232 = scmp.ne.s32.totalorder %s227, %s229
      %p233 = scmp.eq.s32.totalorder %s47, 0
      %p234 = por %p232, %p233
      %p235 = scmp.ne.s32.totalorder %s227, %s229
      %p236 = scmp.eq.s32.totalorder %s52, 1
      %p237 = por %p235, %p236
      %p238 = scmp.ne.s32.totalorder %s229, %s230
      %p239 = scmp.eq.s32.totalorder %s52, 0
      %p240 = por %p238, %p239
      %p241 = scmp.ne.s32.totalorder %s229, %s230
      %p242 = scmp.eq.s32.totalorder %s53, 1
      %p243 = por %p241, %p242
      %p245 = scmp.ne.s32.totalorder %s230, %s244
      %p246 = scmp.eq.s32.totalorder %s53, 0
      %p247 = por %p245, %p246
      %s249 = sadd.s32 %s248, 1
      %p252 = scmp.eq.s32.totalorder %s47, 1
      %p253 = scmp.ne.s32.totalorder %s248, %s250
      %p254 = scmp.eq.s32.totalorder %s47, 0
      %p255 = por %p253, %p254
      %p256 = scmp.ne.s32.totalorder %s248, %s250
      %p257 = scmp.eq.s32.totalorder %s52, 1
      %p258 = por %p256, %p257
      %p259 = scmp.ne.s32.totalorder %s250, %s251
      %p260 = scmp.eq.s32.totalorder %s52, 0
      %p261 = por %p259, %p260
      %p262 = scmp.ne.s32.totalorder %s250, %s251
      %p263 = scmp.eq.s32.totalorder %s53, 1
      %p264 = por %p262, %p263
      %p266 = scmp.ne.s32.totalorder %s251, %s265
      %p267 = scmp.eq.s32.totalorder %s53, 0
      %p268 = por %p266, %p267
      %s270 = sadd.s32 %s269, 1
      %p273 = scmp.eq.s32.totalorder %s47, 1
      %p274 = scmp.ne.s32.totalorder %s269, %s271
      %p275 = scmp.eq.s32.totalorder %s47, 0
      %p276 = por %p274, %p275
      %p277 = scmp.ne.s32.totalorder %s269, %s271
      %p278 = scmp.eq.s32.totalorder %s52, 1
      %p279 = por %p277, %p278
      %p280 = scmp.ne.s32.totalorder %s271, %s272
      %p281 = scmp.eq.s32.totalorder %s52, 0
      %p282 = por %p280, %p281
      %p283 = scmp.ne.s32.totalorder %s271, %s272
      %p284 = scmp.eq.s32.totalorder %s53, 1
      %p285 = por %p283, %p284
      %p287 = scmp.ne.s32.totalorder %s272, %s286
      %p288 = scmp.eq.s32.totalorder %s53, 0
      %p289 = por %p287, %p288
      %s291 = sadd.s32 %s290, 1
      %p294 = scmp.eq.s32.totalorder %s47, 1
      %p295 = scmp.ne.s32.totalorder %s290, %s292
      %p296 = scmp.eq.s32.totalorder %s47, 0
      %p297 = por %p295, %p296
      %p298 = scmp.ne.s32.totalorder %s290, %s292
      %p299 = scmp.eq.s32.totalorder %s52, 1
      %p300 = por %p298, %p299
      %p301 = scmp.ne.s32.totalorder %s292, %s293
      %p302 = scmp.eq.s32.totalorder %s52, 0
      %p303 = por %p301, %p302
      %p304 = scmp.ne.s32.totalorder %s292, %s293
      %p305 = scmp.eq.s32.totalorder %s53, 1
      %p306 = por %p304, %p305
      %p308 = scmp.ne.s32.totalorder %s293, %s307
      %p309 = scmp.eq.s32.totalorder %s53, 0
      %p310 = por %p308, %p309
      %s312 = sadd.s32 %s311, 1
      %p315 = scmp.eq.s32.totalorder %s47, 1
      %p316 = scmp.ne.s32.totalorder %s311, %s313
      %p317 = scmp.eq.s32.totalorder %s47, 0
      %p318 = por %p316, %p317
      %p319 = scmp.ne.s32.totalorder %s311, %s313
      %p320 = scmp.eq.s32.totalorder %s52, 1
      %p321 = por %p319, %p320
      %p322 = scmp.ne.s32.totalorder %s313, %s314
      %p323 = scmp.eq.s32.totalorder %s52, 0
      %p324 = por %p322, %p323
      %p325 = scmp.ne.s32.totalorder %s313, %s314
      %p326 = scmp.eq.s32.totalorder %s53, 1
      %p327 = por %p325, %p326
      %p329 = scmp.ne.s32.totalorder %s314, %s328
      %p330 = scmp.eq.s32.totalorder %s53, 0
      %p331 = por %p329, %p330
      %s333 = sadd.s32 %s332, 1
      %p336 = scmp.eq.s32.totalorder %s47, 1
      %p337 = scmp.ne.s32.totalorder %s332, %s334
      %p338 = scmp.eq.s32.totalorder %s47, 0
      %p339 = por %p337, %p338
      %p340 = scmp.ne.s32.totalorder %s332, %s334
      %p341 = scmp.eq.s32.totalorder %s52, 1
      %p342 = por %p340, %p341
      %p343 = scmp.ne.s32.totalorder %s334, %s335
      %p344 = scmp.eq.s32.totalorder %s52, 0
      %p345 = por %p343, %p344
      %p346 = scmp.ne.s32.totalorder %s334, %s335
      %p347 = scmp.eq.s32.totalorder %s53, 1
      %p348 = por %p346, %p347
      %p350 = scmp.ne.s32.totalorder %s335, %s349
      %p351 = scmp.eq.s32.totalorder %s53, 0
      %p352 = por %p350, %p351
      %s354 = sadd.s32 %s353, 1
      %p357 = scmp.eq.s32.totalorder %s47, 1
      %p358 = scmp.ne.s32.totalorder %s353, %s355
      %p359 = scmp.eq.s32.totalorder %s47, 0
      %p360 = por %p358, %p359
      %p361 = scmp.ne.s32.totalorder %s353, %s355
      %p362 = scmp.eq.s32.totalorder %s52, 1
      %p363 = por %p361, %p362
      %p364 = scmp.ne.s32.totalorder %s355, %s356
      %p365 = scmp.eq.s32.totalorder %s52, 0
      %p366 = por %p364, %p365
      %p367 = scmp.ne.s32.totalorder %s355, %s356
      %p368 = scmp.eq.s32.totalorder %s53, 1
      %p369 = por %p367, %p368
      %p371 = scmp.ne.s32.totalorder %s356, %s370
      %p372 = scmp.eq.s32.totalorder %s53, 0
      %p373 = por %p371, %p372
      %s375 = sadd.s32 %s374, 1
      %p378 = scmp.eq.s32.totalorder %s47, 1
      %p379 = scmp.ne.s32.totalorder %s374, %s376
      %p380 = scmp.eq.s32.totalorder %s47, 0
      %p381 = por %p379, %p380
      %p382 = scmp.ne.s32.totalorder %s374, %s376
      %p383 = scmp.eq.s32.totalorder %s52, 1
      %p384 = por %p382, %p383
      %p385 = scmp.ne.s32.totalorder %s376, %s377
      %p386 = scmp.eq.s32.totalorder %s52, 0
      %p387 = por %p385, %p386
      %p388 = scmp.ne.s32.totalorder %s376, %s377
      %p389 = scmp.eq.s32.totalorder %s53, 1
      %p390 = por %p388, %p389
      %p392 = scmp.ne.s32.totalorder %s377, %s391
      %p393 = scmp.eq.s32.totalorder %s53, 0
      %p394 = por %p392, %p393
      %s396 = sadd.s32 %s395, 1
      %p399 = scmp.eq.s32.totalorder %s47, 1
      %p400 = scmp.ne.s32.totalorder %s395, %s397
      %p401 = scmp.eq.s32.totalorder %s47, 0
      %p402 = por %p400, %p401
      %p403 = scmp.ne.s32.totalorder %s395, %s397
      %p404 = scmp.eq.s32.totalorder %s52, 1
      %p405 = por %p403, %p404
      %p406 = scmp.ne.s32.totalorder %s397, %s398
      %p407 = scmp.eq.s32.totalorder %s52, 0
      %p408 = por %p406, %p407
      %p409 = scmp.ne.s32.totalorder %s397, %s398
      %p410 = scmp.eq.s32.totalorder %s53, 1
      %p411 = por %p409, %p410
      %p413 = scmp.ne.s32.totalorder %s398, %s412
      %p414 = scmp.eq.s32.totalorder %s53, 0
      %p415 = por %p413, %p414
      %s417 = sadd.s32 %s416, 1
      %p420 = scmp.eq.s32.totalorder %s47, 1
      %p421 = scmp.ne.s32.totalorder %s416, %s418
      %p422 = scmp.eq.s32.totalorder %s47, 0
      %p423 = por %p421, %p422
      %p424 = scmp.ne.s32.totalorder %s416, %s418
      %p425 = scmp.eq.s32.totalorder %s52, 1
      %p426 = por %p424, %p425
      %p427 = scmp.ne.s32.totalorder %s418, %s419
      %p428 = scmp.eq.s32.totalorder %s52, 0
      %p429 = por %p427, %p428
      %p430 = scmp.ne.s32.totalorder %s418, %s419
      %p431 = scmp.eq.s32.totalorder %s53, 1
      %p432 = por %p430, %p431
      %p434 = scmp.ne.s32.totalorder %s419, %s433
      %p435 = scmp.eq.s32.totalorder %s53, 0
      %p436 = por %p434, %p435
      %s438 = sadd.s32 %s437, 1
      %p441 = scmp.eq.s32.totalorder %s47, 1
      %p442 = scmp.ne.s32.totalorder %s437, %s439
      %p443 = scmp.eq.s32.totalorder %s47, 0
      %p444 = por %p442, %p443
      %p445 = scmp.ne.s32.totalorder %s437, %s439
      %p446 = scmp.eq.s32.totalorder %s52, 1
      %p447 = por %p445, %p446
      %p448 = scmp.ne.s32.totalorder %s439, %s440
      %p449 = scmp.eq.s32.totalorder %s52, 0
      %p450 = por %p448, %p449
      %p451 = scmp.ne.s32.totalorder %s439, %s440
      %p452 = scmp.eq.s32.totalorder %s53, 1
      %p453 = por %p451, %p452
      %p455 = scmp.ne.s32.totalorder %s440, %s454
      %p456 = scmp.eq.s32.totalorder %s53, 0
      %p457 = por %p455, %p456
      %s459 = sadd.s32 %s458, 1
      %p462 = scmp.eq.s32.totalorder %s47, 1
      %p463 = scmp.ne.s32.totalorder %s458, %s460
      %p464 = scmp.eq.s32.totalorder %s47, 0
      %p465 = por %p463, %p464
      %p466 = scmp.ne.s32.totalorder %s458, %s460
      %p467 = scmp.eq.s32.totalorder %s52, 1
      %p468 = por %p466, %p467
      %p469 = scmp.ne.s32.totalorder %s460, %s461
      %p470 = scmp.eq.s32.totalorder %s52, 0
      %p471 = por %p469, %p470
      %p472 = scmp.ne.s32.totalorder %s460, %s461
      %p473 = scmp.eq.s32.totalorder %s53, 1
      %p474 = por %p472, %p473
      %p476 = scmp.ne.s32.totalorder %s461, %s475
      %p477 = scmp.eq.s32.totalorder %s53, 0
      %p478 = por %p476, %p477
      %s480 = sadd.s32 %s479, 1
      %p483 = scmp.eq.s32.totalorder %s47, 1
      %p484 = scmp.ne.s32.totalorder %s479, %s481
      %p485 = scmp.eq.s32.totalorder %s47, 0
      %p486 = por %p484, %p485
      %p487 = scmp.ne.s32.totalorder %s479, %s481
      %p488 = scmp.eq.s32.totalorder %s52, 1
      %p489 = por %p487, %p488
      %p490 = scmp.ne.s32.totalorder %s481, %s482
      %p491 = scmp.eq.s32.totalorder %s52, 0
      %p492 = por %p490, %p491
      %p493 = scmp.ne.s32.totalorder %s481, %s482
      %p494 = scmp.eq.s32.totalorder %s53, 1
      %p495 = por %p493, %p494
      %p497 = scmp.ne.s32.totalorder %s482, %s496
      %p498 = scmp.eq.s32.totalorder %s53, 0
      %p499 = por %p497, %p498
      %s501 = sadd.s32 %s500, 1
      %p504 = scmp.eq.s32.totalorder %s47, 1
      %p505 = scmp.ne.s32.totalorder %s500, %s502
      %p506 = scmp.eq.s32.totalorder %s47, 0
      %p507 = por %p505, %p506
      %p508 = scmp.ne.s32.totalorder %s500, %s502
      %p509 = scmp.eq.s32.totalorder %s52, 1
      %p510 = por %p508, %p509
      %p511 = scmp.ne.s32.totalorder %s502, %s503
      %p512 = scmp.eq.s32.totalorder %s52, 0
      %p513 = por %p511, %p512
      %p514 = scmp.ne.s32.totalorder %s502, %s503
      %p515 = scmp.eq.s32.totalorder %s53, 1
      %p516 = por %p514, %p515
      %p518 = scmp.ne.s32.totalorder %s503, %s517
      %p519 = scmp.eq.s32.totalorder %s53, 0
      %p520 = por %p518, %p519
      %s521 = ssub.s32 %s47, %s54
      %p522 = scmp.eq.s32.totalorder %s521, 0
      %s524 = sadd.s32 %s523, 1
      %s525 = scalar_select %p522, %s523, %s524
      %p528 = pneg %p522
      %p529 = scmp.eq.s32.totalorder %s47, 1
      %p530 = por %p528, %p529
      %p531 = scmp.ne.s32.totalorder %s523, %s526
      %p532 = scmp.eq.s32.totalorder %s47, 0
      %p533 = por %p531, %p532
      %p534 = scmp.ne.s32.totalorder %s523, %s526
      %p535 = scmp.eq.s32.totalorder %s52, 1
      %p536 = por %p534, %p535
      %p537 = scmp.ne.s32.totalorder %s526, %s527
      %p538 = scmp.eq.s32.totalorder %s52, 0
      %p539 = por %p537, %p538
      %p540 = scmp.ne.s32.totalorder %s526, %s527
      %p541 = scmp.eq.s32.totalorder %s53, 1
      %p542 = por %p540, %p541
      %p544 = scmp.ne.s32.totalorder %s527, %s543
      %p545 = scmp.eq.s32.totalorder %s53, 0
      %p546 = por %p544, %p545
      %s547 = ssub.s32 %s47, %s54
      %p548 = scmp.eq.s32.totalorder %s547, 0
      %s550 = sadd.s32 %s549, 1
      %s551 = scalar_select %p548, %s549, %s550
      %p554 = pneg %p548
      %p555 = scmp.eq.s32.totalorder %s47, 1
      %p556 = por %p554, %p555
      %p557 = scmp.ne.s32.totalorder %s549, %s552
      %p558 = scmp.eq.s32.totalorder %s47, 0
      %p559 = por %p557, %p558
      %p560 = scmp.ne.s32.totalorder %s549, %s552
      %p561 = scmp.eq.s32.totalorder %s52, 1
      %p562 = por %p560, %p561
      %p563 = scmp.ne.s32.totalorder %s552, %s553
      %p564 = scmp.eq.s32.totalorder %s52, 0
      %p565 = por %p563, %p564
      %p566 = scmp.ne.s32.totalorder %s552, %s553
      %p567 = scmp.eq.s32.totalorder %s53, 1
      %p568 = por %p566, %p567
      %p570 = scmp.ne.s32.totalorder %s553, %s569
      %p571 = scmp.eq.s32.totalorder %s53, 0
      %p572 = por %p570, %p571
      %p573 = scmp.le.s32.totalorder 1, %s47
      %p574 = scmp.lt.s32.totalorder %s47, 3
      %p575 = pnand %p573, %p574
      %p576 = pneg %p575
      // Predicated region
      $region9: #{tpu_custom_call.1} parent=5 // pred_check
        _
      $region10: #{tpu_custom_call.1} parent=5 // pred_check_branch
        %578 = sbr.rel (%p575) target = $region12
      $region11: #{tpu_custom_call.1} parent=5 // pred_region
        %s579 = ssub.s32 %s47, 1
        // Predicated region
        $region13: #{tpu_custom_call.1} parent=11 // pred_check
          %p580 = pneg %p198
        $region14: #{tpu_custom_call.1} parent=11 // pred_check_branch
          %582 = sbr.rel (%p580) target = $region16
        $region15: #{tpu_custom_call.1} parent=11 // pred_region
          %s584 = ssub.s32 16384, 16384
          %585 = vsyncadd [#allocation9], %s584
          %s586 = sshll.u32 [#allocation10], 4
          %s587 = int_to_ptr.vmem [resolvable:$true] %s586
          %592 = dma.hbm_to_vmem [thread:$0]  %s5, 16384, %s587, [#allocation9], 512, 512, 32
        $region16: #{tpu_custom_call.1} parent=11 // pred_fallthru
          _
        // Predicated region
        $region17: #{tpu_custom_call.1} parent=11 // pred_check
          %p593 = pneg %p219
        $region18: #{tpu_custom_call.1} parent=11 // pred_check_branch
          %595 = sbr.rel (%p593) target = $region20
        $region19: #{tpu_custom_call.1} parent=11 // pred_region
          %s597 = ssub.s32 64, 64
          %598 = vsyncadd [#allocation12], %s597
          %s600 = sshll.u32 [#allocation11], 4
          %s601 = int_to_ptr.vmem [resolvable:$true] %s600
          %603 = dma.hbm_to_vmem [thread:$0]  %s6, 64, %s601, [#allocation12]
        $region20: #{tpu_custom_call.1} parent=11 // pred_fallthru
          _
        // Predicated region
        $region21: #{tpu_custom_call.1} parent=11 // pred_check
          %p604 = pneg %p240
        $region22: #{tpu_custom_call.1} parent=11 // pred_check_branch
          %606 = sbr.rel (%p604) target = $region24
        $region23: #{tpu_custom_call.1} parent=11 // pred_region
          %s608 = ssub.s32 8192, 8192
          %609 = vsyncadd [#allocation12], %s608
          %s610 = sshll.u32 [#allocation13], 4
          %s611 = int_to_ptr.vmem [resolvable:$true] %s610
          %616 = dma.hbm_to_vmem [thread:$0]  %s7, 8192, %s611, [#allocation12], 128, 128, 8
        $region24: #{tpu_custom_call.1} parent=11 // pred_fallthru
          _
        // Predicated region
        $region25: #{tpu_custom_call.1} parent=11 // pred_check
          %p617 = pneg %p261
        $region26: #{tpu_custom_call.1} parent=11 // pred_check_branch
          %619 = sbr.rel (%p617) target = $region28
        $region27: #{tpu_custom_call.1} parent=11 // pred_region
          _
        $region28: #{tpu_custom_call.1} parent=11 // pred_fallthru
          _
        // Predicated region
        $region29: #{tpu_custom_call.1} parent=11 // pred_check
          %p620 = pneg %p282
        $region30: #{tpu_custom_call.1} parent=11 // pred_check_branch
          %622 = sbr.rel (%p620) target = $region32
        $region31: #{tpu_custom_call.1} parent=11 // pred_region
          _
        $region32: #{tpu_custom_call.1} parent=11 // pred_fallthru
          _
        // Predicated region
        $region33: #{tpu_custom_call.1} parent=11 // pred_check
          %p623 = pneg %p303
        $region34: #{tpu_custom_call.1} parent=11 // pred_check_branch
          %625 = sbr.rel (%p623) target = $region36
        $region35: #{tpu_custom_call.1} parent=11 // pred_region
          %s627 = ssub.s32 16, 16
          %628 = vsyncadd [#allocation15], %s627
          %s630 = sshll.u32 [#allocation14], 4
          %s631 = int_to_ptr.vmem [resolvable:$true] %s630
          %633 = dma.hbm_to_vmem [thread:$0]  %s10, 16, %s631, [#allocation15]
        $region36: #{tpu_custom_call.1} parent=11 // pred_fallthru
          _
        // Predicated region
        $region37: #{tpu_custom_call.1} parent=11 // pred_check
          %p634 = pneg %p324
        $region38: #{tpu_custom_call.1} parent=11 // pred_check_branch
          %636 = sbr.rel (%p634) target = $region40
        $region39: #{tpu_custom_call.1} parent=11 // pred_region
          _
        $region40: #{tpu_custom_call.1} parent=11 // pred_fallthru
          _
        // Predicated region
        $region41: #{tpu_custom_call.1} parent=11 // pred_check
          %p637 = pneg %p345
        $region42: #{tpu_custom_call.1} parent=11 // pred_check_branch
          %639 = sbr.rel (%p637) target = $region44
        $region43: #{tpu_custom_call.1} parent=11 // pred_region
          _
        $region44: #{tpu_custom_call.1} parent=11 // pred_fallthru
          _
        // Predicated region
        $region45: #{tpu_custom_call.1} parent=11 // pred_check
          %p640 = pneg %p366
        $region46: #{tpu_custom_call.1} parent=11 // pred_check_branch
          %642 = sbr.rel (%p640) target = $region48
        $region47: #{tpu_custom_call.1} parent=11 // pred_region
          _
        $region48: #{tpu_custom_call.1} parent=11 // pred_fallthru
          _
        // Predicated region
        $region49: #{tpu_custom_call.1} parent=11 // pred_check
          %p643 = pneg %p387
        $region50: #{tpu_custom_call.1} parent=11 // pred_check_branch
          %645 = sbr.rel (%p643) target = $region52
        $region51: #{tpu_custom_call.1} parent=11 // pred_region
          _
        $region52: #{tpu_custom_call.1} parent=11 // pred_fallthru
          _
        // Predicated region
        $region53: #{tpu_custom_call.1} parent=11 // pred_check
          %p646 = pneg %p408
        $region54: #{tpu_custom_call.1} parent=11 // pred_check_branch
          %648 = sbr.rel (%p646) target = $region56
        $region55: #{tpu_custom_call.1} parent=11 // pred_region
          _
        $region56: #{tpu_custom_call.1} parent=11 // pred_fallthru
          _
        // Predicated region
        $region57: #{tpu_custom_call.1} parent=11 // pred_check
          %p649 = pneg %p429
        $region58: #{tpu_custom_call.1} parent=11 // pred_check_branch
          %651 = sbr.rel (%p649) target = $region60
        $region59: #{tpu_custom_call.1} parent=11 // pred_region
          _
        $region60: #{tpu_custom_call.1} parent=11 // pred_fallthru
          _
        // Predicated region
        $region61: #{tpu_custom_call.1} parent=11 // pred_check
          %p652 = pneg %p450
        $region62: #{tpu_custom_call.1} parent=11 // pred_check_branch
          %654 = sbr.rel (%p652) target = $region64
        $region63: #{tpu_custom_call.1} parent=11 // pred_region
          %s656 = ssub.s32 8192, 8192
          %657 = vsyncadd [#allocation15], %s656
          %s658 = sshll.u32 [#allocation16], 4
          %s659 = int_to_ptr.vmem [resolvable:$true] %s658
          %664 = dma.hbm_to_vmem [thread:$0]  %s17, 8192, %s659, [#allocation15], 512, 512, 32
        $region64: #{tpu_custom_call.1} parent=11 // pred_fallthru
          _
        // Predicated region
        $region65: #{tpu_custom_call.1} parent=11 // pred_check
          %p665 = pneg %p471
        $region66: #{tpu_custom_call.1} parent=11 // pred_check_branch
          %667 = sbr.rel (%p665) target = $region68
        $region67: #{tpu_custom_call.1} parent=11 // pred_region
          _
        $region68: #{tpu_custom_call.1} parent=11 // pred_fallthru
          _
        // Predicated region
        $region69: #{tpu_custom_call.1} parent=11 // pred_check
          %p668 = pneg %p492
        $region70: #{tpu_custom_call.1} parent=11 // pred_check_branch
          %670 = sbr.rel (%p668) target = $region72
        $region71: #{tpu_custom_call.1} parent=11 // pred_region
          %s672 = ssub.s32 16384, 16384
          %673 = vsyncadd [#allocation18], %s672
          %s674 = sshll.u32 [#allocation17], 4
          %s675 = int_to_ptr.vmem [resolvable:$true] %s674
          %680 = dma.hbm_to_vmem [thread:$0]  %s19, 16384, %s675, [#allocation18], 256, 256, 16
        $region72: #{tpu_custom_call.1} parent=11 // pred_fallthru
          _
        // Predicated region
        $region73: #{tpu_custom_call.1} parent=11 // pred_check
          %p681 = pneg %p513
        $region74: #{tpu_custom_call.1} parent=11 // pred_check_branch
          %683 = sbr.rel (%p681) target = $region76
        $region75: #{tpu_custom_call.1} parent=11 // pred_region
          _
        $region76: #{tpu_custom_call.1} parent=11 // pred_fallthru
          _
      $region12: #{tpu_custom_call.1} parent=5 // pred_fallthru
        _
      %p684 = scmp.lt.s32.totalorder %s47, 2
      // Predicated region
      $region77: #{tpu_custom_call.1} parent=5 // pred_check
        %p685 = pneg %p684
      $region78: #{tpu_custom_call.1} parent=5 // pred_check_branch
        %687 = sbr.rel (%p685) target = $region80
      $region79: #{tpu_custom_call.1} parent=5 // pred_region
        // Predicated region
        $region81: #{tpu_custom_call.1} parent=79 // pred_check
          %p688 = pneg %p67
        $region82: #{tpu_custom_call.1} parent=79 // pred_check_branch
          %690 = sbr.rel (%p688) target = $region84
        $region83: #{tpu_custom_call.1} parent=79 // pred_region
          %s691 = sand.u32 %s57, 1
          %s692 = scalar_lea.sflag [#allocation3], %s691
          %s693 = sand.u32 %s57, 1
          %s694 = smul.addr %s693, 256
          %s695 = scalar_lea.vmem [#allocation2], %s694
          %s696 = smul.u32 16, %s47
          %s698 = ssub.s32 4096, 4096
          %699 = vsyncadd %s692, %s698
          %s700 = smul.addr %s696, 2
          %s701 = smul.addr %s700, 128
          %s702 = scalar_lea.hbm %s0, %s701
          %s703 = sshll.u32 %s695, 4
          %s704 = int_to_ptr.vmem [resolvable:$true] %s703
          %709 = dma.hbm_to_vmem [thread:$0]  %s702, 4096, %s704, %s692, 256, 256, 16
        $region84: #{tpu_custom_call.1} parent=79 // pred_fallthru
          _
        // Predicated region
        $region85: #{tpu_custom_call.1} parent=79 // pred_check
          %p710 = pneg %p93
        $region86: #{tpu_custom_call.1} parent=79 // pred_check_branch
          %712 = sbr.rel (%p710) target = $region88
        $region87: #{tpu_custom_call.1} parent=79 // pred_region
          %s713 = sand.u32 %s47, 1
          %s714 = scalar_lea.sflag [#allocation6], %s713
          %s715 = sand.u32 %s83, 1
          %s716 = smul.addr %s715, 256
          %s717 = scalar_lea.vmem [#allocation5], %s716
          %s718 = smul.u32 16, %s47
          %s720 = ssub.s32 4096, 4096
          %721 = vsyncadd %s714, %s720
          %s722 = smul.addr %s718, 2
          %s723 = smul.addr %s722, 128
          %s724 = scalar_lea.hbm %s1, %s723
          %s725 = sshll.u32 %s717, 4
          %s726 = int_to_ptr.vmem [resolvable:$true] %s725
          %731 = dma.hbm_to_vmem [thread:$0]  %s724, 4096, %s726, %s714, 256, 256, 16
        $region88: #{tpu_custom_call.1} parent=79 // pred_fallthru
          _
        // Predicated region
        $region89: #{tpu_custom_call.1} parent=79 // pred_check
          %p732 = pneg %p119
        $region90: #{tpu_custom_call.1} parent=79 // pred_check_branch
          %734 = sbr.rel (%p732) target = $region92
        $region91: #{tpu_custom_call.1} parent=79 // pred_region
          %s735 = sand.u32 %s47, 1
          %s736 = scalar_lea.sflag [#allocation6], %s735
          %s737 = sand.u32 %s109, 1
          %s738 = smul.addr %s737, 256
          %s739 = scalar_lea.vmem [#allocation7], %s738
          %s740 = smul.u32 16, %s47
          %s742 = ssub.s32 4096, 4096
          %743 = vsyncadd %s736, %s742
          %s744 = smul.addr %s740, 2
          %s745 = smul.addr %s744, 128
          %s746 = scalar_lea.hbm %s2, %s745
          %s747 = sshll.u32 %s739, 4
          %s748 = int_to_ptr.vmem [resolvable:$true] %s747
          %753 = dma.hbm_to_vmem [thread:$0]  %s746, 4096, %s748, %s736, 256, 256, 16
        $region92: #{tpu_custom_call.1} parent=79 // pred_fallthru
          _
        // Predicated region
        $region93: #{tpu_custom_call.1} parent=79 // pred_check
          %p754 = pneg %p145
        $region94: #{tpu_custom_call.1} parent=79 // pred_check_branch
          %756 = sbr.rel (%p754) target = $region96
        $region95: #{tpu_custom_call.1} parent=79 // pred_region
          %s757 = sand.u32 %s47, 1
          %s758 = scalar_lea.sflag [#allocation9], %s757
          %s759 = sand.u32 %s135, 1
          %s760 = smul.addr %s759, 256
          %s761 = scalar_lea.vmem [#allocation8], %s760
          %s762 = smul.u32 16, %s47
          %s764 = ssub.s32 4096, 4096
          %765 = vsyncadd %s758, %s764
          %s766 = smul.addr %s762, 2
          %s767 = smul.addr %s766, 128
          %s768 = scalar_lea.hbm %s3, %s767
          %s769 = sshll.u32 %s761, 4
          %s770 = int_to_ptr.vmem [resolvable:$true] %s769
          %775 = dma.hbm_to_vmem [thread:$0]  %s768, 4096, %s770, %s758, 256, 256, 16
        $region96: #{tpu_custom_call.1} parent=79 // pred_fallthru
          _
        // Predicated region
        $region97: #{tpu_custom_call.1} parent=79 // pred_check
          %p776 = pneg %p171
        $region98: #{tpu_custom_call.1} parent=79 // pred_check_branch
          %778 = sbr.rel (%p776) target = $region100
        $region99: #{tpu_custom_call.1} parent=79 // pred_region
          %s779 = smul.u32 16, %s47
          %p780 = scmp.lt.s32.totalorder %s779, 31
          %s781 = scalar_select %p780, %s779, 31
          %s782 = smul.addr %s781, 8
          %s783 = scalar_lea.vmem %s4, %s782
          %s784 = smul.u32 16, %s47
        $region100: #{tpu_custom_call.1} parent=79 // pred_fallthru
          _
      $region80: #{tpu_custom_call.1} parent=5 // pred_fallthru
        _
      %p785 = scmp.le.s32.totalorder 1, %s47
      %p786 = scmp.lt.s32.totalorder %s47, 3
      %p787 = pnand %p785, %p786
      %p788 = pneg %p787
      // Predicated region
      $region101: #{tpu_custom_call.1} parent=5 // pred_check
        _
      $region102: #{tpu_custom_call.1} parent=5 // pred_check_branch
        %790 = sbr.rel (%p787) target = $region104
      $region103: #{tpu_custom_call.1} parent=5 // pred_region
        %s791 = ssub.s32 %s47, 1
        %s792 = sand.u32 %s60, 1
        %s793 = scalar_lea.sflag [#allocation3], %s792
        %s794 = sand.u32 %s60, 1
        %s795 = smul.addr %s794, 256
        %s796 = scalar_lea.vmem [#allocation2], %s795
        // Predicated region
        $region105: #{tpu_custom_call.1} parent=103 // pred_check
          %p797 = pneg %p73
        $region106: #{tpu_custom_call.1} parent=103 // pred_check_branch
          %799 = sbr.rel (%p797) target = $region108
        $region107: #{tpu_custom_call.1} parent=103 // pred_region
          %800 = dma.done %s793, 4096
        $region108: #{tpu_custom_call.1} parent=103 // pred_fallthru
          _
        %s801 = sand.u32 %s52, 1
        %s802 = scalar_lea.sflag [#allocation6], %s801
        %s803 = sand.u32 %s86, 1
        %s804 = smul.addr %s803, 256
        %s805 = scalar_lea.vmem [#allocation5], %s804
        // Predicated region
        $region109: #{tpu_custom_call.1} parent=103 // pred_check
          %p806 = pneg %p99
        $region110: #{tpu_custom_call.1} parent=103 // pred_check_branch
          %808 = sbr.rel (%p806) target = $region112
        $region111: #{tpu_custom_call.1} parent=103 // pred_region
          %809 = dma.done %s802, 4096
        $region112: #{tpu_custom_call.1} parent=103 // pred_fallthru
          _
        %s810 = sand.u32 %s52, 1
        %s811 = scalar_lea.sflag [#allocation6], %s810
        %s812 = sand.u32 %s112, 1
        %s813 = smul.addr %s812, 256
        %s814 = scalar_lea.vmem [#allocation7], %s813
        // Predicated region
        $region113: #{tpu_custom_call.1} parent=103 // pred_check
          %p815 = pneg %p125
        $region114: #{tpu_custom_call.1} parent=103 // pred_check_branch
          %817 = sbr.rel (%p815) target = $region116
        $region115: #{tpu_custom_call.1} parent=103 // pred_region
          %818 = dma.done %s811, 4096
        $region116: #{tpu_custom_call.1} parent=103 // pred_fallthru
          _
        %s819 = sand.u32 %s52, 1
        %s820 = scalar_lea.sflag [#allocation9], %s819
        %s821 = sand.u32 %s138, 1
        %s822 = smul.addr %s821, 256
        %s823 = scalar_lea.vmem [#allocation8], %s822
        // Predicated region
        $region117: #{tpu_custom_call.1} parent=103 // pred_check
          %p824 = pneg %p151
        $region118: #{tpu_custom_call.1} parent=103 // pred_check_branch
          %826 = sbr.rel (%p824) target = $region120
        $region119: #{tpu_custom_call.1} parent=103 // pred_region
          %827 = dma.done %s820, 4096
        $region120: #{tpu_custom_call.1} parent=103 // pred_fallthru
          _
        // Predicated region
        $region121: #{tpu_custom_call.1} parent=103 // pred_check
          %p828 = pneg %p198
        $region122: #{tpu_custom_call.1} parent=103 // pred_check_branch
          %830 = sbr.rel (%p828) target = $region124
        $region123: #{tpu_custom_call.1} parent=103 // pred_region
          %831 = dma.done [#allocation9], 16384
        $region124: #{tpu_custom_call.1} parent=103 // pred_fallthru
          _
        // Predicated region
        $region125: #{tpu_custom_call.1} parent=103 // pred_check
          %p832 = pneg %p219
        $region126: #{tpu_custom_call.1} parent=103 // pred_check_branch
          %834 = sbr.rel (%p832) target = $region128
        $region127: #{tpu_custom_call.1} parent=103 // pred_region
          %835 = dma.done [#allocation12], 64
        $region128: #{tpu_custom_call.1} parent=103 // pred_fallthru
          _
        // Predicated region
        $region129: #{tpu_custom_call.1} parent=103 // pred_check
          %p836 = pneg %p240
        $region130: #{tpu_custom_call.1} parent=103 // pred_check_branch
          %838 = sbr.rel (%p836) target = $region132
        $region131: #{tpu_custom_call.1} parent=103 // pred_region
          %839 = dma.done [#allocation12], 8192
        $region132: #{tpu_custom_call.1} parent=103 // pred_fallthru
          _
        // Predicated region
        $region133: #{tpu_custom_call.1} parent=103 // pred_check
          %p840 = pneg %p303
        $region134: #{tpu_custom_call.1} parent=103 // pred_check_branch
          %842 = sbr.rel (%p840) target = $region136
        $region135: #{tpu_custom_call.1} parent=103 // pred_region
          %843 = dma.done [#allocation15], 16
        $region136: #{tpu_custom_call.1} parent=103 // pred_fallthru
          _
        // Predicated region
        $region137: #{tpu_custom_call.1} parent=103 // pred_check
          %p844 = pneg %p450
        $region138: #{tpu_custom_call.1} parent=103 // pred_check_branch
          %846 = sbr.rel (%p844) target = $region140
        $region139: #{tpu_custom_call.1} parent=103 // pred_region
          %847 = dma.done [#allocation15], 8192
        $region140: #{tpu_custom_call.1} parent=103 // pred_fallthru
          _
        // Predicated region
        $region141: #{tpu_custom_call.1} parent=103 // pred_check
          %p848 = pneg %p492
        $region142: #{tpu_custom_call.1} parent=103 // pred_check_branch
          %850 = sbr.rel (%p848) target = $region144
        $region143: #{tpu_custom_call.1} parent=103 // pred_region
          %851 = dma.done [#allocation18], 16384
        $region144: #{tpu_custom_call.1} parent=103 // pred_fallthru
          _
        %s852 = sand.u32 %s60, 1
        %s853 = scalar_lea.sflag [#allocation3], %s852
        %s854 = sand.u32 %s60, 1
        %s855 = smul.addr %s854, 256
        %s856 = scalar_lea.vmem [#allocation2], %s855
        %p857 = pneg %p73
        %p858 = pneg %p70
        %s859 = sand.u32 %s52, 1
        %s860 = scalar_lea.sflag [#allocation6], %s859
        %s861 = sand.u32 %s86, 1
        %s862 = smul.addr %s861, 256
        %s863 = scalar_lea.vmem [#allocation5], %s862
        %p864 = pneg %p99
        %p865 = pneg %p96
        %s866 = sand.u32 %s52, 1
        %s867 = scalar_lea.sflag [#allocation6], %s866
        %s868 = sand.u32 %s112, 1
        %s869 = smul.addr %s868, 256
        %s870 = scalar_lea.vmem [#allocation7], %s869
        %p871 = pneg %p125
        %p872 = pneg %p122
        %s873 = sand.u32 %s52, 1
        %s874 = scalar_lea.sflag [#allocation9], %s873
        %s875 = sand.u32 %s138, 1
        %s876 = smul.addr %s875, 256
        %s877 = scalar_lea.vmem [#allocation8], %s876
        %p878 = pneg %p151
        %p879 = pneg %p148
        %s880 = smul.u32 16, %s52
        %p881 = scmp.lt.s32.totalorder %s880, 31
        %s882 = scalar_select %p881, %s880, 31
        %s883 = smul.addr %s882, 8
        %s884 = scalar_lea.vmem %s4, %s883
        %p885 = pneg %p177
        %p886 = pneg %p174
        %p887 = pneg %p198
        %p888 = pneg %p195
        %p889 = pneg %p219
        %p890 = pneg %p216
        %p891 = pneg %p240
        %p892 = pneg %p237
        %p893 = pneg %p261
        %p894 = pneg %p258
        %p895 = pneg %p282
        %p896 = pneg %p279
        %p897 = pneg %p303
        %p898 = pneg %p300
        %p899 = pneg %p324
        %p900 = pneg %p321
        %p901 = pneg %p345
        %p902 = pneg %p342
        %p903 = pneg %p366
        %p904 = pneg %p363
        %p905 = pneg %p387
        %p906 = pneg %p384
        %p907 = pneg %p408
        %p908 = pneg %p405
        %p909 = pneg %p429
        %p910 = pneg %p426
        %p911 = pneg %p450
        %p912 = pneg %p447
        %p913 = pneg %p471
        %p914 = pneg %p468
        %p915 = pneg %p492
        %p916 = pneg %p489
        %p917 = pneg %p513
        %p918 = pneg %p510
        %p919 = pneg %p539
        %p920 = pneg %p536
        %s921 = sand.u32 %s526, 1
        %s922 = scalar_lea.sflag [#allocation4], %s921
        %s923 = sand.u32 %s526, 1
        %s924 = smul.addr %s923, 128
        %s925 = scalar_lea.vmem [#allocation19], %s924
        %p926 = pneg %p565
        %p927 = pneg %p562
        %s928 = sand.u32 %s552, 1
        %s929 = scalar_lea.sflag [#allocation21], %s928
        %s930 = sand.u32 %s552, 1
        %s931 = smul.addr %s930, 256
        %s932 = scalar_lea.vmem [#allocation20], %s931
        %s933 = smul.u32 16, %s52
        %s934 = smul.u32 16, %s52
        %s935 = smul.u32 16, %s52
        %s936 = smul.u32 16, %s52
        %s937 = smul.u32 16, %s52
        %p938 = scmp.lt.s32.totalorder %s937, 31
        %s939 = scalar_select %p938, %s937, 31
        %s940 = smul.addr %s939, 8
        %s941 = scalar_lea.vmem %s4, %s940
        %s942 = smul.u32 16, %s52
        %s943 = smul.u32 16, %s52
        %s944 = smul.u32 16, %s52
        %v945 = vld [vmem:[%s796] sm:$0xff]
        %v946 = vld [vmem:[%s796 + $0x8] sm:$0xff]
        %v947 = vld [vmem:[%s796 + $0x10] sm:$0xff]
        %v948 = vld [vmem:[%s796 + $0x18] sm:$0xff]
        %v949 = vld [vmem:[%s796 + $0x20] sm:$0xff]
        %v950 = vld [vmem:[%s796 + $0x28] sm:$0xff]
        %v951 = vld [vmem:[%s796 + $0x30] sm:$0xff]
        %v952 = vld [vmem:[%s796 + $0x38] sm:$0xff]
        %v953 = vld [vmem:[%s796 + $0x40] sm:$0xff]
        %v954 = vld [vmem:[%s796 + $0x48] sm:$0xff]
        %v955 = vld [vmem:[%s796 + $0x50] sm:$0xff]
        %v956 = vld [vmem:[%s796 + $0x58] sm:$0xff]
        %v957 = vld [vmem:[%s796 + $0x60] sm:$0xff]
        %v958 = vld [vmem:[%s796 + $0x68] sm:$0xff]
        %v959 = vld [vmem:[%s796 + $0x70] sm:$0xff]
        %v960 = vld [vmem:[%s796 + $0x78] sm:$0xff]
        %v961 = vld [vmem:[%s796 + $0x80] sm:$0xff]
        %v962 = vld [vmem:[%s796 + $0x88] sm:$0xff]
        %v963 = vld [vmem:[%s796 + $0x90] sm:$0xff]
        %v964 = vld [vmem:[%s796 + $0x98] sm:$0xff]
        %v965 = vld [vmem:[%s796 + $0xa0] sm:$0xff]
        %v966 = vld [vmem:[%s796 + $0xa8] sm:$0xff]
        %v967 = vld [vmem:[%s796 + $0xb0] sm:$0xff]
        %v968 = vld [vmem:[%s796 + $0xb8] sm:$0xff]
        %v969 = vld [vmem:[%s796 + $0xc0] sm:$0xff]
        %v970 = vld [vmem:[%s796 + $0xc8] sm:$0xff]
        %v971 = vld [vmem:[%s796 + $0xd0] sm:$0xff]
        %v972 = vld [vmem:[%s796 + $0xd8] sm:$0xff]
        %v973 = vld [vmem:[%s796 + $0xe0] sm:$0xff]
        %v974 = vld [vmem:[%s796 + $0xe8] sm:$0xff]
        %v975 = vld [vmem:[%s796 + $0xf0] sm:$0xff]
        %v976 = vld [vmem:[%s796 + $0xf8] sm:$0xff]
        %v977 = vld [vmem:[%s805] sm:$0xff]
        %v978 = vld [vmem:[%s805 + $0x8] sm:$0xff]
        %v979 = vld [vmem:[%s805 + $0x10] sm:$0xff]
        %v980 = vld [vmem:[%s805 + $0x18] sm:$0xff]
        %v981 = vld [vmem:[%s805 + $0x20] sm:$0xff]
        %v982 = vld [vmem:[%s805 + $0x28] sm:$0xff]
        %v983 = vld [vmem:[%s805 + $0x30] sm:$0xff]
        %v984 = vld [vmem:[%s805 + $0x38] sm:$0xff]
        %v985 = vld [vmem:[%s805 + $0x40] sm:$0xff]
        %v986 = vld [vmem:[%s805 + $0x48] sm:$0xff]
        %v987 = vld [vmem:[%s805 + $0x50] sm:$0xff]
        %v988 = vld [vmem:[%s805 + $0x58] sm:$0xff]
        %v989 = vld [vmem:[%s805 + $0x60] sm:$0xff]
        %v990 = vld [vmem:[%s805 + $0x68] sm:$0xff]
        %v991 = vld [vmem:[%s805 + $0x70] sm:$0xff]
        %v992 = vld [vmem:[%s805 + $0x78] sm:$0xff]
        %v993 = vld [vmem:[%s805 + $0x80] sm:$0xff]
        %v994 = vld [vmem:[%s805 + $0x88] sm:$0xff]
        %v995 = vld [vmem:[%s805 + $0x90] sm:$0xff]
        %v996 = vld [vmem:[%s805 + $0x98] sm:$0xff]
        %v997 = vld [vmem:[%s805 + $0xa0] sm:$0xff]
        %v998 = vld [vmem:[%s805 + $0xa8] sm:$0xff]
        %v999 = vld [vmem:[%s805 + $0xb0] sm:$0xff]
        %v1000 = vld [vmem:[%s805 + $0xb8] sm:$0xff]
        %v1001 = vld [vmem:[%s805 + $0xc0] sm:$0xff]
        %v1002 = vld [vmem:[%s805 + $0xc8] sm:$0xff]
        %v1003 = vld [vmem:[%s805 + $0xd0] sm:$0xff]
        %v1004 = vld [vmem:[%s805 + $0xd8] sm:$0xff]
        %v1005 = vld [vmem:[%s805 + $0xe0] sm:$0xff]
        %v1006 = vld [vmem:[%s805 + $0xe8] sm:$0xff]
        %v1007 = vld [vmem:[%s805 + $0xf0] sm:$0xff]
        %v1008 = vld [vmem:[%s805 + $0xf8] sm:$0xff]
        %v1009 = vmul.f32 %v945, %v977
        %v1010 = vmul.f32 %v946, %v978
        %v1011 = vmul.f32 %v947, %v979
        %v1012 = vmul.f32 %v948, %v980
        %v1013 = vmul.f32 %v949, %v981
        %v1014 = vmul.f32 %v950, %v982
        %v1015 = vmul.f32 %v951, %v983
        %v1016 = vmul.f32 %v952, %v984
        %v1017 = vmul.f32 %v953, %v985
        %v1018 = vmul.f32 %v954, %v986
        %v1019 = vmul.f32 %v955, %v987
        %v1020 = vmul.f32 %v956, %v988
        %v1021 = vmul.f32 %v957, %v989
        %v1022 = vmul.f32 %v958, %v990
        %v1023 = vmul.f32 %v959, %v991
        %v1024 = vmul.f32 %v960, %v992
        %v1025 = vmul.f32 %v961, %v993
        %v1026 = vmul.f32 %v962, %v994
        %v1027 = vmul.f32 %v963, %v995
        %v1028 = vmul.f32 %v964, %v996
        %v1029 = vmul.f32 %v965, %v997
        %v1030 = vmul.f32 %v966, %v998
        %v1031 = vmul.f32 %v967, %v999
        %v1032 = vmul.f32 %v968, %v1000
        %v1033 = vmul.f32 %v969, %v1001
        %v1034 = vmul.f32 %v970, %v1002
        %v1035 = vmul.f32 %v971, %v1003
        %v1036 = vmul.f32 %v972, %v1004
        %v1037 = vmul.f32 %v973, %v1005
        %v1038 = vmul.f32 %v974, %v1006
        %v1039 = vmul.f32 %v975, %v1007
        %v1040 = vmul.f32 %v976, %v1008
        %v1041 = vld [vmem:[#allocation10] sm:$0xff]
        %v1042 = vld [vmem:[#allocation10 + $0x8] sm:$0xff]
        %v1043 = vld [vmem:[#allocation10 + $0x10] sm:$0xff]
        %v1044 = vld [vmem:[#allocation10 + $0x18] sm:$0xff]
        %v1045 = vld [vmem:[#allocation10 + $0x20] sm:$0xff]
        %v1046 = vld [vmem:[#allocation10 + $0x28] sm:$0xff]
        %v1047 = vld [vmem:[#allocation10 + $0x30] sm:$0xff]
        %v1048 = vld [vmem:[#allocation10 + $0x38] sm:$0xff]
        %v1049 = vld [vmem:[#allocation10 + $0x40] sm:$0xff]
        %v1050 = vld [vmem:[#allocation10 + $0x48] sm:$0xff]
        %v1051 = vld [vmem:[#allocation10 + $0x50] sm:$0xff]
        %v1052 = vld [vmem:[#allocation10 + $0x58] sm:$0xff]
        %v1053 = vld [vmem:[#allocation10 + $0x60] sm:$0xff]
        %v1054 = vld [vmem:[#allocation10 + $0x68] sm:$0xff]
        %v1055 = vld [vmem:[#allocation10 + $0x70] sm:$0xff]
        %v1056 = vld [vmem:[#allocation10 + $0x78] sm:$0xff]
        %v1057 = vld [vmem:[#allocation10 + $0x80] sm:$0xff]
        %v1058 = vld [vmem:[#allocation10 + $0x88] sm:$0xff]
        %v1059 = vld [vmem:[#allocation10 + $0x90] sm:$0xff]
        %v1060 = vld [vmem:[#allocation10 + $0x98] sm:$0xff]
        %v1061 = vld [vmem:[#allocation10 + $0xa0] sm:$0xff]
        %v1062 = vld [vmem:[#allocation10 + $0xa8] sm:$0xff]
        %v1063 = vld [vmem:[#allocation10 + $0xb0] sm:$0xff]
        %v1064 = vld [vmem:[#allocation10 + $0xb8] sm:$0xff]
        %v1065 = vld [vmem:[#allocation10 + $0xc0] sm:$0xff]
        %v1066 = vld [vmem:[#allocation10 + $0xc8] sm:$0xff]
        %v1067 = vld [vmem:[#allocation10 + $0xd0] sm:$0xff]
        %v1068 = vld [vmem:[#allocation10 + $0xd8] sm:$0xff]
        %v1069 = vld [vmem:[#allocation10 + $0xe0] sm:$0xff]
        %v1070 = vld [vmem:[#allocation10 + $0xe8] sm:$0xff]
        %v1071 = vld [vmem:[#allocation10 + $0xf0] sm:$0xff]
        %v1072 = vld [vmem:[#allocation10 + $0xf8] sm:$0xff]
        %v1073 = vld [vmem:[#allocation10 + $0x100] sm:$0xff]
        %v1074 = vld [vmem:[#allocation10 + $0x108] sm:$0xff]
        %v1075 = vld [vmem:[#allocation10 + $0x110] sm:$0xff]
        %v1076 = vld [vmem:[#allocation10 + $0x118] sm:$0xff]
        %v1077 = vld [vmem:[#allocation10 + $0x120] sm:$0xff]
        %v1078 = vld [vmem:[#allocation10 + $0x128] sm:$0xff]
        %v1079 = vld [vmem:[#allocation10 + $0x130] sm:$0xff]
        %v1080 = vld [vmem:[#allocation10 + $0x138] sm:$0xff]
        %v1081 = vld [vmem:[#allocation10 + $0x140] sm:$0xff]
        %v1082 = vld [vmem:[#allocation10 + $0x148] sm:$0xff]
        %v1083 = vld [vmem:[#allocation10 + $0x150] sm:$0xff]
        %v1084 = vld [vmem:[#allocation10 + $0x158] sm:$0xff]
        %v1085 = vld [vmem:[#allocation10 + $0x160] sm:$0xff]
        %v1086 = vld [vmem:[#allocation10 + $0x168] sm:$0xff]
        %v1087 = vld [vmem:[#allocation10 + $0x170] sm:$0xff]
        %v1088 = vld [vmem:[#allocation10 + $0x178] sm:$0xff]
        %v1089 = vld [vmem:[#allocation10 + $0x180] sm:$0xff]
        %v1090 = vld [vmem:[#allocation10 + $0x188] sm:$0xff]
        %v1091 = vld [vmem:[#allocation10 + $0x190] sm:$0xff]
        %v1092 = vld [vmem:[#allocation10 + $0x198] sm:$0xff]
        %v1093 = vld [vmem:[#allocation10 + $0x1a0] sm:$0xff]
        %v1094 = vld [vmem:[#allocation10 + $0x1a8] sm:$0xff]
        %v1095 = vld [vmem:[#allocation10 + $0x1b0] sm:$0xff]
        %v1096 = vld [vmem:[#allocation10 + $0x1b8] sm:$0xff]
        %v1097 = vld [vmem:[#allocation10 + $0x1c0] sm:$0xff]
        %v1098 = vld [vmem:[#allocation10 + $0x1c8] sm:$0xff]
        %v1099 = vld [vmem:[#allocation10 + $0x1d0] sm:$0xff]
        %v1100 = vld [vmem:[#allocation10 + $0x1d8] sm:$0xff]
        %v1101 = vld [vmem:[#allocation10 + $0x1e0] sm:$0xff]
        %v1102 = vld [vmem:[#allocation10 + $0x1e8] sm:$0xff]
        %v1103 = vld [vmem:[#allocation10 + $0x1f0] sm:$0xff]
        %v1104 = vld [vmem:[#allocation10 + $0x1f8] sm:$0xff]
        %v1105 = vld [vmem:[#allocation10 + $0x200] sm:$0xff]
        %v1106 = vld [vmem:[#allocation10 + $0x208] sm:$0xff]
        %v1107 = vld [vmem:[#allocation10 + $0x210] sm:$0xff]
        %v1108 = vld [vmem:[#allocation10 + $0x218] sm:$0xff]
        %v1109 = vld [vmem:[#allocation10 + $0x220] sm:$0xff]
        %v1110 = vld [vmem:[#allocation10 + $0x228] sm:$0xff]
        %v1111 = vld [vmem:[#allocation10 + $0x230] sm:$0xff]
        %v1112 = vld [vmem:[#allocation10 + $0x238] sm:$0xff]
        %v1113 = vld [vmem:[#allocation10 + $0x240] sm:$0xff]
        %v1114 = vld [vmem:[#allocation10 + $0x248] sm:$0xff]
        %v1115 = vld [vmem:[#allocation10 + $0x250] sm:$0xff]
        %v1116 = vld [vmem:[#allocation10 + $0x258] sm:$0xff]
        %v1117 = vld [vmem:[#allocation10 + $0x260] sm:$0xff]
        %v1118 = vld [vmem:[#allocation10 + $0x268] sm:$0xff]
        %v1119 = vld [vmem:[#allocation10 + $0x270] sm:$0xff]
        %v1120 = vld [vmem:[#allocation10 + $0x278] sm:$0xff]
        %v1121 = vld [vmem:[#allocation10 + $0x280] sm:$0xff]
        %v1122 = vld [vmem:[#allocation10 + $0x288] sm:$0xff]
        %v1123 = vld [vmem:[#allocation10 + $0x290] sm:$0xff]
        %v1124 = vld [vmem:[#allocation10 + $0x298] sm:$0xff]
        %v1125 = vld [vmem:[#allocation10 + $0x2a0] sm:$0xff]
        %v1126 = vld [vmem:[#allocation10 + $0x2a8] sm:$0xff]
        %v1127 = vld [vmem:[#allocation10 + $0x2b0] sm:$0xff]
        %v1128 = vld [vmem:[#allocation10 + $0x2b8] sm:$0xff]
        %v1129 = vld [vmem:[#allocation10 + $0x2c0] sm:$0xff]
        %v1130 = vld [vmem:[#allocation10 + $0x2c8] sm:$0xff]
        %v1131 = vld [vmem:[#allocation10 + $0x2d0] sm:$0xff]
        %v1132 = vld [vmem:[#allocation10 + $0x2d8] sm:$0xff]
        %v1133 = vld [vmem:[#allocation10 + $0x2e0] sm:$0xff]
        %v1134 = vld [vmem:[#allocation10 + $0x2e8] sm:$0xff]
        %v1135 = vld [vmem:[#allocation10 + $0x2f0] sm:$0xff]
        %v1136 = vld [vmem:[#allocation10 + $0x2f8] sm:$0xff]
        %v1137 = vld [vmem:[#allocation10 + $0x300] sm:$0xff]
        %v1138 = vld [vmem:[#allocation10 + $0x308] sm:$0xff]
        %v1139 = vld [vmem:[#allocation10 + $0x310] sm:$0xff]
        %v1140 = vld [vmem:[#allocation10 + $0x318] sm:$0xff]
        %v1141 = vld [vmem:[#allocation10 + $0x320] sm:$0xff]
        %v1142 = vld [vmem:[#allocation10 + $0x328] sm:$0xff]
        %v1143 = vld [vmem:[#allocation10 + $0x330] sm:$0xff]
        %v1144 = vld [vmem:[#allocation10 + $0x338] sm:$0xff]
        %v1145 = vld [vmem:[#allocation10 + $0x340] sm:$0xff]
        %v1146 = vld [vmem:[#allocation10 + $0x348] sm:$0xff]
        %v1147 = vld [vmem:[#allocation10 + $0x350] sm:$0xff]
        %v1148 = vld [vmem:[#allocation10 + $0x358] sm:$0xff]
        %v1149 = vld [vmem:[#allocation10 + $0x360] sm:$0xff]
        %v1150 = vld [vmem:[#allocation10 + $0x368] sm:$0xff]
        %v1151 = vld [vmem:[#allocation10 + $0x370] sm:$0xff]
        %v1152 = vld [vmem:[#allocation10 + $0x378] sm:$0xff]
        %v1153 = vld [vmem:[#allocation10 + $0x380] sm:$0xff]
        %v1154 = vld [vmem:[#allocation10 + $0x388] sm:$0xff]
        %v1155 = vld [vmem:[#allocation10 + $0x390] sm:$0xff]
        %v1156 = vld [vmem:[#allocation10 + $0x398] sm:$0xff]
        %v1157 = vld [vmem:[#allocation10 + $0x3a0] sm:$0xff]
        %v1158 = vld [vmem:[#allocation10 + $0x3a8] sm:$0xff]
        %v1159 = vld [vmem:[#allocation10 + $0x3b0] sm:$0xff]
        %v1160 = vld [vmem:[#allocation10 + $0x3b8] sm:$0xff]
        %v1161 = vld [vmem:[#allocation10 + $0x3c0] sm:$0xff]
        %v1162 = vld [vmem:[#allocation10 + $0x3c8] sm:$0xff]
        %v1163 = vld [vmem:[#allocation10 + $0x3d0] sm:$0xff]
        %v1164 = vld [vmem:[#allocation10 + $0x3d8] sm:$0xff]
        %v1165 = vld [vmem:[#allocation10 + $0x3e0] sm:$0xff]
        %v1166 = vld [vmem:[#allocation10 + $0x3e8] sm:$0xff]
        %v1167 = vld [vmem:[#allocation10 + $0x3f0] sm:$0xff]
        %v1168 = vld [vmem:[#allocation10 + $0x3f8] sm:$0xff]
        %v1169 = vld [vmem:[#allocation11] sm:$0xf]
        %v1171 = vlaneseq
        %v1172 = vshrl.u32 %v1171, 7
        %v1173 = vsub.s32 0, %v1172
        %v1174 = vrot.slane %v1169, %v1173
        %v1175 = vlaneseq
        %v1176 = vshrl.u32 %v1175, 7
        %v1177 = vsub.s32 1, %v1176
        %v1178 = vrot.slane %v1169, %v1177
        %v1179 = vlaneseq
        %v1180 = vshrl.u32 %v1179, 7
        %v1181 = vsub.s32 2, %v1180
        %v1182 = vrot.slane %v1169, %v1181
        %v1183 = vlaneseq
        %v1184 = vshrl.u32 %v1183, 7
        %v1185 = vsub.s32 3, %v1184
        %v1186 = vrot.slane %v1169, %v1185
        %1191 = vmatprep.subr.mxu0 %v1042
        %1192 = vmatpush1.msra.mxu0 %v1041
        %1193 = vmatprep.subr.mxu0 %v1046
        %1194 = vmatpush1.msra.mxu0 %v1045
        %1195 = vmatprep.subr.mxu0 %v1050
        %1196 = vmatpush1.msra.mxu0 %v1049
        %1197 = vmatprep.subr.mxu0 %v1054
        %1198 = vmatpush1.msra.mxu0 %v1053
        %1199 = vmatprep.subr.mxu0 %v1058
        %1200 = vmatpush1.msra.mxu0 %v1057
        %1201 = vmatprep.subr.mxu0 %v1062
        %1202 = vmatpush1.msra.mxu0 %v1061
        %1203 = vmatprep.subr.mxu0 %v1066
        %1204 = vmatpush1.msra.mxu0 %v1065
        %1205 = vmatprep.subr.mxu0 %v1070
        %1206 = vmatpush1.msra.mxu0 %v1069
        %1207 = vmatprep.subr.mxu0 %v1074
        %1208 = vmatpush1.msra.mxu0 %v1073
        %1209 = vmatprep.subr.mxu0 %v1078
        %1210 = vmatpush1.msra.mxu0 %v1077
        %1211 = vmatprep.subr.mxu0 %v1082
        %1212 = vmatpush1.msra.mxu0 %v1081
        %1213 = vmatprep.subr.mxu0 %v1086
        %1214 = vmatpush1.msra.mxu0 %v1085
        %1215 = vmatprep.subr.mxu0 %v1090
        %1216 = vmatpush1.msra.mxu0 %v1089
        %1217 = vmatprep.subr.mxu0 %v1094
        %1218 = vmatpush1.msra.mxu0 %v1093
        %1219 = vmatprep.subr.mxu0 %v1098
        %1220 = vmatpush1.msra.mxu0 %v1097
        %1221 = vmatprep.subr.mxu0 %v1102
        %1222 = vmatpush1.msra.mxu0 %v1101
        %1223 = vmatprep.subr.mxu0 %v1106
        %1224 = vmatpush1.msra.mxu0 %v1105
        %1225 = vmatprep.subr.mxu0 %v1110
        %1226 = vmatpush1.msra.mxu0 %v1109
        %1227 = vmatprep.subr.mxu0 %v1114
        %1228 = vmatpush1.msra.mxu0 %v1113
        %1229 = vmatprep.subr.mxu0 %v1118
        %1230 = vmatpush1.msra.mxu0 %v1117
        %1231 = vmatprep.subr.mxu0 %v1122
        %1232 = vmatpush1.msra.mxu0 %v1121
        %1233 = vmatprep.subr.mxu0 %v1126
        %1234 = vmatpush1.msra.mxu0 %v1125
        %1235 = vmatprep.subr.mxu0 %v1130
        %1236 = vmatpush1.msra.mxu0 %v1129
        %1237 = vmatprep.subr.mxu0 %v1134
        %1238 = vmatpush1.msra.mxu0 %v1133
        %1239 = vmatprep.subr.mxu0 %v1138
        %1240 = vmatpush1.msra.mxu0 %v1137
        %1241 = vmatprep.subr.mxu0 %v1142
        %1242 = vmatpush1.msra.mxu0 %v1141
        %1243 = vmatprep.subr.mxu0 %v1146
        %1244 = vmatpush1.msra.mxu0 %v1145
        %1245 = vmatprep.subr.mxu0 %v1150
        %1246 = vmatpush1.msra.mxu0 %v1149
        %1247 = vmatprep.subr.mxu0 %v1154
        %1248 = vmatpush1.msra.mxu0 %v1153
        %1249 = vmatprep.subr.mxu0 %v1158
        %1250 = vmatpush1.msra.mxu0 %v1157
        %1251 = vmatprep.subr.mxu0 %v1162
        %1252 = vmatpush1.msra.mxu0 %v1161
        %1253 = vmatprep.subr.mxu0 %v1166
        %1254 = vmatpush1.msra.mxu0 %v1165
        %1255 = vmatprep.mubr.f32.mxu0 %v1010
        %1256 = vmatmul.mubr.f32.gmra.mrb[0].mxu0 %v1009
        %v1257 = vpop.f32.mrb[0].mxu0
        %v1258 = vadd.f32 %v1174, %v1257
        %v1259 = vpop.f32.mrb[0].mxu0
        %v1260 = vadd.f32 %v1178, %v1259
        %1261 = vmatprep.mubr.f32.mxu0 %v1012
        %1262 = vmatmul.mubr.f32.gmra.mrb[0].mxu0 %v1011
        %v1263 = vpop.f32.mrb[0].mxu0
        %v1264 = vadd.f32 %v1174, %v1263
        %v1265 = vpop.f32.mrb[0].mxu0
        %v1266 = vadd.f32 %v1178, %v1265
        %1267 = vmatprep.mubr.f32.mxu0 %v1014
        %1268 = vmatmul.mubr.f32.gmra.mrb[0].mxu0 %v1013
        %v1269 = vpop.f32.mrb[0].mxu0
        %v1270 = vadd.f32 %v1174, %v1269
        %v1271 = vpop.f32.mrb[0].mxu0
        %v1272 = vadd.f32 %v1178, %v1271
        %1273 = vmatprep.mubr.f32.mxu0 %v1016
        %1274 = vmatmul.mubr.f32.gmra.mrb[0].mxu0 %v1015
        %v1275 = vpop.f32.mrb[0].mxu0
        %v1276 = vadd.f32 %v1174, %v1275
        %v1277 = vpop.f32.mrb[0].mxu0
        %v1278 = vadd.f32 %v1178, %v1277
        %1279 = vmatprep.mubr.f32.mxu0 %v1018
        %1280 = vmatmul.mubr.f32.gmra.mrb[0].mxu0 %v1017
        %v1281 = vpop.f32.mrb[0].mxu0
        %v1282 = vadd.f32 %v1174, %v1281
        %v1283 = vpop.f32.mrb[0].mxu0
        %v1284 = vadd.f32 %v1178, %v1283
        %1285 = vmatprep.mubr.f32.mxu0 %v1020
        %1286 = vmatmul.mubr.f32.gmra.mrb[0].mxu0 %v1019
        %v1287 = vpop.f32.mrb[0].mxu0
        %v1288 = vadd.f32 %v1174, %v1287
        %v1289 = vpop.f32.mrb[0].mxu0
        %v1290 = vadd.f32 %v1178, %v1289
        %1291 = vmatprep.mubr.f32.mxu0 %v1022
        %1292 = vmatmul.mubr.f32.gmra.mrb[0].mxu0 %v1021
        %v1293 = vpop.f32.mrb[0].mxu0
        %v1294 = vadd.f32 %v1174, %v1293
        %v1295 = vpop.f32.mrb[0].mxu0
        %v1296 = vadd.f32 %v1178, %v1295
        %1297 = vmatprep.mubr.f32.mxu0 %v1024
        %1298 = vmatmul.mubr.f32.gmra.mrb[0].mxu0 %v1023
        %v1299 = vpop.f32.mrb[0].mxu0
        %v1300 = vadd.f32 %v1174, %v1299
        %v1301 = vpop.f32.mrb[0].mxu0
        %v1302 = vadd.f32 %v1178, %v1301
        %1303 = vmatprep.mubr.f32.mxu0 %v1026
        %1304 = vmatmul.mubr.f32.gmra.mrb[0].mxu0 %v1025
        %v1305 = vpop.f32.mrb[0].mxu0
        %v1306 = vadd.f32 %v1174, %v1305
        %v1307 = vpop.f32.mrb[0].mxu0
        %v1308 = vadd.f32 %v1178, %v1307
        %1309 = vmatprep.mubr.f32.mxu0 %v1028
        %1310 = vmatmul.mubr.f32.gmra.mrb[0].mxu0 %v1027
        %v1311 = vpop.f32.mrb[0].mxu0
        %v1312 = vadd.f32 %v1174, %v1311
        %v1313 = vpop.f32.mrb[0].mxu0
        %v1314 = vadd.f32 %v1178, %v1313
        %1315 = vmatprep.mubr.f32.mxu0 %v1030
        %1316 = vmatmul.mubr.f32.gmra.mrb[0].mxu0 %v1029
        %v1317 = vpop.f32.mrb[0].mxu0
        %v1318 = vadd.f32 %v1174, %v1317
        %v1319 = vpop.f32.mrb[0].mxu0
        %v1320 = vadd.f32 %v1178, %v1319
        %1321 = vmatprep.mubr.f32.mxu0 %v1032
        %1322 = vmatmul.mubr.f32.gmra.mrb[0].mxu0 %v1031
        %v1323 = vpop.f32.mrb[0].mxu0
        %v1324 = vadd.f32 %v1174, %v1323
        %v1325 = vpop.f32.mrb[0].mxu0
        %v1326 = vadd.f32 %v1178, %v1325
        %1327 = vmatprep.mubr.f32.mxu0 %v1034
        %1328 = vmatmul.mubr.f32.gmra.mrb[0].mxu0 %v1033
        %v1329 = vpop.f32.mrb[0].mxu0
        %v1330 = vadd.f32 %v1174, %v1329
        %v1331 = vpop.f32.mrb[0].mxu0
        %v1332 = vadd.f32 %v1178, %v1331
        %1333 = vmatprep.mubr.f32.mxu0 %v1036
        %1334 = vmatmul.mubr.f32.gmra.mrb[0].mxu0 %v1035
        %v1335 = vpop.f32.mrb[0].mxu0
        %v1336 = vadd.f32 %v1174, %v1335
        %v1337 = vpop.f32.mrb[0].mxu0
        %v1338 = vadd.f32 %v1178, %v1337
        %1339 = vmatprep.mubr.f32.mxu0 %v1038
        %1340 = vmatmul.mubr.f32.gmra.mrb[0].mxu0 %v1037
        %v1341 = vpop.f32.mrb[0].mxu0
        %v1342 = vadd.f32 %v1174, %v1341
        %v1343 = vpop.f32.mrb[0].mxu0
        %v1344 = vadd.f32 %v1178, %v1343
        %1345 = vmatprep.mubr.f32.mxu0 %v1040
        %1346 = vmatmul.mubr.f32.gmra.mrb[0].mxu0 %v1039
        %v1347 = vpop.f32.mrb[0].mxu0
        %v1348 = vadd.f32 %v1174, %v1347
        %v1349 = vpop.f32.mrb[0].mxu0
        %v1350 = vadd.f32 %v1178, %v1349
        %1351 = vdwg.mxu0
        %1352 = vmatprep.subr.mxu0 %v1044
        %1353 = vmatpush1.msra.mxu0 %v1043
        %1354 = vmatprep.subr.mxu0 %v1048
        %1355 = vmatpush1.msra.mxu0 %v1047
        %1356 = vmatprep.subr.mxu0 %v1052
        %1357 = vmatpush1.msra.mxu0 %v1051
        %1358 = vmatprep.subr.mxu0 %v1056
        %1359 = vmatpush1.msra.mxu0 %v1055
        %1360 = vmatprep.subr.mxu0 %v1060
        %1361 = vmatpush1.msra.mxu0 %v1059
        %1362 = vmatprep.subr.mxu0 %v1064
        %1363 = vmatpush1.msra.mxu0 %v1063
        %1364 = vmatprep.subr.mxu0 %v1068
        %1365 = vmatpush1.msra.mxu0 %v1067
        %1366 = vmatprep.subr.mxu0 %v1072
        %1367 = vmatpush1.msra.mxu0 %v1071
        %1368 = vmatprep.subr.mxu0 %v1076
        %1369 = vmatpush1.msra.mxu0 %v1075
        %1370 = vmatprep.subr.mxu0 %v1080
        %1371 = vmatpush1.msra.mxu0 %v1079
        %1372 = vmatprep.subr.mxu0 %v1084
        %1373 = vmatpush1.msra.mxu0 %v1083
        %1374 = vmatprep.subr.mxu0 %v1088
        %1375 = vmatpush1.msra.mxu0 %v1087
        %1376 = vmatprep.subr.mxu0 %v1092
        %1377 = vmatpush1.msra.mxu0 %v1091
        %1378 = vmatprep.subr.mxu0 %v1096
        %1379 = vmatpush1.msra.mxu0 %v1095
        %1380 = vmatprep.subr.mxu0 %v1100
        %1381 = vmatpush1.msra.mxu0 %v1099
        %1382 = vmatprep.subr.mxu0 %v1104
        %1383 = vmatpush1.msra.mxu0 %v1103
        %1384 = vmatprep.subr.mxu0 %v1108
        %1385 = vmatpush1.msra.mxu0 %v1107
        %1386 = vmatprep.subr.mxu0 %v1112
        %1387 = vmatpush1.msra.mxu0 %v1111
        %1388 = vmatprep.subr.mxu0 %v1116
        %1389 = vmatpush1.msra.mxu0 %v1115
        %1390 = vmatprep.subr.mxu0 %v1120
        %1391 = vmatpush1.msra.mxu0 %v1119
        %1392 = vmatprep.subr.mxu0 %v1124
        %1393 = vmatpush1.msra.mxu0 %v1123
        %1394 = vmatprep.subr.mxu0 %v1128
        %1395 = vmatpush1.msra.mxu0 %v1127
        %1396 = vmatprep.subr.mxu0 %v1132
        %1397 = vmatpush1.msra.mxu0 %v1131
        %1398 = vmatprep.subr.mxu0 %v1136
        %1399 = vmatpush1.msra.mxu0 %v1135
        %1400 = vmatprep.subr.mxu0 %v1140
        %1401 = vmatpush1.msra.mxu0 %v1139
        %1402 = vmatprep.subr.mxu0 %v1144
        %1403 = vmatpush1.msra.mxu0 %v1143
        %1404 = vmatprep.subr.mxu0 %v1148
        %1405 = vmatpush1.msra.mxu0 %v1147
        %1406 = vmatprep.subr.mxu0 %v1152
        %1407 = vmatpush1.msra.mxu0 %v1151
        %1408 = vmatprep.subr.mxu0 %v1156
        %1409 = vmatpush1.msra.mxu0 %v1155
        %1410 = vmatprep.subr.mxu0 %v1160
        %1411 = vmatpush1.msra.mxu0 %v1159
        %1412 = vmatprep.subr.mxu0 %v1164
        %1413 = vmatpush1.msra.mxu0 %v1163
        %1414 = vmatprep.subr.mxu0 %v1168
        %1415 = vmatpush1.msra.mxu0 %v1167
        %1416 = vmatprep.mubr.f32.mxu0 %v1010
        %1417 = vmatmul.mubr.f32.gmra.mrb[0].mxu0 %v1009
        %v1418 = vpop.f32.mrb[0].mxu0
        %v1419 = vadd.f32 %v1182, %v1418
        %v1420 = vpop.f32.mrb[0].mxu0
        %v1421 = vadd.f32 %v1186, %v1420
        %1422 = vmatprep.mubr.f32.mxu0 %v1012
        %1423 = vmatmul.mubr.f32.gmra.mrb[0].mxu0 %v1011
        %v1424 = vpop.f32.mrb[0].mxu0
        %v1425 = vadd.f32 %v1182, %v1424
        %v1426 = vpop.f32.mrb[0].mxu0
        %v1427 = vadd.f32 %v1186, %v1426
        %1428 = vmatprep.mubr.f32.mxu0 %v1014
        %1429 = vmatmul.mubr.f32.gmra.mrb[0].mxu0 %v1013
        %v1430 = vpop.f32.mrb[0].mxu0
        %v1431 = vadd.f32 %v1182, %v1430
        %v1432 = vpop.f32.mrb[0].mxu0
        %v1433 = vadd.f32 %v1186, %v1432
        %1434 = vmatprep.mubr.f32.mxu0 %v1016
        %1435 = vmatmul.mubr.f32.gmra.mrb[0].mxu0 %v1015
        %v1436 = vpop.f32.mrb[0].mxu0
        %v1437 = vadd.f32 %v1182, %v1436
        %v1438 = vpop.f32.mrb[0].mxu0
        %v1439 = vadd.f32 %v1186, %v1438
        %1440 = vmatprep.mubr.f32.mxu0 %v1018
        %1441 = vmatmul.mubr.f32.gmra.mrb[0].mxu0 %v1017
        %v1442 = vpop.f32.mrb[0].mxu0
        %v1443 = vadd.f32 %v1182, %v1442
        %v1444 = vpop.f32.mrb[0].mxu0
        %v1445 = vadd.f32 %v1186, %v1444
        %1446 = vmatprep.mubr.f32.mxu0 %v1020
        %1447 = vmatmul.mubr.f32.gmra.mrb[0].mxu0 %v1019
        %v1448 = vpop.f32.mrb[0].mxu0
        %v1449 = vadd.f32 %v1182, %v1448
        %v1450 = vpop.f32.mrb[0].mxu0
        %v1451 = vadd.f32 %v1186, %v1450
        %1452 = vmatprep.mubr.f32.mxu0 %v1022
        %1453 = vmatmul.mubr.f32.gmra.mrb[0].mxu0 %v1021
        %v1454 = vpop.f32.mrb[0].mxu0
        %v1455 = vadd.f32 %v1182, %v1454
        %v1456 = vpop.f32.mrb[0].mxu0
        %v1457 = vadd.f32 %v1186, %v1456
        %1458 = vmatprep.mubr.f32.mxu0 %v1024
        %1459 = vmatmul.mubr.f32.gmra.mrb[0].mxu0 %v1023
        %v1460 = vpop.f32.mrb[0].mxu0
        %v1461 = vadd.f32 %v1182, %v1460
        %v1462 = vpop.f32.mrb[0].mxu0
        %v1463 = vadd.f32 %v1186, %v1462
        %1464 = vmatprep.mubr.f32.mxu0 %v1026
        %1465 = vmatmul.mubr.f32.gmra.mrb[0].mxu0 %v1025
        %v1466 = vpop.f32.mrb[0].mxu0
        %v1467 = vadd.f32 %v1182, %v1466
        %v1468 = vpop.f32.mrb[0].mxu0
        %v1469 = vadd.f32 %v1186, %v1468
        %1470 = vmatprep.mubr.f32.mxu0 %v1028
        %1471 = vmatmul.mubr.f32.gmra.mrb[0].mxu0 %v1027
        %v1472 = vpop.f32.mrb[0].mxu0
        %v1473 = vadd.f32 %v1182, %v1472
        %v1474 = vpop.f32.mrb[0].mxu0
        %v1475 = vadd.f32 %v1186, %v1474
        %1476 = vmatprep.mubr.f32.mxu0 %v1030
        %1477 = vmatmul.mubr.f32.gmra.mrb[0].mxu0 %v1029
        %v1478 = vpop.f32.mrb[0].mxu0
        %v1479 = vadd.f32 %v1182, %v1478
        %v1480 = vpop.f32.mrb[0].mxu0
        %v1481 = vadd.f32 %v1186, %v1480
        %1482 = vmatprep.mubr.f32.mxu0 %v1032
        %1483 = vmatmul.mubr.f32.gmra.mrb[0].mxu0 %v1031
        %v1484 = vpop.f32.mrb[0].mxu0
        %v1485 = vadd.f32 %v1182, %v1484
        %v1486 = vpop.f32.mrb[0].mxu0
        %v1487 = vadd.f32 %v1186, %v1486
        %1488 = vmatprep.mubr.f32.mxu0 %v1034
        %1489 = vmatmul.mubr.f32.gmra.mrb[0].mxu0 %v1033
        %v1490 = vpop.f32.mrb[0].mxu0
        %v1491 = vadd.f32 %v1182, %v1490
        %v1492 = vpop.f32.mrb[0].mxu0
        %v1493 = vadd.f32 %v1186, %v1492
        %1494 = vmatprep.mubr.f32.mxu0 %v1036
        %1495 = vmatmul.mubr.f32.gmra.mrb[0].mxu0 %v1035
        %v1496 = vpop.f32.mrb[0].mxu0
        %v1497 = vadd.f32 %v1182, %v1496
        %v1498 = vpop.f32.mrb[0].mxu0
        %v1499 = vadd.f32 %v1186, %v1498
        %1500 = vmatprep.mubr.f32.mxu0 %v1038
        %1501 = vmatmul.mubr.f32.gmra.mrb[0].mxu0 %v1037
        %v1502 = vpop.f32.mrb[0].mxu0
        %v1503 = vadd.f32 %v1182, %v1502
        %v1504 = vpop.f32.mrb[0].mxu0
        %v1505 = vadd.f32 %v1186, %v1504
        %1506 = vmatprep.mubr.f32.mxu0 %v1040
        %1507 = vmatmul.mubr.f32.gmra.mrb[0].mxu0 %v1039
        %v1508 = vpop.f32.mrb[0].mxu0
        %v1509 = vadd.f32 %v1182, %v1508
        %v1510 = vpop.f32.mrb[0].mxu0
        %v1511 = vadd.f32 %v1186, %v1510
        %1512 = vdwg.mxu0
        %v1513 = vld [vmem:[#allocation13] sm:$0xff]
        %v1514 = vld [vmem:[#allocation13 + $0x8] sm:$0xff]
        %v1515 = vld [vmem:[#allocation13 + $0x10] sm:$0xff]
        %v1516 = vld [vmem:[#allocation13 + $0x18] sm:$0xff]
        %v1517 = vld [vmem:[#allocation13 + $0x20] sm:$0xff]
        %v1518 = vld [vmem:[#allocation13 + $0x28] sm:$0xff]
        %v1519 = vld [vmem:[#allocation13 + $0x30] sm:$0xff]
        %v1520 = vld [vmem:[#allocation13 + $0x38] sm:$0xff]
        %v1521 = vld [vmem:[#allocation13 + $0x40] sm:$0xff]
        %v1522 = vld [vmem:[#allocation13 + $0x48] sm:$0xff]
        %v1523 = vld [vmem:[#allocation13 + $0x50] sm:$0xff]
        %v1524 = vld [vmem:[#allocation13 + $0x58] sm:$0xff]
        %v1525 = vld [vmem:[#allocation13 + $0x60] sm:$0xff]
        %v1526 = vld [vmem:[#allocation13 + $0x68] sm:$0xff]
        %v1527 = vld [vmem:[#allocation13 + $0x70] sm:$0xff]
        %v1528 = vld [vmem:[#allocation13 + $0x78] sm:$0xff]
        %v1529 = vld [vmem:[#allocation13 + $0x80] sm:$0xff]
        %v1530 = vld [vmem:[#allocation13 + $0x88] sm:$0xff]
        %v1531 = vld [vmem:[#allocation13 + $0x90] sm:$0xff]
        %v1532 = vld [vmem:[#allocation13 + $0x98] sm:$0xff]
        %v1533 = vld [vmem:[#allocation13 + $0xa0] sm:$0xff]
        %v1534 = vld [vmem:[#allocation13 + $0xa8] sm:$0xff]
        %v1535 = vld [vmem:[#allocation13 + $0xb0] sm:$0xff]
        %v1536 = vld [vmem:[#allocation13 + $0xb8] sm:$0xff]
        %v1537 = vld [vmem:[#allocation13 + $0xc0] sm:$0xff]
        %v1538 = vld [vmem:[#allocation13 + $0xc8] sm:$0xff]
        %v1539 = vld [vmem:[#allocation13 + $0xd0] sm:$0xff]
        %v1540 = vld [vmem:[#allocation13 + $0xd8] sm:$0xff]
        %v1541 = vld [vmem:[#allocation13 + $0xe0] sm:$0xff]
        %v1542 = vld [vmem:[#allocation13 + $0xe8] sm:$0xff]
        %v1543 = vld [vmem:[#allocation13 + $0xf0] sm:$0xff]
        %v1544 = vld [vmem:[#allocation13 + $0xf8] sm:$0xff]
        %v1545 = vld [vmem:[#allocation13 + $0x100] sm:$0xff]
        %v1546 = vld [vmem:[#allocation13 + $0x108] sm:$0xff]
        %v1547 = vld [vmem:[#allocation13 + $0x110] sm:$0xff]
        %v1548 = vld [vmem:[#allocation13 + $0x118] sm:$0xff]
        %v1549 = vld [vmem:[#allocation13 + $0x120] sm:$0xff]
        %v1550 = vld [vmem:[#allocation13 + $0x128] sm:$0xff]
        %v1551 = vld [vmem:[#allocation13 + $0x130] sm:$0xff]
        %v1552 = vld [vmem:[#allocation13 + $0x138] sm:$0xff]
        %v1553 = vld [vmem:[#allocation13 + $0x140] sm:$0xff]
        %v1554 = vld [vmem:[#allocation13 + $0x148] sm:$0xff]
        %v1555 = vld [vmem:[#allocation13 + $0x150] sm:$0xff]
        %v1556 = vld [vmem:[#allocation13 + $0x158] sm:$0xff]
        %v1557 = vld [vmem:[#allocation13 + $0x160] sm:$0xff]
        %v1558 = vld [vmem:[#allocation13 + $0x168] sm:$0xff]
        %v1559 = vld [vmem:[#allocation13 + $0x170] sm:$0xff]
        %v1560 = vld [vmem:[#allocation13 + $0x178] sm:$0xff]
        %v1561 = vld [vmem:[#allocation13 + $0x180] sm:$0xff]
        %v1562 = vld [vmem:[#allocation13 + $0x188] sm:$0xff]
        %v1563 = vld [vmem:[#allocation13 + $0x190] sm:$0xff]
        %v1564 = vld [vmem:[#allocation13 + $0x198] sm:$0xff]
        %v1565 = vld [vmem:[#allocation13 + $0x1a0] sm:$0xff]
        %v1566 = vld [vmem:[#allocation13 + $0x1a8] sm:$0xff]
        %v1567 = vld [vmem:[#allocation13 + $0x1b0] sm:$0xff]
        %v1568 = vld [vmem:[#allocation13 + $0x1b8] sm:$0xff]
        %v1569 = vld [vmem:[#allocation13 + $0x1c0] sm:$0xff]
        %v1570 = vld [vmem:[#allocation13 + $0x1c8] sm:$0xff]
        %v1571 = vld [vmem:[#allocation13 + $0x1d0] sm:$0xff]
        %v1572 = vld [vmem:[#allocation13 + $0x1d8] sm:$0xff]
        %v1573 = vld [vmem:[#allocation13 + $0x1e0] sm:$0xff]
        %v1574 = vld [vmem:[#allocation13 + $0x1e8] sm:$0xff]
        %v1575 = vld [vmem:[#allocation13 + $0x1f0] sm:$0xff]
        %v1576 = vld [vmem:[#allocation13 + $0x1f8] sm:$0xff]
        %v1577 = vld [vmem:[%s8] sm:$0x1]
        %v1579 = vlaneseq
        %v1580 = vshrl.u32 %v1579, 7
        %v1581 = vsub.s32 0, %v1580
        %v1582 = vrot.slane %v1577, %v1581
        %1584 = vmatprep.subr.mxu0 0.0
        %1585 = vmatpush1.msra.mxu0 %v1513
        %1586 = vmatprep.subr.mxu0 0.0
        %1587 = vmatpush1.msra.mxu0 %v1514
        %1588 = vmatprep.subr.mxu0 0.0
        %1589 = vmatpush1.msra.mxu0 %v1515
        %1590 = vmatprep.subr.mxu0 0.0
        %1591 = vmatpush1.msra.mxu0 %v1516
        %1592 = vmatprep.subr.mxu0 0.0
        %1593 = vmatpush1.msra.mxu0 %v1517
        %1594 = vmatprep.subr.mxu0 0.0
        %1595 = vmatpush1.msra.mxu0 %v1518
        %1596 = vmatprep.subr.mxu0 0.0
        %1597 = vmatpush1.msra.mxu0 %v1519
        %1598 = vmatprep.subr.mxu0 0.0
        %1599 = vmatpush1.msra.mxu0 %v1520
        %1600 = vmatprep.subr.mxu0 0.0
        %1601 = vmatpush1.msra.mxu0 %v1521
        %1602 = vmatprep.subr.mxu0 0.0
        %1603 = vmatpush1.msra.mxu0 %v1522
        %1604 = vmatprep.subr.mxu0 0.0
        %1605 = vmatpush1.msra.mxu0 %v1523
        %1606 = vmatprep.subr.mxu0 0.0
        %1607 = vmatpush1.msra.mxu0 %v1524
        %1608 = vmatprep.subr.mxu0 0.0
        %1609 = vmatpush1.msra.mxu0 %v1525
        %1610 = vmatprep.subr.mxu0 0.0
        %1611 = vmatpush1.msra.mxu0 %v1526
        %1612 = vmatprep.subr.mxu0 0.0
        %1613 = vmatpush1.msra.mxu0 %v1527
        %1614 = vmatprep.subr.mxu0 0.0
        %1615 = vmatpush1.msra.mxu0 %v1528
        %1616 = vmatprep.subr.mxu0 0.0
        %1617 = vmatpush1.msra.mxu0 %v1529
        %1618 = vmatprep.subr.mxu0 0.0
        %1619 = vmatpush1.msra.mxu0 %v1530
        %1620 = vmatprep.subr.mxu0 0.0
        %1621 = vmatpush1.msra.mxu0 %v1531
        %1622 = vmatprep.subr.mxu0 0.0
        %1623 = vmatpush1.msra.mxu0 %v1532
        %1624 = vmatprep.subr.mxu0 0.0
        %1625 = vmatpush1.msra.mxu0 %v1533
        %1626 = vmatprep.subr.mxu0 0.0
        %1627 = vmatpush1.msra.mxu0 %v1534
        %1628 = vmatprep.subr.mxu0 0.0
        %1629 = vmatpush1.msra.mxu0 %v1535
        %1630 = vmatprep.subr.mxu0 0.0
        %1631 = vmatpush1.msra.mxu0 %v1536
        %1632 = vmatprep.subr.mxu0 0.0
        %1633 = vmatpush1.msra.mxu0 %v1537
        %1634 = vmatprep.subr.mxu0 0.0
        %1635 = vmatpush1.msra.mxu0 %v1538
        %1636 = vmatprep.subr.mxu0 0.0
        %1637 = vmatpush1.msra.mxu0 %v1539
        %1638 = vmatprep.subr.mxu0 0.0
        %1639 = vmatpush1.msra.mxu0 %v1540
        %1640 = vmatprep.subr.mxu0 0.0
        %1641 = vmatpush1.msra.mxu0 %v1541
        %1642 = vmatprep.subr.mxu0 0.0
        %1643 = vmatpush1.msra.mxu0 %v1542
        %1644 = vmatprep.subr.mxu0 0.0
        %1645 = vmatpush1.msra.mxu0 %v1543
        %1646 = vmatprep.subr.mxu0 0.0
        %1647 = vmatpush1.msra.mxu0 %v1544
        %1648 = vmatprep.mubr.f32.mxu0 %v1260
        %1649 = vmatmul.mubr.f32.gmra.mrb[0].mxu0 %v1258
        %v1650 = vpop.f32.mrb[0].mxu0
        %v1651 = vadd.f32 %v1582, %v1650
        %v1652 = vpop.f32.mrb[0].mxu0
        %1653 = vmatprep.mubr.f32.mxu0 %v1266
        %1654 = vmatmul.mubr.f32.gmra.mrb[0].mxu0 %v1264
        %v1655 = vpop.f32.mrb[0].mxu0
        %v1656 = vadd.f32 %v1582, %v1655
        %v1657 = vpop.f32.mrb[0].mxu0
        %1658 = vmatprep.mubr.f32.mxu0 %v1272
        %1659 = vmatmul.mubr.f32.gmra.mrb[0].mxu0 %v1270
        %v1660 = vpop.f32.mrb[0].mxu0
        %v1661 = vadd.f32 %v1582, %v1660
        %v1662 = vpop.f32.mrb[0].mxu0
        %1663 = vmatprep.mubr.f32.mxu0 %v1278
        %1664 = vmatmul.mubr.f32.gmra.mrb[0].mxu0 %v1276
        %v1665 = vpop.f32.mrb[0].mxu0
        %v1666 = vadd.f32 %v1582, %v1665
        %v1667 = vpop.f32.mrb[0].mxu0
        %1668 = vmatprep.mubr.f32.mxu0 %v1284
        %1669 = vmatmul.mubr.f32.gmra.mrb[0].mxu0 %v1282
        %v1670 = vpop.f32.mrb[0].mxu0
        %v1671 = vadd.f32 %v1582, %v1670
        %v1672 = vpop.f32.mrb[0].mxu0
        %1673 = vmatprep.mubr.f32.mxu0 %v1290
        %1674 = vmatmul.mubr.f32.gmra.mrb[0].mxu0 %v1288
        %v1675 = vpop.f32.mrb[0].mxu0
        %v1676 = vadd.f32 %v1582, %v1675
        %v1677 = vpop.f32.mrb[0].mxu0
        %1678 = vmatprep.mubr.f32.mxu0 %v1296
        %1679 = vmatmul.mubr.f32.gmra.mrb[0].mxu0 %v1294
        %v1680 = vpop.f32.mrb[0].mxu0
        %v1681 = vadd.f32 %v1582, %v1680
        %v1682 = vpop.f32.mrb[0].mxu0
        %1683 = vmatprep.mubr.f32.mxu0 %v1302
        %1684 = vmatmul.mubr.f32.gmra.mrb[0].mxu0 %v1300
        %v1685 = vpop.f32.mrb[0].mxu0
        %v1686 = vadd.f32 %v1582, %v1685
        %v1687 = vpop.f32.mrb[0].mxu0
        %1688 = vmatprep.mubr.f32.mxu0 %v1308
        %1689 = vmatmul.mubr.f32.gmra.mrb[0].mxu0 %v1306
        %v1690 = vpop.f32.mrb[0].mxu0
        %v1691 = vadd.f32 %v1582, %v1690
        %v1692 = vpop.f32.mrb[0].mxu0
        %1693 = vmatprep.mubr.f32.mxu0 %v1314
        %1694 = vmatmul.mubr.f32.gmra.mrb[0].mxu0 %v1312
        %v1695 = vpop.f32.mrb[0].mxu0
        %v1696 = vadd.f32 %v1582, %v1695
        %v1697 = vpop.f32.mrb[0].mxu0
        %1698 = vmatprep.mubr.f32.mxu0 %v1320
        %1699 = vmatmul.mubr.f32.gmra.mrb[0].mxu0 %v1318
        %v1700 = vpop.f32.mrb[0].mxu0
        %v1701 = vadd.f32 %v1582, %v1700
        %v1702 = vpop.f32.mrb[0].mxu0
        %1703 = vmatprep.mubr.f32.mxu0 %v1326
        %1704 = vmatmul.mubr.f32.gmra.mrb[0].mxu0 %v1324
        %v1705 = vpop.f32.mrb[0].mxu0
        %v1706 = vadd.f32 %v1582, %v1705
        %v1707 = vpop.f32.mrb[0].mxu0
        %1708 = vmatprep.mubr.f32.mxu0 %v1332
        %1709 = vmatmul.mubr.f32.gmra.mrb[0].mxu0 %v1330
        %v1710 = vpop.f32.mrb[0].mxu0
        %v1711 = vadd.f32 %v1582, %v1710
        %v1712 = vpop.f32.mrb[0].mxu0
        %1713 = vmatprep.mubr.f32.mxu0 %v1338
        %1714 = vmatmul.mubr.f32.gmra.mrb[0].mxu0 %v1336
        %v1715 = vpop.f32.mrb[0].mxu0
        %v1716 = vadd.f32 %v1582, %v1715
        %v1717 = vpop.f32.mrb[0].mxu0
        %1718 = vmatprep.mubr.f32.mxu0 %v1344
        %1719 = vmatmul.mubr.f32.gmra.mrb[0].mxu0 %v1342
        %v1720 = vpop.f32.mrb[0].mxu0
        %v1721 = vadd.f32 %v1582, %v1720
        %v1722 = vpop.f32.mrb[0].mxu0
        %1723 = vmatprep.mubr.f32.mxu0 %v1350
        %1724 = vmatmul.mubr.f32.gmra.mrb[0].mxu0 %v1348
        %v1725 = vpop.f32.mrb[0].mxu0
        %v1726 = vadd.f32 %v1582, %v1725
        %v1727 = vpop.f32.mrb[0].mxu0
        %1728 = vdwg.mxu0
        %1729 = vmatprep.subr.mxu0 0.0
        %1730 = vmatpush1.msra.mxu0 %v1545
        %1731 = vmatprep.subr.mxu0 0.0
        %1732 = vmatpush1.msra.mxu0 %v1546
        %1733 = vmatprep.subr.mxu0 0.0
        %1734 = vmatpush1.msra.mxu0 %v1547
        %1735 = vmatprep.subr.mxu0 0.0
        %1736 = vmatpush1.msra.mxu0 %v1548
        %1737 = vmatprep.subr.mxu0 0.0
        %1738 = vmatpush1.msra.mxu0 %v1549
        %1739 = vmatprep.subr.mxu0 0.0
        %1740 = vmatpush1.msra.mxu0 %v1550
        %1741 = vmatprep.subr.mxu0 0.0
        %1742 = vmatpush1.msra.mxu0 %v1551
        %1743 = vmatprep.subr.mxu0 0.0
        %1744 = vmatpush1.msra.mxu0 %v1552
        %1745 = vmatprep.subr.mxu0 0.0
        %1746 = vmatpush1.msra.mxu0 %v1553
        %1747 = vmatprep.subr.mxu0 0.0
        %1748 = vmatpush1.msra.mxu0 %v1554
        %1749 = vmatprep.subr.mxu0 0.0
        %1750 = vmatpush1.msra.mxu0 %v1555
        %1751 = vmatprep.subr.mxu0 0.0
        %1752 = vmatpush1.msra.mxu0 %v1556
        %1753 = vmatprep.subr.mxu0 0.0
        %1754 = vmatpush1.msra.mxu0 %v1557
        %1755 = vmatprep.subr.mxu0 0.0
        %1756 = vmatpush1.msra.mxu0 %v1558
        %1757 = vmatprep.subr.mxu0 0.0
        %1758 = vmatpush1.msra.mxu0 %v1559
        %1759 = vmatprep.subr.mxu0 0.0
        %1760 = vmatpush1.msra.mxu0 %v1560
        %1761 = vmatprep.subr.mxu0 0.0
        %1762 = vmatpush1.msra.mxu0 %v1561
        %1763 = vmatprep.subr.mxu0 0.0
        %1764 = vmatpush1.msra.mxu0 %v1562
        %1765 = vmatprep.subr.mxu0 0.0
        %1766 = vmatpush1.msra.mxu0 %v1563
        %1767 = vmatprep.subr.mxu0 0.0
        %1768 = vmatpush1.msra.mxu0 %v1564
        %1769 = vmatprep.subr.mxu0 0.0
        %1770 = vmatpush1.msra.mxu0 %v1565
        %1771 = vmatprep.subr.mxu0 0.0
        %1772 = vmatpush1.msra.mxu0 %v1566
        %1773 = vmatprep.subr.mxu0 0.0
        %1774 = vmatpush1.msra.mxu0 %v1567
        %1775 = vmatprep.subr.mxu0 0.0
        %1776 = vmatpush1.msra.mxu0 %v1568
        %1777 = vmatprep.subr.mxu0 0.0
        %1778 = vmatpush1.msra.mxu0 %v1569
        %1779 = vmatprep.subr.mxu0 0.0
        %1780 = vmatpush1.msra.mxu0 %v1570
        %1781 = vmatprep.subr.mxu0 0.0
        %1782 = vmatpush1.msra.mxu0 %v1571
        %1783 = vmatprep.subr.mxu0 0.0
        %1784 = vmatpush1.msra.mxu0 %v1572
        %1785 = vmatprep.subr.mxu0 0.0
        %1786 = vmatpush1.msra.mxu0 %v1573
        %1787 = vmatprep.subr.mxu0 0.0
        %1788 = vmatpush1.msra.mxu0 %v1574
        %1789 = vmatprep.subr.mxu0 0.0
        %1790 = vmatpush1.msra.mxu0 %v1575
        %1791 = vmatprep.subr.mxu0 0.0
        %1792 = vmatpush1.msra.mxu0 %v1576
        %1793 = vmatprep.mubr.f32.mxu0 %v1421
        %1794 = vmatmul.mubr.f32.gmra.mrb[0].mxu0 %v1419
        %v1795 = vpop.f32.mrb[0].mxu0
        %v1796 = vadd.f32 %v1651, %v1795
        %v1797 = vpop.f32.mrb[0].mxu0
        %1798 = vmatprep.mubr.f32.mxu0 %v1427
        %1799 = vmatmul.mubr.f32.gmra.mrb[0].mxu0 %v1425
        %v1800 = vpop.f32.mrb[0].mxu0
        %v1801 = vadd.f32 %v1656, %v1800
        %v1802 = vpop.f32.mrb[0].mxu0
        %1803 = vmatprep.mubr.f32.mxu0 %v1433
        %1804 = vmatmul.mubr.f32.gmra.mrb[0].mxu0 %v1431
        %v1805 = vpop.f32.mrb[0].mxu0
        %v1806 = vadd.f32 %v1661, %v1805
        %v1807 = vpop.f32.mrb[0].mxu0
        %1808 = vmatprep.mubr.f32.mxu0 %v1439
        %1809 = vmatmul.mubr.f32.gmra.mrb[0].mxu0 %v1437
        %v1810 = vpop.f32.mrb[0].mxu0
        %v1811 = vadd.f32 %v1666, %v1810
        %v1812 = vpop.f32.mrb[0].mxu0
        %1813 = vmatprep.mubr.f32.mxu0 %v1445
        %1814 = vmatmul.mubr.f32.gmra.mrb[0].mxu0 %v1443
        %v1815 = vpop.f32.mrb[0].mxu0
        %v1816 = vadd.f32 %v1671, %v1815
        %v1817 = vpop.f32.mrb[0].mxu0
        %1818 = vmatprep.mubr.f32.mxu0 %v1451
        %1819 = vmatmul.mubr.f32.gmra.mrb[0].mxu0 %v1449
        %v1820 = vpop.f32.mrb[0].mxu0
        %v1821 = vadd.f32 %v1676, %v1820
        %v1822 = vpop.f32.mrb[0].mxu0
        %1823 = vmatprep.mubr.f32.mxu0 %v1457
        %1824 = vmatmul.mubr.f32.gmra.mrb[0].mxu0 %v1455
        %v1825 = vpop.f32.mrb[0].mxu0
        %v1826 = vadd.f32 %v1681, %v1825
        %v1827 = vpop.f32.mrb[0].mxu0
        %1828 = vmatprep.mubr.f32.mxu0 %v1463
        %1829 = vmatmul.mubr.f32.gmra.mrb[0].mxu0 %v1461
        %v1830 = vpop.f32.mrb[0].mxu0
        %v1831 = vadd.f32 %v1686, %v1830
        %v1832 = vpop.f32.mrb[0].mxu0
        %1833 = vmatprep.mubr.f32.mxu0 %v1469
        %1834 = vmatmul.mubr.f32.gmra.mrb[0].mxu0 %v1467
        %v1835 = vpop.f32.mrb[0].mxu0
        %v1836 = vadd.f32 %v1691, %v1835
        %v1837 = vpop.f32.mrb[0].mxu0
        %1838 = vmatprep.mubr.f32.mxu0 %v1475
        %1839 = vmatmul.mubr.f32.gmra.mrb[0].mxu0 %v1473
        %v1840 = vpop.f32.mrb[0].mxu0
        %v1841 = vadd.f32 %v1696, %v1840
        %v1842 = vpop.f32.mrb[0].mxu0
        %1843 = vmatprep.mubr.f32.mxu0 %v1481
        %1844 = vmatmul.mubr.f32.gmra.mrb[0].mxu0 %v1479
        %v1845 = vpop.f32.mrb[0].mxu0
        %v1846 = vadd.f32 %v1701, %v1845
        %v1847 = vpop.f32.mrb[0].mxu0
        %1848 = vmatprep.mubr.f32.mxu0 %v1487
        %1849 = vmatmul.mubr.f32.gmra.mrb[0].mxu0 %v1485
        %v1850 = vpop.f32.mrb[0].mxu0
        %v1851 = vadd.f32 %v1706, %v1850
        %v1852 = vpop.f32.mrb[0].mxu0
        %1853 = vmatprep.mubr.f32.mxu0 %v1493
        %1854 = vmatmul.mubr.f32.gmra.mrb[0].mxu0 %v1491
        %v1855 = vpop.f32.mrb[0].mxu0
        %v1856 = vadd.f32 %v1711, %v1855
        %v1857 = vpop.f32.mrb[0].mxu0
        %1858 = vmatprep.mubr.f32.mxu0 %v1499
        %1859 = vmatmul.mubr.f32.gmra.mrb[0].mxu0 %v1497
        %v1860 = vpop.f32.mrb[0].mxu0
        %v1861 = vadd.f32 %v1716, %v1860
        %v1862 = vpop.f32.mrb[0].mxu0
        %1863 = vmatprep.mubr.f32.mxu0 %v1505
        %1864 = vmatmul.mubr.f32.gmra.mrb[0].mxu0 %v1503
        %v1865 = vpop.f32.mrb[0].mxu0
        %v1866 = vadd.f32 %v1721, %v1865
        %v1867 = vpop.f32.mrb[0].mxu0
        %1868 = vmatprep.mubr.f32.mxu0 %v1511
        %1869 = vmatmul.mubr.f32.gmra.mrb[0].mxu0 %v1509
        %v1870 = vpop.f32.mrb[0].mxu0
        %v1871 = vadd.f32 %v1726, %v1870
        %v1872 = vpop.f32.mrb[0].mxu0
        %1873 = vdwg.mxu0
        %v1874 = vmax.f32 %v1796, 0.0
        %v1875 = vmax.f32 %v1801, 0.0
        %v1876 = vmax.f32 %v1806, 0.0
        %v1877 = vmax.f32 %v1811, 0.0
        %v1878 = vmax.f32 %v1816, 0.0
        %v1879 = vmax.f32 %v1821, 0.0
        %v1880 = vmax.f32 %v1826, 0.0
        %v1881 = vmax.f32 %v1831, 0.0
        %v1882 = vmax.f32 %v1836, 0.0
        %v1883 = vmax.f32 %v1841, 0.0
        %v1884 = vmax.f32 %v1846, 0.0
        %v1885 = vmax.f32 %v1851, 0.0
        %v1886 = vmax.f32 %v1856, 0.0
        %v1887 = vmax.f32 %v1861, 0.0
        %v1888 = vmax.f32 %v1866, 0.0
        %v1889 = vmax.f32 %v1871, 0.0
        %v1890 = vld [vmem:[%s9] sm:$0xff]
        %v1891 = vld [vmem:[%s9 + $0x8] sm:$0xff]
        %v1892 = vld [vmem:[%s9 + $0x10] sm:$0xff]
        %v1893 = vld [vmem:[%s9 + $0x18] sm:$0xff]
        %v1894 = vld [vmem:[%s9 + $0x20] sm:$0xff]
        %v1895 = vld [vmem:[%s9 + $0x28] sm:$0xff]
        %v1896 = vld [vmem:[%s9 + $0x30] sm:$0xff]
        %v1897 = vld [vmem:[%s9 + $0x38] sm:$0xff]
        %v1898 = vld [vmem:[%s9 + $0x40] sm:$0xff]
        %v1899 = vld [vmem:[%s9 + $0x48] sm:$0xff]
        %v1900 = vld [vmem:[%s9 + $0x50] sm:$0xff]
        %v1901 = vld [vmem:[%s9 + $0x58] sm:$0xff]
        %v1902 = vld [vmem:[%s9 + $0x60] sm:$0xff]
        %v1903 = vld [vmem:[%s9 + $0x68] sm:$0xff]
        %v1904 = vld [vmem:[%s9 + $0x70] sm:$0xff]
        %v1905 = vld [vmem:[%s9 + $0x78] sm:$0xff]
        %v1906 = vld [vmem:[#allocation14] sm:$0x1]
        %v1908 = vlaneseq
        %v1909 = vshrl.u32 %v1908, 7
        %v1910 = vsub.s32 0, %v1909
        %v1911 = vrot.slane %v1906, %v1910
        %1913 = vmatprep.subr.mxu0 0.0
        %1914 = vmatpush1.msra.mxu0 %v1890
        %1915 = vmatprep.subr.mxu0 0.0
        %1916 = vmatpush1.msra.mxu0 %v1891
        %1917 = vmatprep.subr.mxu0 0.0
        %1918 = vmatpush1.msra.mxu0 %v1892
        %1919 = vmatprep.subr.mxu0 0.0
        %1920 = vmatpush1.msra.mxu0 %v1893
        %1921 = vmatprep.subr.mxu0 0.0
        %1922 = vmatpush1.msra.mxu0 %v1894
        %1923 = vmatprep.subr.mxu0 0.0
        %1924 = vmatpush1.msra.mxu0 %v1895
        %1925 = vmatprep.subr.mxu0 0.0
        %1926 = vmatpush1.msra.mxu0 %v1896
        %1927 = vmatprep.subr.mxu0 0.0
        %1928 = vmatpush1.msra.mxu0 %v1897
        %1929 = vmatprep.subr.mxu0 0.0
        %1930 = vmatpush1.msra.mxu0 %v1898
        %1931 = vmatprep.subr.mxu0 0.0
        %1932 = vmatpush1.msra.mxu0 %v1899
        %1933 = vmatprep.subr.mxu0 0.0
        %1934 = vmatpush1.msra.mxu0 %v1900
        %1935 = vmatprep.subr.mxu0 0.0
        %1936 = vmatpush1.msra.mxu0 %v1901
        %1937 = vmatprep.subr.mxu0 0.0
        %1938 = vmatpush1.msra.mxu0 %v1902
        %1939 = vmatprep.subr.mxu0 0.0
        %1940 = vmatpush1.msra.mxu0 %v1903
        %1941 = vmatprep.subr.mxu0 0.0
        %1942 = vmatpush1.msra.mxu0 %v1904
        %1943 = vmatprep.subr.mxu0 0.0
        %1944 = vmatpush1.msra.mxu0 %v1905
        %1945 = vmatprep.subr.mxu0 0.0
        %1946 = vmatpush1.msra.mxu0 0.0
        %1947 = vmatprep.subr.mxu0 0.0
        %1948 = vmatpush1.msra.mxu0 0.0
        %1949 = vmatprep.subr.mxu0 0.0
        %1950 = vmatpush1.msra.mxu0 0.0
        %1951 = vmatprep.subr.mxu0 0.0
        %1952 = vmatpush1.msra.mxu0 0.0
        %1953 = vmatprep.subr.mxu0 0.0
        %1954 = vmatpush1.msra.mxu0 0.0
        %1955 = vmatprep.subr.mxu0 0.0
        %1956 = vmatpush1.msra.mxu0 0.0
        %1957 = vmatprep.subr.mxu0 0.0
        %1958 = vmatpush1.msra.mxu0 0.0
        %1959 = vmatprep.subr.mxu0 0.0
        %1960 = vmatpush1.msra.mxu0 0.0
        %1961 = vmatprep.subr.mxu0 0.0
        %1962 = vmatpush1.msra.mxu0 0.0
        %1963 = vmatprep.subr.mxu0 0.0
        %1964 = vmatpush1.msra.mxu0 0.0
        %1965 = vmatprep.subr.mxu0 0.0
        %1966 = vmatpush1.msra.mxu0 0.0
        %1967 = vmatprep.subr.mxu0 0.0
        %1968 = vmatpush1.msra.mxu0 0.0
        %1969 = vmatprep.subr.mxu0 0.0
        %1970 = vmatpush1.msra.mxu0 0.0
        %1971 = vmatprep.subr.mxu0 0.0
        %1972 = vmatpush1.msra.mxu0 0.0
        %1973 = vmatprep.subr.mxu0 0.0
        %1974 = vmatpush1.msra.mxu0 0.0
        %1975 = vmatprep.subr.mxu0 0.0
        %1976 = vmatpush1.msra.mxu0 0.0
        %1977 = vmatprep.mubr.f32.mxu0 0.0
        %1978 = vmatmul.mubr.f32.gmra.mrb[0].mxu0 %v1874
        %v1979 = vpop.f32.mrb[0].mxu0
        %v1980 = vadd.f32 %v1911, %v1979
        %v1981 = vpop.f32.mrb[0].mxu0
        %1982 = vmatprep.mubr.f32.mxu0 0.0
        %1983 = vmatmul.mubr.f32.gmra.mrb[0].mxu0 %v1875
        %v1984 = vpop.f32.mrb[0].mxu0
        %v1985 = vadd.f32 %v1911, %v1984
        %v1986 = vpop.f32.mrb[0].mxu0
        %1987 = vmatprep.mubr.f32.mxu0 0.0
        %1988 = vmatmul.mubr.f32.gmra.mrb[0].mxu0 %v1876
        %v1989 = vpop.f32.mrb[0].mxu0
        %v1990 = vadd.f32 %v1911, %v1989
        %v1991 = vpop.f32.mrb[0].mxu0
        %1992 = vmatprep.mubr.f32.mxu0 0.0
        %1993 = vmatmul.mubr.f32.gmra.mrb[0].mxu0 %v1877
        %v1994 = vpop.f32.mrb[0].mxu0
        %v1995 = vadd.f32 %v1911, %v1994
        %v1996 = vpop.f32.mrb[0].mxu0
        %1997 = vmatprep.mubr.f32.mxu0 0.0
        %1998 = vmatmul.mubr.f32.gmra.mrb[0].mxu0 %v1878
        %v1999 = vpop.f32.mrb[0].mxu0
        %v2000 = vadd.f32 %v1911, %v1999
        %v2001 = vpop.f32.mrb[0].mxu0
        %2002 = vmatprep.mubr.f32.mxu0 0.0
        %2003 = vmatmul.mubr.f32.gmra.mrb[0].mxu0 %v1879
        %v2004 = vpop.f32.mrb[0].mxu0
        %v2005 = vadd.f32 %v1911, %v2004
        %v2006 = vpop.f32.mrb[0].mxu0
        %2007 = vmatprep.mubr.f32.mxu0 0.0
        %2008 = vmatmul.mubr.f32.gmra.mrb[0].mxu0 %v1880
        %v2009 = vpop.f32.mrb[0].mxu0
        %v2010 = vadd.f32 %v1911, %v2009
        %v2011 = vpop.f32.mrb[0].mxu0
        %2012 = vmatprep.mubr.f32.mxu0 0.0
        %2013 = vmatmul.mubr.f32.gmra.mrb[0].mxu0 %v1881
        %v2014 = vpop.f32.mrb[0].mxu0
        %v2015 = vadd.f32 %v1911, %v2014
        %v2016 = vpop.f32.mrb[0].mxu0
        %2017 = vmatprep.mubr.f32.mxu0 0.0
        %2018 = vmatmul.mubr.f32.gmra.mrb[0].mxu0 %v1882
        %v2019 = vpop.f32.mrb[0].mxu0
        %v2020 = vadd.f32 %v1911, %v2019
        %v2021 = vpop.f32.mrb[0].mxu0
        %2022 = vmatprep.mubr.f32.mxu0 0.0
        %2023 = vmatmul.mubr.f32.gmra.mrb[0].mxu0 %v1883
        %v2024 = vpop.f32.mrb[0].mxu0
        %v2025 = vadd.f32 %v1911, %v2024
        %v2026 = vpop.f32.mrb[0].mxu0
        %2027 = vmatprep.mubr.f32.mxu0 0.0
        %2028 = vmatmul.mubr.f32.gmra.mrb[0].mxu0 %v1884
        %v2029 = vpop.f32.mrb[0].mxu0
        %v2030 = vadd.f32 %v1911, %v2029
        %v2031 = vpop.f32.mrb[0].mxu0
        %2032 = vmatprep.mubr.f32.mxu0 0.0
        %2033 = vmatmul.mubr.f32.gmra.mrb[0].mxu0 %v1885
        %v2034 = vpop.f32.mrb[0].mxu0
        %v2035 = vadd.f32 %v1911, %v2034
        %v2036 = vpop.f32.mrb[0].mxu0
        %2037 = vmatprep.mubr.f32.mxu0 0.0
        %2038 = vmatmul.mubr.f32.gmra.mrb[0].mxu0 %v1886
        %v2039 = vpop.f32.mrb[0].mxu0
        %v2040 = vadd.f32 %v1911, %v2039
        %v2041 = vpop.f32.mrb[0].mxu0
        %2042 = vmatprep.mubr.f32.mxu0 0.0
        %2043 = vmatmul.mubr.f32.gmra.mrb[0].mxu0 %v1887
        %v2044 = vpop.f32.mrb[0].mxu0
        %v2045 = vadd.f32 %v1911, %v2044
        %v2046 = vpop.f32.mrb[0].mxu0
        %2047 = vmatprep.mubr.f32.mxu0 0.0
        %2048 = vmatmul.mubr.f32.gmra.mrb[0].mxu0 %v1888
        %v2049 = vpop.f32.mrb[0].mxu0
        %v2050 = vadd.f32 %v1911, %v2049
        %v2051 = vpop.f32.mrb[0].mxu0
        %2052 = vmatprep.mubr.f32.mxu0 0.0
        %2053 = vmatmul.mubr.f32.gmra.mrb[0].mxu0 %v1889
        %v2054 = vpop.f32.mrb[0].mxu0
        %v2055 = vadd.f32 %v1911, %v2054
        %v2056 = vpop.f32.mrb[0].mxu0
        %2057 = vdwg.mxu0
        %v2058 = vmax.f32 %v1980, 0.0
        %v2059 = vmax.f32 %v1985, 0.0
        %v2060 = vmax.f32 %v1990, 0.0
        %v2061 = vmax.f32 %v1995, 0.0
        %v2062 = vmax.f32 %v2000, 0.0
        %v2063 = vmax.f32 %v2005, 0.0
        %v2064 = vmax.f32 %v2010, 0.0
        %v2065 = vmax.f32 %v2015, 0.0
        %v2066 = vmax.f32 %v2020, 0.0
        %v2067 = vmax.f32 %v2025, 0.0
        %v2068 = vmax.f32 %v2030, 0.0
        %v2069 = vmax.f32 %v2035, 0.0
        %v2070 = vmax.f32 %v2040, 0.0
        %v2071 = vmax.f32 %v2045, 0.0
        %v2072 = vmax.f32 %v2050, 0.0
        %v2073 = vmax.f32 %v2055, 0.0
        %v2074 = vld [vmem:[%s11] sm:$0xff]
        %v2075 = vld [vmem:[%s11 + $0x8] sm:$0xff]
        %v2076 = vld [vmem:[%s11 + $0x10] sm:$0xff]
        %v2077 = vld [vmem:[%s11 + $0x18] sm:$0xff]
        %v2078 = vld [vmem:[%s12] sm:$0x1]
        %v2080 = vlaneseq
        %v2081 = vshrl.u32 %v2080, 7
        %v2082 = vsub.s32 0, %v2081
        %v2083 = vrot.slane %v2078, %v2082
        %vm2085 = vcmask 261120
        %v2087 = vsel %vm2085, %v2058, 0
        %v2090 = vsel %vm2085, %v2059, 0
        %v2093 = vsel %vm2085, %v2060, 0
        %v2096 = vsel %vm2085, %v2061, 0
        %v2099 = vsel %vm2085, %v2062, 0
        %v2102 = vsel %vm2085, %v2063, 0
        %v2105 = vsel %vm2085, %v2064, 0
        %v2108 = vsel %vm2085, %v2065, 0
        %v2111 = vsel %vm2085, %v2066, 0
        %v2114 = vsel %vm2085, %v2067, 0
        %v2117 = vsel %vm2085, %v2068, 0
        %v2120 = vsel %vm2085, %v2069, 0
        %v2123 = vsel %vm2085, %v2070, 0
        %v2126 = vsel %vm2085, %v2071, 0
        %v2129 = vsel %vm2085, %v2072, 0
        %v2132 = vsel %vm2085, %v2073, 0
        %2134 = vmatprep.subr.mxu0 0.0
        %2135 = vmatpush1.msra.mxu0 %v2074
        %2136 = vmatprep.subr.mxu0 0.0
        %2137 = vmatpush1.msra.mxu0 %v2075
        %2138 = vmatprep.subr.mxu0 0.0
        %2139 = vmatpush1.msra.mxu0 %v2076
        %2140 = vmatprep.subr.mxu0 0.0
        %2141 = vmatpush1.msra.mxu0 %v2077
        %2142 = vmatprep.subr.mxu0 0.0
        %2143 = vmatpush1.msra.mxu0 0.0
        %2144 = vmatprep.subr.mxu0 0.0
        %2145 = vmatpush1.msra.mxu0 0.0
        %2146 = vmatprep.subr.mxu0 0.0
        %2147 = vmatpush1.msra.mxu0 0.0
        %2148 = vmatprep.subr.mxu0 0.0
        %2149 = vmatpush1.msra.mxu0 0.0
        %2150 = vmatprep.subr.mxu0 0.0
        %2151 = vmatpush1.msra.mxu0 0.0
        %2152 = vmatprep.subr.mxu0 0.0
        %2153 = vmatpush1.msra.mxu0 0.0
        %2154 = vmatprep.subr.mxu0 0.0
        %2155 = vmatpush1.msra.mxu0 0.0
        %2156 = vmatprep.subr.mxu0 0.0
        %2157 = vmatpush1.msra.mxu0 0.0
        %2158 = vmatprep.subr.mxu0 0.0
        %2159 = vmatpush1.msra.mxu0 0.0
        %2160 = vmatprep.subr.mxu0 0.0
        %2161 = vmatpush1.msra.mxu0 0.0
        %2162 = vmatprep.subr.mxu0 0.0
        %2163 = vmatpush1.msra.mxu0 0.0
        %2164 = vmatprep.subr.mxu0 0.0
        %2165 = vmatpush1.msra.mxu0 0.0
        %2166 = vmatprep.subr.mxu0 0.0
        %2167 = vmatpush1.msra.mxu0 0.0
        %2168 = vmatprep.subr.mxu0 0.0
        %2169 = vmatpush1.msra.mxu0 0.0
        %2170 = vmatprep.subr.mxu0 0.0
        %2171 = vmatpush1.msra.mxu0 0.0
        %2172 = vmatprep.subr.mxu0 0.0
        %2173 = vmatpush1.msra.mxu0 0.0
        %2174 = vmatprep.subr.mxu0 0.0
        %2175 = vmatpush1.msra.mxu0 0.0
        %2176 = vmatprep.subr.mxu0 0.0
        %2177 = vmatpush1.msra.mxu0 0.0
        %2178 = vmatprep.subr.mxu0 0.0
        %2179 = vmatpush1.msra.mxu0 0.0
        %2180 = vmatprep.subr.mxu0 0.0
        %2181 = vmatpush1.msra.mxu0 0.0
        %2182 = vmatprep.subr.mxu0 0.0
        %2183 = vmatpush1.msra.mxu0 0.0
        %2184 = vmatprep.subr.mxu0 0.0
        %2185 = vmatpush1.msra.mxu0 0.0
        %2186 = vmatprep.subr.mxu0 0.0
        %2187 = vmatpush1.msra.mxu0 0.0
        %2188 = vmatprep.subr.mxu0 0.0
        %2189 = vmatpush1.msra.mxu0 0.0
        %2190 = vmatprep.subr.mxu0 0.0
        %2191 = vmatpush1.msra.mxu0 0.0
        %2192 = vmatprep.subr.mxu0 0.0
        %2193 = vmatpush1.msra.mxu0 0.0
        %2194 = vmatprep.subr.mxu0 0.0
        %2195 = vmatpush1.msra.mxu0 0.0
        %2196 = vmatprep.subr.mxu0 0.0
        %2197 = vmatpush1.msra.mxu0 0.0
        %2198 = vmatprep.mubr.f32.mxu0 0.0
        %2199 = vmatmul.mubr.f32.gmra.mrb[0].mxu0 %v2087
        %v2200 = vpop.f32.mrb[0].mxu0
        %v2201 = vadd.f32 %v2083, %v2200
        %v2202 = vpop.f32.mrb[0].mxu0
        %2203 = vmatprep.mubr.f32.mxu0 0.0
        %2204 = vmatmul.mubr.f32.gmra.mrb[0].mxu0 %v2090
        %v2205 = vpop.f32.mrb[0].mxu0
        %v2206 = vadd.f32 %v2083, %v2205
        %v2207 = vpop.f32.mrb[0].mxu0
        %2208 = vmatprep.mubr.f32.mxu0 0.0
        %2209 = vmatmul.mubr.f32.gmra.mrb[0].mxu0 %v2093
        %v2210 = vpop.f32.mrb[0].mxu0
        %v2211 = vadd.f32 %v2083, %v2210
        %v2212 = vpop.f32.mrb[0].mxu0
        %2213 = vmatprep.mubr.f32.mxu0 0.0
        %2214 = vmatmul.mubr.f32.gmra.mrb[0].mxu0 %v2096
        %v2215 = vpop.f32.mrb[0].mxu0
        %v2216 = vadd.f32 %v2083, %v2215
        %v2217 = vpop.f32.mrb[0].mxu0
        %2218 = vmatprep.mubr.f32.mxu0 0.0
        %2219 = vmatmul.mubr.f32.gmra.mrb[0].mxu0 %v2099
        %v2220 = vpop.f32.mrb[0].mxu0
        %v2221 = vadd.f32 %v2083, %v2220
        %v2222 = vpop.f32.mrb[0].mxu0
        %2223 = vmatprep.mubr.f32.mxu0 0.0
        %2224 = vmatmul.mubr.f32.gmra.mrb[0].mxu0 %v2102
        %v2225 = vpop.f32.mrb[0].mxu0
        %v2226 = vadd.f32 %v2083, %v2225
        %v2227 = vpop.f32.mrb[0].mxu0
        %2228 = vmatprep.mubr.f32.mxu0 0.0
        %2229 = vmatmul.mubr.f32.gmra.mrb[0].mxu0 %v2105
        %v2230 = vpop.f32.mrb[0].mxu0
        %v2231 = vadd.f32 %v2083, %v2230
        %v2232 = vpop.f32.mrb[0].mxu0
        %2233 = vmatprep.mubr.f32.mxu0 0.0
        %2234 = vmatmul.mubr.f32.gmra.mrb[0].mxu0 %v2108
        %v2235 = vpop.f32.mrb[0].mxu0
        %v2236 = vadd.f32 %v2083, %v2235
        %v2237 = vpop.f32.mrb[0].mxu0
        %2238 = vmatprep.mubr.f32.mxu0 0.0
        %2239 = vmatmul.mubr.f32.gmra.mrb[0].mxu0 %v2111
        %v2240 = vpop.f32.mrb[0].mxu0
        %v2241 = vadd.f32 %v2083, %v2240
        %v2242 = vpop.f32.mrb[0].mxu0
        %2243 = vmatprep.mubr.f32.mxu0 0.0
        %2244 = vmatmul.mubr.f32.gmra.mrb[0].mxu0 %v2114
        %v2245 = vpop.f32.mrb[0].mxu0
        %v2246 = vadd.f32 %v2083, %v2245
        %v2247 = vpop.f32.mrb[0].mxu0
        %2248 = vmatprep.mubr.f32.mxu0 0.0
        %2249 = vmatmul.mubr.f32.gmra.mrb[0].mxu0 %v2117
        %v2250 = vpop.f32.mrb[0].mxu0
        %v2251 = vadd.f32 %v2083, %v2250
        %v2252 = vpop.f32.mrb[0].mxu0
        %2253 = vmatprep.mubr.f32.mxu0 0.0
        %2254 = vmatmul.mubr.f32.gmra.mrb[0].mxu0 %v2120
        %v2255 = vpop.f32.mrb[0].mxu0
        %v2256 = vadd.f32 %v2083, %v2255
        %v2257 = vpop.f32.mrb[0].mxu0
        %2258 = vmatprep.mubr.f32.mxu0 0.0
        %2259 = vmatmul.mubr.f32.gmra.mrb[0].mxu0 %v2123
        %v2260 = vpop.f32.mrb[0].mxu0
        %v2261 = vadd.f32 %v2083, %v2260
        %v2262 = vpop.f32.mrb[0].mxu0
        %2263 = vmatprep.mubr.f32.mxu0 0.0
        %2264 = vmatmul.mubr.f32.gmra.mrb[0].mxu0 %v2126
        %v2265 = vpop.f32.mrb[0].mxu0
        %v2266 = vadd.f32 %v2083, %v2265
        %v2267 = vpop.f32.mrb[0].mxu0
        %2268 = vmatprep.mubr.f32.mxu0 0.0
        %2269 = vmatmul.mubr.f32.gmra.mrb[0].mxu0 %v2129
        %v2270 = vpop.f32.mrb[0].mxu0
        %v2271 = vadd.f32 %v2083, %v2270
        %v2272 = vpop.f32.mrb[0].mxu0
        %2273 = vmatprep.mubr.f32.mxu0 0.0
        %2274 = vmatmul.mubr.f32.gmra.mrb[0].mxu0 %v2132
        %v2275 = vpop.f32.mrb[0].mxu0
        %v2276 = vadd.f32 %v2083, %v2275
        %v2277 = vpop.f32.mrb[0].mxu0
        %2278 = vdwg.mxu0
        %2279 = vst [vmem:[%s925] sm:$0xff] %v2201
        %2280 = vst [vmem:[%s925 + $0x8] sm:$0xff] %v2206
        %2281 = vst [vmem:[%s925 + $0x10] sm:$0xff] %v2211
        %2282 = vst [vmem:[%s925 + $0x18] sm:$0xff] %v2216
        %2283 = vst [vmem:[%s925 + $0x20] sm:$0xff] %v2221
        %2284 = vst [vmem:[%s925 + $0x28] sm:$0xff] %v2226
        %2285 = vst [vmem:[%s925 + $0x30] sm:$0xff] %v2231
        %2286 = vst [vmem:[%s925 + $0x38] sm:$0xff] %v2236
        %2287 = vst [vmem:[%s925 + $0x40] sm:$0xff] %v2241
        %2288 = vst [vmem:[%s925 + $0x48] sm:$0xff] %v2246
        %2289 = vst [vmem:[%s925 + $0x50] sm:$0xff] %v2251
        %2290 = vst [vmem:[%s925 + $0x58] sm:$0xff] %v2256
        %2291 = vst [vmem:[%s925 + $0x60] sm:$0xff] %v2261
        %2292 = vst [vmem:[%s925 + $0x68] sm:$0xff] %v2266
        %2293 = vst [vmem:[%s925 + $0x70] sm:$0xff] %v2271
        %2294 = vst [vmem:[%s925 + $0x78] sm:$0xff] %v2276
        %v2295 = vld [vmem:[%s941] sm:$0xff]
        %v2296 = vld [vmem:[%s941 + $0x8] sm:$0xff]
        %v2297 = vld [vmem:[%s941 + $0x10] sm:$0xff]
        %v2298 = vld [vmem:[%s941 + $0x18] sm:$0xff]
        %v2299 = vld [vmem:[%s941 + $0x20] sm:$0xff]
        %v2300 = vld [vmem:[%s941 + $0x28] sm:$0xff]
        %v2301 = vld [vmem:[%s941 + $0x30] sm:$0xff]
        %v2302 = vld [vmem:[%s941 + $0x38] sm:$0xff]
        %v2303 = vld [vmem:[%s941 + $0x40] sm:$0xff]
        %v2304 = vld [vmem:[%s941 + $0x48] sm:$0xff]
        %v2305 = vld [vmem:[%s941 + $0x50] sm:$0xff]
        %v2306 = vld [vmem:[%s941 + $0x58] sm:$0xff]
        %v2307 = vld [vmem:[%s941 + $0x60] sm:$0xff]
        %v2308 = vld [vmem:[%s941 + $0x68] sm:$0xff]
        %v2309 = vld [vmem:[%s941 + $0x70] sm:$0xff]
        %v2310 = vld [vmem:[%s941 + $0x78] sm:$0xff]
        %v2311 = vmul.f32 %v2295, 1.6487212
        %v2312 = vmul.f32 %v2296, 1.6487212
        %v2313 = vmul.f32 %v2297, 1.6487212
        %v2314 = vmul.f32 %v2298, 1.6487212
        %v2315 = vmul.f32 %v2299, 1.6487212
        %v2316 = vmul.f32 %v2300, 1.6487212
        %v2317 = vmul.f32 %v2301, 1.6487212
        %v2318 = vmul.f32 %v2302, 1.6487212
        %v2319 = vmul.f32 %v2303, 1.6487212
        %v2320 = vmul.f32 %v2304, 1.6487212
        %v2321 = vmul.f32 %v2305, 1.6487212
        %v2322 = vmul.f32 %v2306, 1.6487212
        %v2323 = vmul.f32 %v2307, 1.6487212
        %v2324 = vmul.f32 %v2308, 1.6487212
        %v2325 = vmul.f32 %v2309, 1.6487212
        %v2326 = vmul.f32 %v2310, 1.6487212
        %v2327 = vadd.f32 %v2201, %v2311
        %v2328 = vadd.f32 %v2206, %v2312
        %v2329 = vadd.f32 %v2211, %v2313
        %v2330 = vadd.f32 %v2216, %v2314
        %v2331 = vadd.f32 %v2221, %v2315
        %v2332 = vadd.f32 %v2226, %v2316
        %v2333 = vadd.f32 %v2231, %v2317
        %v2334 = vadd.f32 %v2236, %v2318
        %v2335 = vadd.f32 %v2241, %v2319
        %v2336 = vadd.f32 %v2246, %v2320
        %v2337 = vadd.f32 %v2251, %v2321
        %v2338 = vadd.f32 %v2256, %v2322
        %v2339 = vadd.f32 %v2261, %v2323
        %v2340 = vadd.f32 %v2266, %v2324
        %v2341 = vadd.f32 %v2271, %v2325
        %v2342 = vadd.f32 %v2276, %v2326
        %v2343 = vld [vmem:[%s13] sm:$0xff]
        %v2344 = vld [vmem:[%s13 + $0x8] sm:$0xff]
        %v2345 = vld [vmem:[%s13 + $0x10] sm:$0xff]
        %v2346 = vld [vmem:[%s13 + $0x18] sm:$0xff]
        %v2347 = vld [vmem:[%s13 + $0x20] sm:$0xff]
        %v2348 = vld [vmem:[%s13 + $0x28] sm:$0xff]
        %v2349 = vld [vmem:[%s13 + $0x30] sm:$0xff]
        %v2350 = vld [vmem:[%s13 + $0x38] sm:$0xff]
        %v2351 = vld [vmem:[%s13 + $0x40] sm:$0xff]
        %v2352 = vld [vmem:[%s13 + $0x48] sm:$0xff]
        %v2353 = vld [vmem:[%s13 + $0x50] sm:$0xff]
        %v2354 = vld [vmem:[%s13 + $0x58] sm:$0xff]
        %v2355 = vld [vmem:[%s13 + $0x60] sm:$0xff]
        %v2356 = vld [vmem:[%s13 + $0x68] sm:$0xff]
        %v2357 = vld [vmem:[%s13 + $0x70] sm:$0xff]
        %v2358 = vld [vmem:[%s13 + $0x78] sm:$0xff]
        %v2359 = vld [vmem:[%s14] sm:$0x1]
        %v2361 = vlaneseq
        %v2362 = vshrl.u32 %v2361, 7
        %v2363 = vsub.s32 0, %v2362
        %v2364 = vrot.slane %v2359, %v2363
        %2366 = vmatprep.subr.mxu0 0.0
        %2367 = vmatpush1.msra.mxu0 %v2343
        %2368 = vmatprep.subr.mxu0 0.0
        %2369 = vmatpush1.msra.mxu0 %v2344
        %2370 = vmatprep.subr.mxu0 0.0
        %2371 = vmatpush1.msra.mxu0 %v2345
        %2372 = vmatprep.subr.mxu0 0.0
        %2373 = vmatpush1.msra.mxu0 %v2346
        %2374 = vmatprep.subr.mxu0 0.0
        %2375 = vmatpush1.msra.mxu0 %v2347
        %2376 = vmatprep.subr.mxu0 0.0
        %2377 = vmatpush1.msra.mxu0 %v2348
        %2378 = vmatprep.subr.mxu0 0.0
        %2379 = vmatpush1.msra.mxu0 %v2349
        %2380 = vmatprep.subr.mxu0 0.0
        %2381 = vmatpush1.msra.mxu0 %v2350
        %2382 = vmatprep.subr.mxu0 0.0
        %2383 = vmatpush1.msra.mxu0 %v2351
        %2384 = vmatprep.subr.mxu0 0.0
        %2385 = vmatpush1.msra.mxu0 %v2352
        %2386 = vmatprep.subr.mxu0 0.0
        %2387 = vmatpush1.msra.mxu0 %v2353
        %2388 = vmatprep.subr.mxu0 0.0
        %2389 = vmatpush1.msra.mxu0 %v2354
        %2390 = vmatprep.subr.mxu0 0.0
        %2391 = vmatpush1.msra.mxu0 %v2355
        %2392 = vmatprep.subr.mxu0 0.0
        %2393 = vmatpush1.msra.mxu0 %v2356
        %2394 = vmatprep.subr.mxu0 0.0
        %2395 = vmatpush1.msra.mxu0 %v2357
        %2396 = vmatprep.subr.mxu0 0.0
        %2397 = vmatpush1.msra.mxu0 %v2358
        %2398 = vmatprep.subr.mxu0 0.0
        %2399 = vmatpush1.msra.mxu0 0.0
        %2400 = vmatprep.subr.mxu0 0.0
        %2401 = vmatpush1.msra.mxu0 0.0
        %2402 = vmatprep.subr.mxu0 0.0
        %2403 = vmatpush1.msra.mxu0 0.0
        %2404 = vmatprep.subr.mxu0 0.0
        %2405 = vmatpush1.msra.mxu0 0.0
        %2406 = vmatprep.subr.mxu0 0.0
        %2407 = vmatpush1.msra.mxu0 0.0
        %2408 = vmatprep.subr.mxu0 0.0
        %2409 = vmatpush1.msra.mxu0 0.0
        %2410 = vmatprep.subr.mxu0 0.0
        %2411 = vmatpush1.msra.mxu0 0.0
        %2412 = vmatprep.subr.mxu0 0.0
        %2413 = vmatpush1.msra.mxu0 0.0
        %2414 = vmatprep.subr.mxu0 0.0
        %2415 = vmatpush1.msra.mxu0 0.0
        %2416 = vmatprep.subr.mxu0 0.0
        %2417 = vmatpush1.msra.mxu0 0.0
        %2418 = vmatprep.subr.mxu0 0.0
        %2419 = vmatpush1.msra.mxu0 0.0
        %2420 = vmatprep.subr.mxu0 0.0
        %2421 = vmatpush1.msra.mxu0 0.0
        %2422 = vmatprep.subr.mxu0 0.0
        %2423 = vmatpush1.msra.mxu0 0.0
        %2424 = vmatprep.subr.mxu0 0.0
        %2425 = vmatpush1.msra.mxu0 0.0
        %2426 = vmatprep.subr.mxu0 0.0
        %2427 = vmatpush1.msra.mxu0 0.0
        %2428 = vmatprep.subr.mxu0 0.0
        %2429 = vmatpush1.msra.mxu0 0.0
        %2430 = vmatprep.mubr.f32.mxu0 0.0
        %2431 = vmatmul.mubr.f32.gmra.mrb[0].mxu0 %v2327
        %v2432 = vpop.f32.mrb[0].mxu0
        %v2433 = vadd.f32 %v2364, %v2432
        %v2434 = vpop.f32.mrb[0].mxu0
        %2435 = vmatprep.mubr.f32.mxu0 0.0
        %2436 = vmatmul.mubr.f32.gmra.mrb[0].mxu0 %v2328
        %v2437 = vpop.f32.mrb[0].mxu0
        %v2438 = vadd.f32 %v2364, %v2437
        %v2439 = vpop.f32.mrb[0].mxu0
        %2440 = vmatprep.mubr.f32.mxu0 0.0
        %2441 = vmatmul.mubr.f32.gmra.mrb[0].mxu0 %v2329
        %v2442 = vpop.f32.mrb[0].mxu0
        %v2443 = vadd.f32 %v2364, %v2442
        %v2444 = vpop.f32.mrb[0].mxu0
        %2445 = vmatprep.mubr.f32.mxu0 0.0
        %2446 = vmatmul.mubr.f32.gmra.mrb[0].mxu0 %v2330
        %v2447 = vpop.f32.mrb[0].mxu0
        %v2448 = vadd.f32 %v2364, %v2447
        %v2449 = vpop.f32.mrb[0].mxu0
        %2450 = vmatprep.mubr.f32.mxu0 0.0
        %2451 = vmatmul.mubr.f32.gmra.mrb[0].mxu0 %v2331
        %v2452 = vpop.f32.mrb[0].mxu0
        %v2453 = vadd.f32 %v2364, %v2452
        %v2454 = vpop.f32.mrb[0].mxu0
        %2455 = vmatprep.mubr.f32.mxu0 0.0
        %2456 = vmatmul.mubr.f32.gmra.mrb[0].mxu0 %v2332
        %v2457 = vpop.f32.mrb[0].mxu0
        %v2458 = vadd.f32 %v2364, %v2457
        %v2459 = vpop.f32.mrb[0].mxu0
        %2460 = vmatprep.mubr.f32.mxu0 0.0
        %2461 = vmatmul.mubr.f32.gmra.mrb[0].mxu0 %v2333
        %v2462 = vpop.f32.mrb[0].mxu0
        %v2463 = vadd.f32 %v2364, %v2462
        %v2464 = vpop.f32.mrb[0].mxu0
        %2465 = vmatprep.mubr.f32.mxu0 0.0
        %2466 = vmatmul.mubr.f32.gmra.mrb[0].mxu0 %v2334
        %v2467 = vpop.f32.mrb[0].mxu0
        %v2468 = vadd.f32 %v2364, %v2467
        %v2469 = vpop.f32.mrb[0].mxu0
        %2470 = vmatprep.mubr.f32.mxu0 0.0
        %2471 = vmatmul.mubr.f32.gmra.mrb[0].mxu0 %v2335
        %v2472 = vpop.f32.mrb[0].mxu0
        %v2473 = vadd.f32 %v2364, %v2472
        %v2474 = vpop.f32.mrb[0].mxu0
        %2475 = vmatprep.mubr.f32.mxu0 0.0
        %2476 = vmatmul.mubr.f32.gmra.mrb[0].mxu0 %v2336
        %v2477 = vpop.f32.mrb[0].mxu0
        %v2478 = vadd.f32 %v2364, %v2477
        %v2479 = vpop.f32.mrb[0].mxu0
        %2480 = vmatprep.mubr.f32.mxu0 0.0
        %2481 = vmatmul.mubr.f32.gmra.mrb[0].mxu0 %v2337
        %v2482 = vpop.f32.mrb[0].mxu0
        %v2483 = vadd.f32 %v2364, %v2482
        %v2484 = vpop.f32.mrb[0].mxu0
        %2485 = vmatprep.mubr.f32.mxu0 0.0
        %2486 = vmatmul.mubr.f32.gmra.mrb[0].mxu0 %v2338
        %v2487 = vpop.f32.mrb[0].mxu0
        %v2488 = vadd.f32 %v2364, %v2487
        %v2489 = vpop.f32.mrb[0].mxu0
        %2490 = vmatprep.mubr.f32.mxu0 0.0
        %2491 = vmatmul.mubr.f32.gmra.mrb[0].mxu0 %v2339
        %v2492 = vpop.f32.mrb[0].mxu0
        %v2493 = vadd.f32 %v2364, %v2492
        %v2494 = vpop.f32.mrb[0].mxu0
        %2495 = vmatprep.mubr.f32.mxu0 0.0
        %2496 = vmatmul.mubr.f32.gmra.mrb[0].mxu0 %v2340
        %v2497 = vpop.f32.mrb[0].mxu0
        %v2498 = vadd.f32 %v2364, %v2497
        %v2499 = vpop.f32.mrb[0].mxu0
        %2500 = vmatprep.mubr.f32.mxu0 0.0
        %2501 = vmatmul.mubr.f32.gmra.mrb[0].mxu0 %v2341
        %v2502 = vpop.f32.mrb[0].mxu0
        %v2503 = vadd.f32 %v2364, %v2502
        %v2504 = vpop.f32.mrb[0].mxu0
        %2505 = vmatprep.mubr.f32.mxu0 0.0
        %2506 = vmatmul.mubr.f32.gmra.mrb[0].mxu0 %v2342
        %v2507 = vpop.f32.mrb[0].mxu0
        %v2508 = vadd.f32 %v2364, %v2507
        %v2509 = vpop.f32.mrb[0].mxu0
        %2510 = vdwg.mxu0
        %v2511 = vmax.f32 %v2433, 0.0
        %v2512 = vmax.f32 %v2438, 0.0
        %v2513 = vmax.f32 %v2443, 0.0
        %v2514 = vmax.f32 %v2448, 0.0
        %v2515 = vmax.f32 %v2453, 0.0
        %v2516 = vmax.f32 %v2458, 0.0
        %v2517 = vmax.f32 %v2463, 0.0
        %v2518 = vmax.f32 %v2468, 0.0
        %v2519 = vmax.f32 %v2473, 0.0
        %v2520 = vmax.f32 %v2478, 0.0
        %v2521 = vmax.f32 %v2483, 0.0
        %v2522 = vmax.f32 %v2488, 0.0
        %v2523 = vmax.f32 %v2493, 0.0
        %v2524 = vmax.f32 %v2498, 0.0
        %v2525 = vmax.f32 %v2503, 0.0
        %v2526 = vmax.f32 %v2508, 0.0
        %v2527 = vld [vmem:[%s15] sm:$0xff]
        %v2528 = vld [vmem:[%s15 + $0x8] sm:$0xff]
        %v2529 = vld [vmem:[%s15 + $0x10] sm:$0xff]
        %v2530 = vld [vmem:[%s15 + $0x18] sm:$0xff]
        %v2531 = vld [vmem:[%s16] sm:$0x1]
        %v2533 = vlaneseq
        %v2534 = vshrl.u32 %v2533, 7
        %v2535 = vsub.s32 0, %v2534
        %v2536 = vrot.slane %v2531, %v2535
        %v2539 = vsel %vm2085, %v2511, 0
        %v2542 = vsel %vm2085, %v2512, 0
        %v2545 = vsel %vm2085, %v2513, 0
        %v2548 = vsel %vm2085, %v2514, 0
        %v2551 = vsel %vm2085, %v2515, 0
        %v2554 = vsel %vm2085, %v2516, 0
        %v2557 = vsel %vm2085, %v2517, 0
        %v2560 = vsel %vm2085, %v2518, 0
        %v2563 = vsel %vm2085, %v2519, 0
        %v2566 = vsel %vm2085, %v2520, 0
        %v2569 = vsel %vm2085, %v2521, 0
        %v2572 = vsel %vm2085, %v2522, 0
        %v2575 = vsel %vm2085, %v2523, 0
        %v2578 = vsel %vm2085, %v2524, 0
        %v2581 = vsel %vm2085, %v2525, 0
        %v2584 = vsel %vm2085, %v2526, 0
        %2586 = vmatprep.subr.mxu0 0.0
        %2587 = vmatpush1.msra.mxu0 %v2527
        %2588 = vmatprep.subr.mxu0 0.0
        %2589 = vmatpush1.msra.mxu0 %v2528
        %2590 = vmatprep.subr.mxu0 0.0
        %2591 = vmatpush1.msra.mxu0 %v2529
        %2592 = vmatprep.subr.mxu0 0.0
        %2593 = vmatpush1.msra.mxu0 %v2530
        %2594 = vmatprep.subr.mxu0 0.0
        %2595 = vmatpush1.msra.mxu0 0.0
        %2596 = vmatprep.subr.mxu0 0.0
        %2597 = vmatpush1.msra.mxu0 0.0
        %2598 = vmatprep.subr.mxu0 0.0
        %2599 = vmatpush1.msra.mxu0 0.0
        %2600 = vmatprep.subr.mxu0 0.0
        %2601 = vmatpush1.msra.mxu0 0.0
        %2602 = vmatprep.subr.mxu0 0.0
        %2603 = vmatpush1.msra.mxu0 0.0
        %2604 = vmatprep.subr.mxu0 0.0
        %2605 = vmatpush1.msra.mxu0 0.0
        %2606 = vmatprep.subr.mxu0 0.0
        %2607 = vmatpush1.msra.mxu0 0.0
        %2608 = vmatprep.subr.mxu0 0.0
        %2609 = vmatpush1.msra.mxu0 0.0
        %2610 = vmatprep.subr.mxu0 0.0
        %2611 = vmatpush1.msra.mxu0 0.0
        %2612 = vmatprep.subr.mxu0 0.0
        %2613 = vmatpush1.msra.mxu0 0.0
        %2614 = vmatprep.subr.mxu0 0.0
        %2615 = vmatpush1.msra.mxu0 0.0
        %2616 = vmatprep.subr.mxu0 0.0
        %2617 = vmatpush1.msra.mxu0 0.0
        %2618 = vmatprep.subr.mxu0 0.0
        %2619 = vmatpush1.msra.mxu0 0.0
        %2620 = vmatprep.subr.mxu0 0.0
        %2621 = vmatpush1.msra.mxu0 0.0
        %2622 = vmatprep.subr.mxu0 0.0
        %2623 = vmatpush1.msra.mxu0 0.0
        %2624 = vmatprep.subr.mxu0 0.0
        %2625 = vmatpush1.msra.mxu0 0.0
        %2626 = vmatprep.subr.mxu0 0.0
        %2627 = vmatpush1.msra.mxu0 0.0
        %2628 = vmatprep.subr.mxu0 0.0
        %2629 = vmatpush1.msra.mxu0 0.0
        %2630 = vmatprep.subr.mxu0 0.0
        %2631 = vmatpush1.msra.mxu0 0.0
        %2632 = vmatprep.subr.mxu0 0.0
        %2633 = vmatpush1.msra.mxu0 0.0
        %2634 = vmatprep.subr.mxu0 0.0
        %2635 = vmatpush1.msra.mxu0 0.0
        %2636 = vmatprep.subr.mxu0 0.0
        %2637 = vmatpush1.msra.mxu0 0.0
        %2638 = vmatprep.subr.mxu0 0.0
        %2639 = vmatpush1.msra.mxu0 0.0
        %2640 = vmatprep.subr.mxu0 0.0
        %2641 = vmatpush1.msra.mxu0 0.0
        %2642 = vmatprep.subr.mxu0 0.0
        %2643 = vmatpush1.msra.mxu0 0.0
        %2644 = vmatprep.subr.mxu0 0.0
        %2645 = vmatpush1.msra.mxu0 0.0
        %2646 = vmatprep.subr.mxu0 0.0
        %2647 = vmatpush1.msra.mxu0 0.0
        %2648 = vmatprep.subr.mxu0 0.0
        %2649 = vmatpush1.msra.mxu0 0.0
        %2650 = vmatprep.mubr.f32.mxu0 0.0
        %2651 = vmatmul.mubr.f32.gmra.mrb[0].mxu0 %v2539
        %v2652 = vpop.f32.mrb[0].mxu0
        %v2653 = vadd.f32 %v2536, %v2652
        %v2654 = vpop.f32.mrb[0].mxu0
        %2655 = vmatprep.mubr.f32.mxu0 0.0
        %2656 = vmatmul.mubr.f32.gmra.mrb[0].mxu0 %v2542
        %v2657 = vpop.f32.mrb[0].mxu0
        %v2658 = vadd.f32 %v2536, %v2657
        %v2659 = vpop.f32.mrb[0].mxu0
        %2660 = vmatprep.mubr.f32.mxu0 0.0
        %2661 = vmatmul.mubr.f32.gmra.mrb[0].mxu0 %v2545
        %v2662 = vpop.f32.mrb[0].mxu0
        %v2663 = vadd.f32 %v2536, %v2662
        %v2664 = vpop.f32.mrb[0].mxu0
        %2665 = vmatprep.mubr.f32.mxu0 0.0
        %2666 = vmatmul.mubr.f32.gmra.mrb[0].mxu0 %v2548
        %v2667 = vpop.f32.mrb[0].mxu0
        %v2668 = vadd.f32 %v2536, %v2667
        %v2669 = vpop.f32.mrb[0].mxu0
        %2670 = vmatprep.mubr.f32.mxu0 0.0
        %2671 = vmatmul.mubr.f32.gmra.mrb[0].mxu0 %v2551
        %v2672 = vpop.f32.mrb[0].mxu0
        %v2673 = vadd.f32 %v2536, %v2672
        %v2674 = vpop.f32.mrb[0].mxu0
        %2675 = vmatprep.mubr.f32.mxu0 0.0
        %2676 = vmatmul.mubr.f32.gmra.mrb[0].mxu0 %v2554
        %v2677 = vpop.f32.mrb[0].mxu0
        %v2678 = vadd.f32 %v2536, %v2677
        %v2679 = vpop.f32.mrb[0].mxu0
        %2680 = vmatprep.mubr.f32.mxu0 0.0
        %2681 = vmatmul.mubr.f32.gmra.mrb[0].mxu0 %v2557
        %v2682 = vpop.f32.mrb[0].mxu0
        %v2683 = vadd.f32 %v2536, %v2682
        %v2684 = vpop.f32.mrb[0].mxu0
        %2685 = vmatprep.mubr.f32.mxu0 0.0
        %2686 = vmatmul.mubr.f32.gmra.mrb[0].mxu0 %v2560
        %v2687 = vpop.f32.mrb[0].mxu0
        %v2688 = vadd.f32 %v2536, %v2687
        %v2689 = vpop.f32.mrb[0].mxu0
        %2690 = vmatprep.mubr.f32.mxu0 0.0
        %2691 = vmatmul.mubr.f32.gmra.mrb[0].mxu0 %v2563
        %v2692 = vpop.f32.mrb[0].mxu0
        %v2693 = vadd.f32 %v2536, %v2692
        %v2694 = vpop.f32.mrb[0].mxu0
        %2695 = vmatprep.mubr.f32.mxu0 0.0
        %2696 = vmatmul.mubr.f32.gmra.mrb[0].mxu0 %v2566
        %v2697 = vpop.f32.mrb[0].mxu0
        %v2698 = vadd.f32 %v2536, %v2697
        %v2699 = vpop.f32.mrb[0].mxu0
        %2700 = vmatprep.mubr.f32.mxu0 0.0
        %2701 = vmatmul.mubr.f32.gmra.mrb[0].mxu0 %v2569
        %v2702 = vpop.f32.mrb[0].mxu0
        %v2703 = vadd.f32 %v2536, %v2702
        %v2704 = vpop.f32.mrb[0].mxu0
        %2705 = vmatprep.mubr.f32.mxu0 0.0
        %2706 = vmatmul.mubr.f32.gmra.mrb[0].mxu0 %v2572
        %v2707 = vpop.f32.mrb[0].mxu0
        %v2708 = vadd.f32 %v2536, %v2707
        %v2709 = vpop.f32.mrb[0].mxu0
        %2710 = vmatprep.mubr.f32.mxu0 0.0
        %2711 = vmatmul.mubr.f32.gmra.mrb[0].mxu0 %v2575
        %v2712 = vpop.f32.mrb[0].mxu0
        %v2713 = vadd.f32 %v2536, %v2712
        %v2714 = vpop.f32.mrb[0].mxu0
        %2715 = vmatprep.mubr.f32.mxu0 0.0
        %2716 = vmatmul.mubr.f32.gmra.mrb[0].mxu0 %v2578
        %v2717 = vpop.f32.mrb[0].mxu0
        %v2718 = vadd.f32 %v2536, %v2717
        %v2719 = vpop.f32.mrb[0].mxu0
        %2720 = vmatprep.mubr.f32.mxu0 0.0
        %2721 = vmatmul.mubr.f32.gmra.mrb[0].mxu0 %v2581
        %v2722 = vpop.f32.mrb[0].mxu0
        %v2723 = vadd.f32 %v2536, %v2722
        %v2724 = vpop.f32.mrb[0].mxu0
        %2725 = vmatprep.mubr.f32.mxu0 0.0
        %2726 = vmatmul.mubr.f32.gmra.mrb[0].mxu0 %v2584
        %v2727 = vpop.f32.mrb[0].mxu0
        %v2728 = vadd.f32 %v2536, %v2727
        %v2729 = vpop.f32.mrb[0].mxu0
        %2730 = vdwg.mxu0
        %v2731 = vmax.f32 %v2653, 0.0
        %v2732 = vmax.f32 %v2658, 0.0
        %v2733 = vmax.f32 %v2663, 0.0
        %v2734 = vmax.f32 %v2668, 0.0
        %v2735 = vmax.f32 %v2673, 0.0
        %v2736 = vmax.f32 %v2678, 0.0
        %v2737 = vmax.f32 %v2683, 0.0
        %v2738 = vmax.f32 %v2688, 0.0
        %v2739 = vmax.f32 %v2693, 0.0
        %v2740 = vmax.f32 %v2698, 0.0
        %v2741 = vmax.f32 %v2703, 0.0
        %v2742 = vmax.f32 %v2708, 0.0
        %v2743 = vmax.f32 %v2713, 0.0
        %v2744 = vmax.f32 %v2718, 0.0
        %v2745 = vmax.f32 %v2723, 0.0
        %v2746 = vmax.f32 %v2728, 0.0
        %v2747 = vld [vmem:[#allocation16] sm:$0xff]
        %v2748 = vld [vmem:[#allocation16 + $0x8] sm:$0xff]
        %v2749 = vld [vmem:[#allocation16 + $0x10] sm:$0xff]
        %v2750 = vld [vmem:[#allocation16 + $0x18] sm:$0xff]
        %v2751 = vld [vmem:[#allocation16 + $0x20] sm:$0xff]
        %v2752 = vld [vmem:[#allocation16 + $0x28] sm:$0xff]
        %v2753 = vld [vmem:[#allocation16 + $0x30] sm:$0xff]
        %v2754 = vld [vmem:[#allocation16 + $0x38] sm:$0xff]
        %v2755 = vld [vmem:[#allocation16 + $0x40] sm:$0xff]
        %v2756 = vld [vmem:[#allocation16 + $0x48] sm:$0xff]
        %v2757 = vld [vmem:[#allocation16 + $0x50] sm:$0xff]
        %v2758 = vld [vmem:[#allocation16 + $0x58] sm:$0xff]
        %v2759 = vld [vmem:[#allocation16 + $0x60] sm:$0xff]
        %v2760 = vld [vmem:[#allocation16 + $0x68] sm:$0xff]
        %v2761 = vld [vmem:[#allocation16 + $0x70] sm:$0xff]
        %v2762 = vld [vmem:[#allocation16 + $0x78] sm:$0xff]
        %v2763 = vld [vmem:[#allocation16 + $0x80] sm:$0xff]
        %v2764 = vld [vmem:[#allocation16 + $0x88] sm:$0xff]
        %v2765 = vld [vmem:[#allocation16 + $0x90] sm:$0xff]
        %v2766 = vld [vmem:[#allocation16 + $0x98] sm:$0xff]
        %v2767 = vld [vmem:[#allocation16 + $0xa0] sm:$0xff]
        %v2768 = vld [vmem:[#allocation16 + $0xa8] sm:$0xff]
        %v2769 = vld [vmem:[#allocation16 + $0xb0] sm:$0xff]
        %v2770 = vld [vmem:[#allocation16 + $0xb8] sm:$0xff]
        %v2771 = vld [vmem:[#allocation16 + $0xc0] sm:$0xff]
        %v2772 = vld [vmem:[#allocation16 + $0xc8] sm:$0xff]
        %v2773 = vld [vmem:[#allocation16 + $0xd0] sm:$0xff]
        %v2774 = vld [vmem:[#allocation16 + $0xd8] sm:$0xff]
        %v2775 = vld [vmem:[#allocation16 + $0xe0] sm:$0xff]
        %v2776 = vld [vmem:[#allocation16 + $0xe8] sm:$0xff]
        %v2777 = vld [vmem:[#allocation16 + $0xf0] sm:$0xff]
        %v2778 = vld [vmem:[#allocation16 + $0xf8] sm:$0xff]
        %v2779 = vld [vmem:[#allocation16 + $0x100] sm:$0xff]
        %v2780 = vld [vmem:[#allocation16 + $0x108] sm:$0xff]
        %v2781 = vld [vmem:[#allocation16 + $0x110] sm:$0xff]
        %v2782 = vld [vmem:[#allocation16 + $0x118] sm:$0xff]
        %v2783 = vld [vmem:[#allocation16 + $0x120] sm:$0xff]
        %v2784 = vld [vmem:[#allocation16 + $0x128] sm:$0xff]
        %v2785 = vld [vmem:[#allocation16 + $0x130] sm:$0xff]
        %v2786 = vld [vmem:[#allocation16 + $0x138] sm:$0xff]
        %v2787 = vld [vmem:[#allocation16 + $0x140] sm:$0xff]
        %v2788 = vld [vmem:[#allocation16 + $0x148] sm:$0xff]
        %v2789 = vld [vmem:[#allocation16 + $0x150] sm:$0xff]
        %v2790 = vld [vmem:[#allocation16 + $0x158] sm:$0xff]
        %v2791 = vld [vmem:[#allocation16 + $0x160] sm:$0xff]
        %v2792 = vld [vmem:[#allocation16 + $0x168] sm:$0xff]
        %v2793 = vld [vmem:[#allocation16 + $0x170] sm:$0xff]
        %v2794 = vld [vmem:[#allocation16 + $0x178] sm:$0xff]
        %v2795 = vld [vmem:[#allocation16 + $0x180] sm:$0xff]
        %v2796 = vld [vmem:[#allocation16 + $0x188] sm:$0xff]
        %v2797 = vld [vmem:[#allocation16 + $0x190] sm:$0xff]
        %v2798 = vld [vmem:[#allocation16 + $0x198] sm:$0xff]
        %v2799 = vld [vmem:[#allocation16 + $0x1a0] sm:$0xff]
        %v2800 = vld [vmem:[#allocation16 + $0x1a8] sm:$0xff]
        %v2801 = vld [vmem:[#allocation16 + $0x1b0] sm:$0xff]
        %v2802 = vld [vmem:[#allocation16 + $0x1b8] sm:$0xff]
        %v2803 = vld [vmem:[#allocation16 + $0x1c0] sm:$0xff]
        %v2804 = vld [vmem:[#allocation16 + $0x1c8] sm:$0xff]
        %v2805 = vld [vmem:[#allocation16 + $0x1d0] sm:$0xff]
        %v2806 = vld [vmem:[#allocation16 + $0x1d8] sm:$0xff]
        %v2807 = vld [vmem:[#allocation16 + $0x1e0] sm:$0xff]
        %v2808 = vld [vmem:[#allocation16 + $0x1e8] sm:$0xff]
        %v2809 = vld [vmem:[#allocation16 + $0x1f0] sm:$0xff]
        %v2810 = vld [vmem:[#allocation16 + $0x1f8] sm:$0xff]
        %v2811 = vld [vmem:[%s18] sm:$0xf]
        %v2813 = vlaneseq
        %v2814 = vshrl.u32 %v2813, 7
        %v2815 = vsub.s32 0, %v2814
        %v2816 = vrot.slane %v2811, %v2815
        %v2817 = vlaneseq
        %v2818 = vshrl.u32 %v2817, 7
        %v2819 = vsub.s32 1, %v2818
        %v2820 = vrot.slane %v2811, %v2819
        %v2821 = vlaneseq
        %v2822 = vshrl.u32 %v2821, 7
        %v2823 = vsub.s32 2, %v2822
        %v2824 = vrot.slane %v2811, %v2823
        %v2825 = vlaneseq
        %v2826 = vshrl.u32 %v2825, 7
        %v2827 = vsub.s32 3, %v2826
        %v2828 = vrot.slane %v2811, %v2827
        %2833 = vmatprep.subr.mxu0 %v2748
        %2834 = vmatpush1.msra.mxu0 %v2747
        %2835 = vmatprep.subr.mxu0 %v2752
        %2836 = vmatpush1.msra.mxu0 %v2751
        %2837 = vmatprep.subr.mxu0 %v2756
        %2838 = vmatpush1.msra.mxu0 %v2755
        %2839 = vmatprep.subr.mxu0 %v2760
        %2840 = vmatpush1.msra.mxu0 %v2759
        %2841 = vmatprep.subr.mxu0 %v2764
        %2842 = vmatpush1.msra.mxu0 %v2763
        %2843 = vmatprep.subr.mxu0 %v2768
        %2844 = vmatpush1.msra.mxu0 %v2767
        %2845 = vmatprep.subr.mxu0 %v2772
        %2846 = vmatpush1.msra.mxu0 %v2771
        %2847 = vmatprep.subr.mxu0 %v2776
        %2848 = vmatpush1.msra.mxu0 %v2775
        %2849 = vmatprep.subr.mxu0 %v2780
        %2850 = vmatpush1.msra.mxu0 %v2779
        %2851 = vmatprep.subr.mxu0 %v2784
        %2852 = vmatpush1.msra.mxu0 %v2783
        %2853 = vmatprep.subr.mxu0 %v2788
        %2854 = vmatpush1.msra.mxu0 %v2787
        %2855 = vmatprep.subr.mxu0 %v2792
        %2856 = vmatpush1.msra.mxu0 %v2791
        %2857 = vmatprep.subr.mxu0 %v2796
        %2858 = vmatpush1.msra.mxu0 %v2795
        %2859 = vmatprep.subr.mxu0 %v2800
        %2860 = vmatpush1.msra.mxu0 %v2799
        %2861 = vmatprep.subr.mxu0 %v2804
        %2862 = vmatpush1.msra.mxu0 %v2803
        %2863 = vmatprep.subr.mxu0 %v2808
        %2864 = vmatpush1.msra.mxu0 %v2807
        %2865 = vmatprep.subr.mxu0 0.0
        %2866 = vmatpush1.msra.mxu0 0.0
        %2867 = vmatprep.subr.mxu0 0.0
        %2868 = vmatpush1.msra.mxu0 0.0
        %2869 = vmatprep.subr.mxu0 0.0
        %2870 = vmatpush1.msra.mxu0 0.0
        %2871 = vmatprep.subr.mxu0 0.0
        %2872 = vmatpush1.msra.mxu0 0.0
        %2873 = vmatprep.subr.mxu0 0.0
        %2874 = vmatpush1.msra.mxu0 0.0
        %2875 = vmatprep.subr.mxu0 0.0
        %2876 = vmatpush1.msra.mxu0 0.0
        %2877 = vmatprep.subr.mxu0 0.0
        %2878 = vmatpush1.msra.mxu0 0.0
        %2879 = vmatprep.subr.mxu0 0.0
        %2880 = vmatpush1.msra.mxu0 0.0
        %2881 = vmatprep.subr.mxu0 0.0
        %2882 = vmatpush1.msra.mxu0 0.0
        %2883 = vmatprep.subr.mxu0 0.0
        %2884 = vmatpush1.msra.mxu0 0.0
        %2885 = vmatprep.subr.mxu0 0.0
        %2886 = vmatpush1.msra.mxu0 0.0
        %2887 = vmatprep.subr.mxu0 0.0
        %2888 = vmatpush1.msra.mxu0 0.0
        %2889 = vmatprep.subr.mxu0 0.0
        %2890 = vmatpush1.msra.mxu0 0.0
        %2891 = vmatprep.subr.mxu0 0.0
        %2892 = vmatpush1.msra.mxu0 0.0
        %2893 = vmatprep.subr.mxu0 0.0
        %2894 = vmatpush1.msra.mxu0 0.0
        %2895 = vmatprep.subr.mxu0 0.0
        %2896 = vmatpush1.msra.mxu0 0.0
        %2897 = vmatprep.mubr.f32.mxu0 0.0
        %2898 = vmatmul.mubr.f32.gmra.mrb[0].mxu0 %v2731
        %v2899 = vpop.f32.mrb[0].mxu0
        %v2900 = vadd.f32 %v2816, %v2899
        %v2901 = vpop.f32.mrb[0].mxu0
        %v2902 = vadd.f32 %v2820, %v2901
        %2903 = vmatprep.mubr.f32.mxu0 0.0
        %2904 = vmatmul.mubr.f32.gmra.mrb[0].mxu0 %v2732
        %v2905 = vpop.f32.mrb[0].mxu0
        %v2906 = vadd.f32 %v2816, %v2905
        %v2907 = vpop.f32.mrb[0].mxu0
        %v2908 = vadd.f32 %v2820, %v2907
        %2909 = vmatprep.mubr.f32.mxu0 0.0
        %2910 = vmatmul.mubr.f32.gmra.mrb[0].mxu0 %v2733
        %v2911 = vpop.f32.mrb[0].mxu0
        %v2912 = vadd.f32 %v2816, %v2911
        %v2913 = vpop.f32.mrb[0].mxu0
        %v2914 = vadd.f32 %v2820, %v2913
        %2915 = vmatprep.mubr.f32.mxu0 0.0
        %2916 = vmatmul.mubr.f32.gmra.mrb[0].mxu0 %v2734
        %v2917 = vpop.f32.mrb[0].mxu0
        %v2918 = vadd.f32 %v2816, %v2917
        %v2919 = vpop.f32.mrb[0].mxu0
        %v2920 = vadd.f32 %v2820, %v2919
        %2921 = vmatprep.mubr.f32.mxu0 0.0
        %2922 = vmatmul.mubr.f32.gmra.mrb[0].mxu0 %v2735
        %v2923 = vpop.f32.mrb[0].mxu0
        %v2924 = vadd.f32 %v2816, %v2923
        %v2925 = vpop.f32.mrb[0].mxu0
        %v2926 = vadd.f32 %v2820, %v2925
        %2927 = vmatprep.mubr.f32.mxu0 0.0
        %2928 = vmatmul.mubr.f32.gmra.mrb[0].mxu0 %v2736
        %v2929 = vpop.f32.mrb[0].mxu0
        %v2930 = vadd.f32 %v2816, %v2929
        %v2931 = vpop.f32.mrb[0].mxu0
        %v2932 = vadd.f32 %v2820, %v2931
        %2933 = vmatprep.mubr.f32.mxu0 0.0
        %2934 = vmatmul.mubr.f32.gmra.mrb[0].mxu0 %v2737
        %v2935 = vpop.f32.mrb[0].mxu0
        %v2936 = vadd.f32 %v2816, %v2935
        %v2937 = vpop.f32.mrb[0].mxu0
        %v2938 = vadd.f32 %v2820, %v2937
        %2939 = vmatprep.mubr.f32.mxu0 0.0
        %2940 = vmatmul.mubr.f32.gmra.mrb[0].mxu0 %v2738
        %v2941 = vpop.f32.mrb[0].mxu0
        %v2942 = vadd.f32 %v2816, %v2941
        %v2943 = vpop.f32.mrb[0].mxu0
        %v2944 = vadd.f32 %v2820, %v2943
        %2945 = vmatprep.mubr.f32.mxu0 0.0
        %2946 = vmatmul.mubr.f32.gmra.mrb[0].mxu0 %v2739
        %v2947 = vpop.f32.mrb[0].mxu0
        %v2948 = vadd.f32 %v2816, %v2947
        %v2949 = vpop.f32.mrb[0].mxu0
        %v2950 = vadd.f32 %v2820, %v2949
        %2951 = vmatprep.mubr.f32.mxu0 0.0
        %2952 = vmatmul.mubr.f32.gmra.mrb[0].mxu0 %v2740
        %v2953 = vpop.f32.mrb[0].mxu0
        %v2954 = vadd.f32 %v2816, %v2953
        %v2955 = vpop.f32.mrb[0].mxu0
        %v2956 = vadd.f32 %v2820, %v2955
        %2957 = vmatprep.mubr.f32.mxu0 0.0
        %2958 = vmatmul.mubr.f32.gmra.mrb[0].mxu0 %v2741
        %v2959 = vpop.f32.mrb[0].mxu0
        %v2960 = vadd.f32 %v2816, %v2959
        %v2961 = vpop.f32.mrb[0].mxu0
        %v2962 = vadd.f32 %v2820, %v2961
        %2963 = vmatprep.mubr.f32.mxu0 0.0
        %2964 = vmatmul.mubr.f32.gmra.mrb[0].mxu0 %v2742
        %v2965 = vpop.f32.mrb[0].mxu0
        %v2966 = vadd.f32 %v2816, %v2965
        %v2967 = vpop.f32.mrb[0].mxu0
        %v2968 = vadd.f32 %v2820, %v2967
        %2969 = vmatprep.mubr.f32.mxu0 0.0
        %2970 = vmatmul.mubr.f32.gmra.mrb[0].mxu0 %v2743
        %v2971 = vpop.f32.mrb[0].mxu0
        %v2972 = vadd.f32 %v2816, %v2971
        %v2973 = vpop.f32.mrb[0].mxu0
        %v2974 = vadd.f32 %v2820, %v2973
        %2975 = vmatprep.mubr.f32.mxu0 0.0
        %2976 = vmatmul.mubr.f32.gmra.mrb[0].mxu0 %v2744
        %v2977 = vpop.f32.mrb[0].mxu0
        %v2978 = vadd.f32 %v2816, %v2977
        %v2979 = vpop.f32.mrb[0].mxu0
        %v2980 = vadd.f32 %v2820, %v2979
        %2981 = vmatprep.mubr.f32.mxu0 0.0
        %2982 = vmatmul.mubr.f32.gmra.mrb[0].mxu0 %v2745
        %v2983 = vpop.f32.mrb[0].mxu0
        %v2984 = vadd.f32 %v2816, %v2983
        %v2985 = vpop.f32.mrb[0].mxu0
        %v2986 = vadd.f32 %v2820, %v2985
        %2987 = vmatprep.mubr.f32.mxu0 0.0
        %2988 = vmatmul.mubr.f32.gmra.mrb[0].mxu0 %v2746
        %v2989 = vpop.f32.mrb[0].mxu0
        %v2990 = vadd.f32 %v2816, %v2989
        %v2991 = vpop.f32.mrb[0].mxu0
        %v2992 = vadd.f32 %v2820, %v2991
        %2993 = vdwg.mxu0
        %2994 = vmatprep.subr.mxu0 %v2750
        %2995 = vmatpush1.msra.mxu0 %v2749
        %2996 = vmatprep.subr.mxu0 %v2754
        %2997 = vmatpush1.msra.mxu0 %v2753
        %2998 = vmatprep.subr.mxu0 %v2758
        %2999 = vmatpush1.msra.mxu0 %v2757
        %3000 = vmatprep.subr.mxu0 %v2762
        %3001 = vmatpush1.msra.mxu0 %v2761
        %3002 = vmatprep.subr.mxu0 %v2766
        %3003 = vmatpush1.msra.mxu0 %v2765
        %3004 = vmatprep.subr.mxu0 %v2770
        %3005 = vmatpush1.msra.mxu0 %v2769
        %3006 = vmatprep.subr.mxu0 %v2774
        %3007 = vmatpush1.msra.mxu0 %v2773
        %3008 = vmatprep.subr.mxu0 %v2778
        %3009 = vmatpush1.msra.mxu0 %v2777
        %3010 = vmatprep.subr.mxu0 %v2782
        %3011 = vmatpush1.msra.mxu0 %v2781
        %3012 = vmatprep.subr.mxu0 %v2786
        %3013 = vmatpush1.msra.mxu0 %v2785
        %3014 = vmatprep.subr.mxu0 %v2790
        %3015 = vmatpush1.msra.mxu0 %v2789
        %3016 = vmatprep.subr.mxu0 %v2794
        %3017 = vmatpush1.msra.mxu0 %v2793
        %3018 = vmatprep.subr.mxu0 %v2798
        %3019 = vmatpush1.msra.mxu0 %v2797
        %3020 = vmatprep.subr.mxu0 %v2802
        %3021 = vmatpush1.msra.mxu0 %v2801
        %3022 = vmatprep.subr.mxu0 %v2806
        %3023 = vmatpush1.msra.mxu0 %v2805
        %3024 = vmatprep.subr.mxu0 %v2810
        %3025 = vmatpush1.msra.mxu0 %v2809
        %3026 = vmatprep.subr.mxu0 0.0
        %3027 = vmatpush1.msra.mxu0 0.0
        %3028 = vmatprep.subr.mxu0 0.0
        %3029 = vmatpush1.msra.mxu0 0.0
        %3030 = vmatprep.subr.mxu0 0.0
        %3031 = vmatpush1.msra.mxu0 0.0
        %3032 = vmatprep.subr.mxu0 0.0
        %3033 = vmatpush1.msra.mxu0 0.0
        %3034 = vmatprep.subr.mxu0 0.0
        %3035 = vmatpush1.msra.mxu0 0.0
        %3036 = vmatprep.subr.mxu0 0.0
        %3037 = vmatpush1.msra.mxu0 0.0
        %3038 = vmatprep.subr.mxu0 0.0
        %3039 = vmatpush1.msra.mxu0 0.0
        %3040 = vmatprep.subr.mxu0 0.0
        %3041 = vmatpush1.msra.mxu0 0.0
        %3042 = vmatprep.subr.mxu0 0.0
        %3043 = vmatpush1.msra.mxu0 0.0
        %3044 = vmatprep.subr.mxu0 0.0
        %3045 = vmatpush1.msra.mxu0 0.0
        %3046 = vmatprep.subr.mxu0 0.0
        %3047 = vmatpush1.msra.mxu0 0.0
        %3048 = vmatprep.subr.mxu0 0.0
        %3049 = vmatpush1.msra.mxu0 0.0
        %3050 = vmatprep.subr.mxu0 0.0
        %3051 = vmatpush1.msra.mxu0 0.0
        %3052 = vmatprep.subr.mxu0 0.0
        %3053 = vmatpush1.msra.mxu0 0.0
        %3054 = vmatprep.subr.mxu0 0.0
        %3055 = vmatpush1.msra.mxu0 0.0
        %3056 = vmatprep.subr.mxu0 0.0
        %3057 = vmatpush1.msra.mxu0 0.0
        %3058 = vmatprep.mubr.f32.mxu0 0.0
        %3059 = vmatmul.mubr.f32.gmra.mrb[0].mxu0 %v2731
        %v3060 = vpop.f32.mrb[0].mxu0
        %v3061 = vadd.f32 %v2824, %v3060
        %v3062 = vpop.f32.mrb[0].mxu0
        %v3063 = vadd.f32 %v2828, %v3062
        %3064 = vmatprep.mubr.f32.mxu0 0.0
        %3065 = vmatmul.mubr.f32.gmra.mrb[0].mxu0 %v2732
        %v3066 = vpop.f32.mrb[0].mxu0
        %v3067 = vadd.f32 %v2824, %v3066
        %v3068 = vpop.f32.mrb[0].mxu0
        %v3069 = vadd.f32 %v2828, %v3068
        %3070 = vmatprep.mubr.f32.mxu0 0.0
        %3071 = vmatmul.mubr.f32.gmra.mrb[0].mxu0 %v2733
        %v3072 = vpop.f32.mrb[0].mxu0
        %v3073 = vadd.f32 %v2824, %v3072
        %v3074 = vpop.f32.mrb[0].mxu0
        %v3075 = vadd.f32 %v2828, %v3074
        %3076 = vmatprep.mubr.f32.mxu0 0.0
        %3077 = vmatmul.mubr.f32.gmra.mrb[0].mxu0 %v2734
        %v3078 = vpop.f32.mrb[0].mxu0
        %v3079 = vadd.f32 %v2824, %v3078
        %v3080 = vpop.f32.mrb[0].mxu0
        %v3081 = vadd.f32 %v2828, %v3080
        %3082 = vmatprep.mubr.f32.mxu0 0.0
        %3083 = vmatmul.mubr.f32.gmra.mrb[0].mxu0 %v2735
        %v3084 = vpop.f32.mrb[0].mxu0
        %v3085 = vadd.f32 %v2824, %v3084
        %v3086 = vpop.f32.mrb[0].mxu0
        %v3087 = vadd.f32 %v2828, %v3086
        %3088 = vmatprep.mubr.f32.mxu0 0.0
        %3089 = vmatmul.mubr.f32.gmra.mrb[0].mxu0 %v2736
        %v3090 = vpop.f32.mrb[0].mxu0
        %v3091 = vadd.f32 %v2824, %v3090
        %v3092 = vpop.f32.mrb[0].mxu0
        %v3093 = vadd.f32 %v2828, %v3092
        %3094 = vmatprep.mubr.f32.mxu0 0.0
        %3095 = vmatmul.mubr.f32.gmra.mrb[0].mxu0 %v2737
        %v3096 = vpop.f32.mrb[0].mxu0
        %v3097 = vadd.f32 %v2824, %v3096
        %v3098 = vpop.f32.mrb[0].mxu0
        %v3099 = vadd.f32 %v2828, %v3098
        %3100 = vmatprep.mubr.f32.mxu0 0.0
        %3101 = vmatmul.mubr.f32.gmra.mrb[0].mxu0 %v2738
        %v3102 = vpop.f32.mrb[0].mxu0
        %v3103 = vadd.f32 %v2824, %v3102
        %v3104 = vpop.f32.mrb[0].mxu0
        %v3105 = vadd.f32 %v2828, %v3104
        %3106 = vmatprep.mubr.f32.mxu0 0.0
        %3107 = vmatmul.mubr.f32.gmra.mrb[0].mxu0 %v2739
        %v3108 = vpop.f32.mrb[0].mxu0
        %v3109 = vadd.f32 %v2824, %v3108
        %v3110 = vpop.f32.mrb[0].mxu0
        %v3111 = vadd.f32 %v2828, %v3110
        %3112 = vmatprep.mubr.f32.mxu0 0.0
        %3113 = vmatmul.mubr.f32.gmra.mrb[0].mxu0 %v2740
        %v3114 = vpop.f32.mrb[0].mxu0
        %v3115 = vadd.f32 %v2824, %v3114
        %v3116 = vpop.f32.mrb[0].mxu0
        %v3117 = vadd.f32 %v2828, %v3116
        %3118 = vmatprep.mubr.f32.mxu0 0.0
        %3119 = vmatmul.mubr.f32.gmra.mrb[0].mxu0 %v2741
        %v3120 = vpop.f32.mrb[0].mxu0
        %v3121 = vadd.f32 %v2824, %v3120
        %v3122 = vpop.f32.mrb[0].mxu0
        %v3123 = vadd.f32 %v2828, %v3122
        %3124 = vmatprep.mubr.f32.mxu0 0.0
        %3125 = vmatmul.mubr.f32.gmra.mrb[0].mxu0 %v2742
        %v3126 = vpop.f32.mrb[0].mxu0
        %v3127 = vadd.f32 %v2824, %v3126
        %v3128 = vpop.f32.mrb[0].mxu0
        %v3129 = vadd.f32 %v2828, %v3128
        %3130 = vmatprep.mubr.f32.mxu0 0.0
        %3131 = vmatmul.mubr.f32.gmra.mrb[0].mxu0 %v2743
        %v3132 = vpop.f32.mrb[0].mxu0
        %v3133 = vadd.f32 %v2824, %v3132
        %v3134 = vpop.f32.mrb[0].mxu0
        %v3135 = vadd.f32 %v2828, %v3134
        %3136 = vmatprep.mubr.f32.mxu0 0.0
        %3137 = vmatmul.mubr.f32.gmra.mrb[0].mxu0 %v2744
        %v3138 = vpop.f32.mrb[0].mxu0
        %v3139 = vadd.f32 %v2824, %v3138
        %v3140 = vpop.f32.mrb[0].mxu0
        %v3141 = vadd.f32 %v2828, %v3140
        %3142 = vmatprep.mubr.f32.mxu0 0.0
        %3143 = vmatmul.mubr.f32.gmra.mrb[0].mxu0 %v2745
        %v3144 = vpop.f32.mrb[0].mxu0
        %v3145 = vadd.f32 %v2824, %v3144
        %v3146 = vpop.f32.mrb[0].mxu0
        %v3147 = vadd.f32 %v2828, %v3146
        %3148 = vmatprep.mubr.f32.mxu0 0.0
        %3149 = vmatmul.mubr.f32.gmra.mrb[0].mxu0 %v2746
        %v3150 = vpop.f32.mrb[0].mxu0
        %v3151 = vadd.f32 %v2824, %v3150
        %v3152 = vpop.f32.mrb[0].mxu0
        %v3153 = vadd.f32 %v2828, %v3152
        %3154 = vdwg.mxu0
        %v3155 = vmax.f32 %v2900, 0.0
        %v3156 = vmax.f32 %v2902, 0.0
        %v3157 = vmax.f32 %v3061, 0.0
        %v3158 = vmax.f32 %v3063, 0.0
        %v3159 = vmax.f32 %v2906, 0.0
        %v3160 = vmax.f32 %v2908, 0.0
        %v3161 = vmax.f32 %v3067, 0.0
        %v3162 = vmax.f32 %v3069, 0.0
        %v3163 = vmax.f32 %v2912, 0.0
        %v3164 = vmax.f32 %v2914, 0.0
        %v3165 = vmax.f32 %v3073, 0.0
        %v3166 = vmax.f32 %v3075, 0.0
        %v3167 = vmax.f32 %v2918, 0.0
        %v3168 = vmax.f32 %v2920, 0.0
        %v3169 = vmax.f32 %v3079, 0.0
        %v3170 = vmax.f32 %v3081, 0.0
        %v3171 = vmax.f32 %v2924, 0.0
        %v3172 = vmax.f32 %v2926, 0.0
        %v3173 = vmax.f32 %v3085, 0.0
        %v3174 = vmax.f32 %v3087, 0.0
        %v3175 = vmax.f32 %v2930, 0.0
        %v3176 = vmax.f32 %v2932, 0.0
        %v3177 = vmax.f32 %v3091, 0.0
        %v3178 = vmax.f32 %v3093, 0.0
        %v3179 = vmax.f32 %v2936, 0.0
        %v3180 = vmax.f32 %v2938, 0.0
        %v3181 = vmax.f32 %v3097, 0.0
        %v3182 = vmax.f32 %v3099, 0.0
        %v3183 = vmax.f32 %v2942, 0.0
        %v3184 = vmax.f32 %v2944, 0.0
        %v3185 = vmax.f32 %v3103, 0.0
        %v3186 = vmax.f32 %v3105, 0.0
        %v3187 = vmax.f32 %v2948, 0.0
        %v3188 = vmax.f32 %v2950, 0.0
        %v3189 = vmax.f32 %v3109, 0.0
        %v3190 = vmax.f32 %v3111, 0.0
        %v3191 = vmax.f32 %v2954, 0.0
        %v3192 = vmax.f32 %v2956, 0.0
        %v3193 = vmax.f32 %v3115, 0.0
        %v3194 = vmax.f32 %v3117, 0.0
        %v3195 = vmax.f32 %v2960, 0.0
        %v3196 = vmax.f32 %v2962, 0.0
        %v3197 = vmax.f32 %v3121, 0.0
        %v3198 = vmax.f32 %v3123, 0.0
        %v3199 = vmax.f32 %v2966, 0.0
        %v3200 = vmax.f32 %v2968, 0.0
        %v3201 = vmax.f32 %v3127, 0.0
        %v3202 = vmax.f32 %v3129, 0.0
        %v3203 = vmax.f32 %v2972, 0.0
        %v3204 = vmax.f32 %v2974, 0.0
        %v3205 = vmax.f32 %v3133, 0.0
        %v3206 = vmax.f32 %v3135, 0.0
        %v3207 = vmax.f32 %v2978, 0.0
        %v3208 = vmax.f32 %v2980, 0.0
        %v3209 = vmax.f32 %v3139, 0.0
        %v3210 = vmax.f32 %v3141, 0.0
        %v3211 = vmax.f32 %v2984, 0.0
        %v3212 = vmax.f32 %v2986, 0.0
        %v3213 = vmax.f32 %v3145, 0.0
        %v3214 = vmax.f32 %v3147, 0.0
        %v3215 = vmax.f32 %v2990, 0.0
        %v3216 = vmax.f32 %v2992, 0.0
        %v3217 = vmax.f32 %v3151, 0.0
        %v3218 = vmax.f32 %v3153, 0.0
        %v3219 = vld [vmem:[#allocation17] sm:$0xff]
        %v3220 = vld [vmem:[#allocation17 + $0x8] sm:$0xff]
        %v3221 = vld [vmem:[#allocation17 + $0x10] sm:$0xff]
        %v3222 = vld [vmem:[#allocation17 + $0x18] sm:$0xff]
        %v3223 = vld [vmem:[#allocation17 + $0x20] sm:$0xff]
        %v3224 = vld [vmem:[#allocation17 + $0x28] sm:$0xff]
        %v3225 = vld [vmem:[#allocation17 + $0x30] sm:$0xff]
        %v3226 = vld [vmem:[#allocation17 + $0x38] sm:$0xff]
        %v3227 = vld [vmem:[#allocation17 + $0x40] sm:$0xff]
        %v3228 = vld [vmem:[#allocation17 + $0x48] sm:$0xff]
        %v3229 = vld [vmem:[#allocation17 + $0x50] sm:$0xff]
        %v3230 = vld [vmem:[#allocation17 + $0x58] sm:$0xff]
        %v3231 = vld [vmem:[#allocation17 + $0x60] sm:$0xff]
        %v3232 = vld [vmem:[#allocation17 + $0x68] sm:$0xff]
        %v3233 = vld [vmem:[#allocation17 + $0x70] sm:$0xff]
        %v3234 = vld [vmem:[#allocation17 + $0x78] sm:$0xff]
        %v3235 = vld [vmem:[#allocation17 + $0x80] sm:$0xff]
        %v3236 = vld [vmem:[#allocation17 + $0x88] sm:$0xff]
        %v3237 = vld [vmem:[#allocation17 + $0x90] sm:$0xff]
        %v3238 = vld [vmem:[#allocation17 + $0x98] sm:$0xff]
        %v3239 = vld [vmem:[#allocation17 + $0xa0] sm:$0xff]
        %v3240 = vld [vmem:[#allocation17 + $0xa8] sm:$0xff]
        %v3241 = vld [vmem:[#allocation17 + $0xb0] sm:$0xff]
        %v3242 = vld [vmem:[#allocation17 + $0xb8] sm:$0xff]
        %v3243 = vld [vmem:[#allocation17 + $0xc0] sm:$0xff]
        %v3244 = vld [vmem:[#allocation17 + $0xc8] sm:$0xff]
        %v3245 = vld [vmem:[#allocation17 + $0xd0] sm:$0xff]
        %v3246 = vld [vmem:[#allocation17 + $0xd8] sm:$0xff]
        %v3247 = vld [vmem:[#allocation17 + $0xe0] sm:$0xff]
        %v3248 = vld [vmem:[#allocation17 + $0xe8] sm:$0xff]
        %v3249 = vld [vmem:[#allocation17 + $0xf0] sm:$0xff]
        %v3250 = vld [vmem:[#allocation17 + $0xf8] sm:$0xff]
        %v3251 = vld [vmem:[#allocation17 + $0x100] sm:$0xff]
        %v3252 = vld [vmem:[#allocation17 + $0x108] sm:$0xff]
        %v3253 = vld [vmem:[#allocation17 + $0x110] sm:$0xff]
        %v3254 = vld [vmem:[#allocation17 + $0x118] sm:$0xff]
        %v3255 = vld [vmem:[#allocation17 + $0x120] sm:$0xff]
        %v3256 = vld [vmem:[#allocation17 + $0x128] sm:$0xff]
        %v3257 = vld [vmem:[#allocation17 + $0x130] sm:$0xff]
        %v3258 = vld [vmem:[#allocation17 + $0x138] sm:$0xff]
        %v3259 = vld [vmem:[#allocation17 + $0x140] sm:$0xff]
        %v3260 = vld [vmem:[#allocation17 + $0x148] sm:$0xff]
        %v3261 = vld [vmem:[#allocation17 + $0x150] sm:$0xff]
        %v3262 = vld [vmem:[#allocation17 + $0x158] sm:$0xff]
        %v3263 = vld [vmem:[#allocation17 + $0x160] sm:$0xff]
        %v3264 = vld [vmem:[#allocation17 + $0x168] sm:$0xff]
        %v3265 = vld [vmem:[#allocation17 + $0x170] sm:$0xff]
        %v3266 = vld [vmem:[#allocation17 + $0x178] sm:$0xff]
        %v3267 = vld [vmem:[#allocation17 + $0x180] sm:$0xff]
        %v3268 = vld [vmem:[#allocation17 + $0x188] sm:$0xff]
        %v3269 = vld [vmem:[#allocation17 + $0x190] sm:$0xff]
        %v3270 = vld [vmem:[#allocation17 + $0x198] sm:$0xff]
        %v3271 = vld [vmem:[#allocation17 + $0x1a0] sm:$0xff]
        %v3272 = vld [vmem:[#allocation17 + $0x1a8] sm:$0xff]
        %v3273 = vld [vmem:[#allocation17 + $0x1b0] sm:$0xff]
        %v3274 = vld [vmem:[#allocation17 + $0x1b8] sm:$0xff]
        %v3275 = vld [vmem:[#allocation17 + $0x1c0] sm:$0xff]
        %v3276 = vld [vmem:[#allocation17 + $0x1c8] sm:$0xff]
        %v3277 = vld [vmem:[#allocation17 + $0x1d0] sm:$0xff]
        %v3278 = vld [vmem:[#allocation17 + $0x1d8] sm:$0xff]
        %v3279 = vld [vmem:[#allocation17 + $0x1e0] sm:$0xff]
        %v3280 = vld [vmem:[#allocation17 + $0x1e8] sm:$0xff]
        %v3281 = vld [vmem:[#allocation17 + $0x1f0] sm:$0xff]
        %v3282 = vld [vmem:[#allocation17 + $0x1f8] sm:$0xff]
        %v3283 = vld [vmem:[#allocation17 + $0x200] sm:$0xff]
        %v3284 = vld [vmem:[#allocation17 + $0x208] sm:$0xff]
        %v3285 = vld [vmem:[#allocation17 + $0x210] sm:$0xff]
        %v3286 = vld [vmem:[#allocation17 + $0x218] sm:$0xff]
        %v3287 = vld [vmem:[#allocation17 + $0x220] sm:$0xff]
        %v3288 = vld [vmem:[#allocation17 + $0x228] sm:$0xff]
        %v3289 = vld [vmem:[#allocation17 + $0x230] sm:$0xff]
        %v3290 = vld [vmem:[#allocation17 + $0x238] sm:$0xff]
        %v3291 = vld [vmem:[#allocation17 + $0x240] sm:$0xff]
        %v3292 = vld [vmem:[#allocation17 + $0x248] sm:$0xff]
        %v3293 = vld [vmem:[#allocation17 + $0x250] sm:$0xff]
        %v3294 = vld [vmem:[#allocation17 + $0x258] sm:$0xff]
        %v3295 = vld [vmem:[#allocation17 + $0x260] sm:$0xff]
        %v3296 = vld [vmem:[#allocation17 + $0x268] sm:$0xff]
        %v3297 = vld [vmem:[#allocation17 + $0x270] sm:$0xff]
        %v3298 = vld [vmem:[#allocation17 + $0x278] sm:$0xff]
        %v3299 = vld [vmem:[#allocation17 + $0x280] sm:$0xff]
        %v3300 = vld [vmem:[#allocation17 + $0x288] sm:$0xff]
        %v3301 = vld [vmem:[#allocation17 + $0x290] sm:$0xff]
        %v3302 = vld [vmem:[#allocation17 + $0x298] sm:$0xff]
        %v3303 = vld [vmem:[#allocation17 + $0x2a0] sm:$0xff]
        %v3304 = vld [vmem:[#allocation17 + $0x2a8] sm:$0xff]
        %v3305 = vld [vmem:[#allocation17 + $0x2b0] sm:$0xff]
        %v3306 = vld [vmem:[#allocation17 + $0x2b8] sm:$0xff]
        %v3307 = vld [vmem:[#allocation17 + $0x2c0] sm:$0xff]
        %v3308 = vld [vmem:[#allocation17 + $0x2c8] sm:$0xff]
        %v3309 = vld [vmem:[#allocation17 + $0x2d0] sm:$0xff]
        %v3310 = vld [vmem:[#allocation17 + $0x2d8] sm:$0xff]
        %v3311 = vld [vmem:[#allocation17 + $0x2e0] sm:$0xff]
        %v3312 = vld [vmem:[#allocation17 + $0x2e8] sm:$0xff]
        %v3313 = vld [vmem:[#allocation17 + $0x2f0] sm:$0xff]
        %v3314 = vld [vmem:[#allocation17 + $0x2f8] sm:$0xff]
        %v3315 = vld [vmem:[#allocation17 + $0x300] sm:$0xff]
        %v3316 = vld [vmem:[#allocation17 + $0x308] sm:$0xff]
        %v3317 = vld [vmem:[#allocation17 + $0x310] sm:$0xff]
        %v3318 = vld [vmem:[#allocation17 + $0x318] sm:$0xff]
        %v3319 = vld [vmem:[#allocation17 + $0x320] sm:$0xff]
        %v3320 = vld [vmem:[#allocation17 + $0x328] sm:$0xff]
        %v3321 = vld [vmem:[#allocation17 + $0x330] sm:$0xff]
        %v3322 = vld [vmem:[#allocation17 + $0x338] sm:$0xff]
        %v3323 = vld [vmem:[#allocation17 + $0x340] sm:$0xff]
        %v3324 = vld [vmem:[#allocation17 + $0x348] sm:$0xff]
        %v3325 = vld [vmem:[#allocation17 + $0x350] sm:$0xff]
        %v3326 = vld [vmem:[#allocation17 + $0x358] sm:$0xff]
        %v3327 = vld [vmem:[#allocation17 + $0x360] sm:$0xff]
        %v3328 = vld [vmem:[#allocation17 + $0x368] sm:$0xff]
        %v3329 = vld [vmem:[#allocation17 + $0x370] sm:$0xff]
        %v3330 = vld [vmem:[#allocation17 + $0x378] sm:$0xff]
        %v3331 = vld [vmem:[#allocation17 + $0x380] sm:$0xff]
        %v3332 = vld [vmem:[#allocation17 + $0x388] sm:$0xff]
        %v3333 = vld [vmem:[#allocation17 + $0x390] sm:$0xff]
        %v3334 = vld [vmem:[#allocation17 + $0x398] sm:$0xff]
        %v3335 = vld [vmem:[#allocation17 + $0x3a0] sm:$0xff]
        %v3336 = vld [vmem:[#allocation17 + $0x3a8] sm:$0xff]
        %v3337 = vld [vmem:[#allocation17 + $0x3b0] sm:$0xff]
        %v3338 = vld [vmem:[#allocation17 + $0x3b8] sm:$0xff]
        %v3339 = vld [vmem:[#allocation17 + $0x3c0] sm:$0xff]
        %v3340 = vld [vmem:[#allocation17 + $0x3c8] sm:$0xff]
        %v3341 = vld [vmem:[#allocation17 + $0x3d0] sm:$0xff]
        %v3342 = vld [vmem:[#allocation17 + $0x3d8] sm:$0xff]
        %v3343 = vld [vmem:[#allocation17 + $0x3e0] sm:$0xff]
        %v3344 = vld [vmem:[#allocation17 + $0x3e8] sm:$0xff]
        %v3345 = vld [vmem:[#allocation17 + $0x3f0] sm:$0xff]
        %v3346 = vld [vmem:[#allocation17 + $0x3f8] sm:$0xff]
        %v3347 = vld [vmem:[%s20] sm:$0x3]
        %v3349 = vlaneseq
        %v3350 = vshrl.u32 %v3349, 7
        %v3351 = vsub.s32 0, %v3350
        %v3352 = vrot.slane %v3347, %v3351
        %v3353 = vlaneseq
        %v3354 = vshrl.u32 %v3353, 7
        %v3355 = vsub.s32 1, %v3354
        %v3356 = vrot.slane %v3347, %v3355
        %3359 = vmatprep.subr.mxu0 %v3220
        %3360 = vmatpush1.msra.mxu0 %v3219
        %3361 = vmatprep.subr.mxu0 %v3222
        %3362 = vmatpush1.msra.mxu0 %v3221
        %3363 = vmatprep.subr.mxu0 %v3224
        %3364 = vmatpush1.msra.mxu0 %v3223
        %3365 = vmatprep.subr.mxu0 %v3226
        %3366 = vmatpush1.msra.mxu0 %v3225
        %3367 = vmatprep.subr.mxu0 %v3228
        %3368 = vmatpush1.msra.mxu0 %v3227
        %3369 = vmatprep.subr.mxu0 %v3230
        %3370 = vmatpush1.msra.mxu0 %v3229
        %3371 = vmatprep.subr.mxu0 %v3232
        %3372 = vmatpush1.msra.mxu0 %v3231
        %3373 = vmatprep.subr.mxu0 %v3234
        %3374 = vmatpush1.msra.mxu0 %v3233
        %3375 = vmatprep.subr.mxu0 %v3236
        %3376 = vmatpush1.msra.mxu0 %v3235
        %3377 = vmatprep.subr.mxu0 %v3238
        %3378 = vmatpush1.msra.mxu0 %v3237
        %3379 = vmatprep.subr.mxu0 %v3240
        %3380 = vmatpush1.msra.mxu0 %v3239
        %3381 = vmatprep.subr.mxu0 %v3242
        %3382 = vmatpush1.msra.mxu0 %v3241
        %3383 = vmatprep.subr.mxu0 %v3244
        %3384 = vmatpush1.msra.mxu0 %v3243
        %3385 = vmatprep.subr.mxu0 %v3246
        %3386 = vmatpush1.msra.mxu0 %v3245
        %3387 = vmatprep.subr.mxu0 %v3248
        %3388 = vmatpush1.msra.mxu0 %v3247
        %3389 = vmatprep.subr.mxu0 %v3250
        %3390 = vmatpush1.msra.mxu0 %v3249
        %3391 = vmatprep.subr.mxu0 %v3252
        %3392 = vmatpush1.msra.mxu0 %v3251
        %3393 = vmatprep.subr.mxu0 %v3254
        %3394 = vmatpush1.msra.mxu0 %v3253
        %3395 = vmatprep.subr.mxu0 %v3256
        %3396 = vmatpush1.msra.mxu0 %v3255
        %3397 = vmatprep.subr.mxu0 %v3258
        %3398 = vmatpush1.msra.mxu0 %v3257
        %3399 = vmatprep.subr.mxu0 %v3260
        %3400 = vmatpush1.msra.mxu0 %v3259
        %3401 = vmatprep.subr.mxu0 %v3262
        %3402 = vmatpush1.msra.mxu0 %v3261
        %3403 = vmatprep.subr.mxu0 %v3264
        %3404 = vmatpush1.msra.mxu0 %v3263
        %3405 = vmatprep.subr.mxu0 %v3266
        %3406 = vmatpush1.msra.mxu0 %v3265
        %3407 = vmatprep.subr.mxu0 %v3268
        %3408 = vmatpush1.msra.mxu0 %v3267
        %3409 = vmatprep.subr.mxu0 %v3270
        %3410 = vmatpush1.msra.mxu0 %v3269
        %3411 = vmatprep.subr.mxu0 %v3272
        %3412 = vmatpush1.msra.mxu0 %v3271
        %3413 = vmatprep.subr.mxu0 %v3274
        %3414 = vmatpush1.msra.mxu0 %v3273
        %3415 = vmatprep.subr.mxu0 %v3276
        %3416 = vmatpush1.msra.mxu0 %v3275
        %3417 = vmatprep.subr.mxu0 %v3278
        %3418 = vmatpush1.msra.mxu0 %v3277
        %3419 = vmatprep.subr.mxu0 %v3280
        %3420 = vmatpush1.msra.mxu0 %v3279
        %3421 = vmatprep.subr.mxu0 %v3282
        %3422 = vmatpush1.msra.mxu0 %v3281
        %3423 = vmatprep.mubr.f32.mxu0 %v3156
        %3424 = vmatmul.mubr.f32.gmra.mrb[0].mxu0 %v3155
        %v3425 = vpop.f32.mrb[0].mxu0
        %v3426 = vadd.f32 %v3352, %v3425
        %v3427 = vpop.f32.mrb[0].mxu0
        %v3428 = vadd.f32 %v3356, %v3427
        %3429 = vmatprep.mubr.f32.mxu0 %v3160
        %3430 = vmatmul.mubr.f32.gmra.mrb[0].mxu0 %v3159
        %v3431 = vpop.f32.mrb[0].mxu0
        %v3432 = vadd.f32 %v3352, %v3431
        %v3433 = vpop.f32.mrb[0].mxu0
        %v3434 = vadd.f32 %v3356, %v3433
        %3435 = vmatprep.mubr.f32.mxu0 %v3164
        %3436 = vmatmul.mubr.f32.gmra.mrb[0].mxu0 %v3163
        %v3437 = vpop.f32.mrb[0].mxu0
        %v3438 = vadd.f32 %v3352, %v3437
        %v3439 = vpop.f32.mrb[0].mxu0
        %v3440 = vadd.f32 %v3356, %v3439
        %3441 = vmatprep.mubr.f32.mxu0 %v3168
        %3442 = vmatmul.mubr.f32.gmra.mrb[0].mxu0 %v3167
        %v3443 = vpop.f32.mrb[0].mxu0
        %v3444 = vadd.f32 %v3352, %v3443
        %v3445 = vpop.f32.mrb[0].mxu0
        %v3446 = vadd.f32 %v3356, %v3445
        %3447 = vmatprep.mubr.f32.mxu0 %v3172
        %3448 = vmatmul.mubr.f32.gmra.mrb[0].mxu0 %v3171
        %v3449 = vpop.f32.mrb[0].mxu0
        %v3450 = vadd.f32 %v3352, %v3449
        %v3451 = vpop.f32.mrb[0].mxu0
        %v3452 = vadd.f32 %v3356, %v3451
        %3453 = vmatprep.mubr.f32.mxu0 %v3176
        %3454 = vmatmul.mubr.f32.gmra.mrb[0].mxu0 %v3175
        %v3455 = vpop.f32.mrb[0].mxu0
        %v3456 = vadd.f32 %v3352, %v3455
        %v3457 = vpop.f32.mrb[0].mxu0
        %v3458 = vadd.f32 %v3356, %v3457
        %3459 = vmatprep.mubr.f32.mxu0 %v3180
        %3460 = vmatmul.mubr.f32.gmra.mrb[0].mxu0 %v3179
        %v3461 = vpop.f32.mrb[0].mxu0
        %v3462 = vadd.f32 %v3352, %v3461
        %v3463 = vpop.f32.mrb[0].mxu0
        %v3464 = vadd.f32 %v3356, %v3463
        %3465 = vmatprep.mubr.f32.mxu0 %v3184
        %3466 = vmatmul.mubr.f32.gmra.mrb[0].mxu0 %v3183
        %v3467 = vpop.f32.mrb[0].mxu0
        %v3468 = vadd.f32 %v3352, %v3467
        %v3469 = vpop.f32.mrb[0].mxu0
        %v3470 = vadd.f32 %v3356, %v3469
        %3471 = vmatprep.mubr.f32.mxu0 %v3188
        %3472 = vmatmul.mubr.f32.gmra.mrb[0].mxu0 %v3187
        %v3473 = vpop.f32.mrb[0].mxu0
        %v3474 = vadd.f32 %v3352, %v3473
        %v3475 = vpop.f32.mrb[0].mxu0
        %v3476 = vadd.f32 %v3356, %v3475
        %3477 = vmatprep.mubr.f32.mxu0 %v3192
        %3478 = vmatmul.mubr.f32.gmra.mrb[0].mxu0 %v3191
        %v3479 = vpop.f32.mrb[0].mxu0
        %v3480 = vadd.f32 %v3352, %v3479
        %v3481 = vpop.f32.mrb[0].mxu0
        %v3482 = vadd.f32 %v3356, %v3481
        %3483 = vmatprep.mubr.f32.mxu0 %v3196
        %3484 = vmatmul.mubr.f32.gmra.mrb[0].mxu0 %v3195
        %v3485 = vpop.f32.mrb[0].mxu0
        %v3486 = vadd.f32 %v3352, %v3485
        %v3487 = vpop.f32.mrb[0].mxu0
        %v3488 = vadd.f32 %v3356, %v3487
        %3489 = vmatprep.mubr.f32.mxu0 %v3200
        %3490 = vmatmul.mubr.f32.gmra.mrb[0].mxu0 %v3199
        %v3491 = vpop.f32.mrb[0].mxu0
        %v3492 = vadd.f32 %v3352, %v3491
        %v3493 = vpop.f32.mrb[0].mxu0
        %v3494 = vadd.f32 %v3356, %v3493
        %3495 = vmatprep.mubr.f32.mxu0 %v3204
        %3496 = vmatmul.mubr.f32.gmra.mrb[0].mxu0 %v3203
        %v3497 = vpop.f32.mrb[0].mxu0
        %v3498 = vadd.f32 %v3352, %v3497
        %v3499 = vpop.f32.mrb[0].mxu0
        %v3500 = vadd.f32 %v3356, %v3499
        %3501 = vmatprep.mubr.f32.mxu0 %v3208
        %3502 = vmatmul.mubr.f32.gmra.mrb[0].mxu0 %v3207
        %v3503 = vpop.f32.mrb[0].mxu0
        %v3504 = vadd.f32 %v3352, %v3503
        %v3505 = vpop.f32.mrb[0].mxu0
        %v3506 = vadd.f32 %v3356, %v3505
        %3507 = vmatprep.mubr.f32.mxu0 %v3212
        %3508 = vmatmul.mubr.f32.gmra.mrb[0].mxu0 %v3211
        %v3509 = vpop.f32.mrb[0].mxu0
        %v3510 = vadd.f32 %v3352, %v3509
        %v3511 = vpop.f32.mrb[0].mxu0
        %v3512 = vadd.f32 %v3356, %v3511
        %3513 = vmatprep.mubr.f32.mxu0 %v3216
        %3514 = vmatmul.mubr.f32.gmra.mrb[0].mxu0 %v3215
        %v3515 = vpop.f32.mrb[0].mxu0
        %v3516 = vadd.f32 %v3352, %v3515
        %v3517 = vpop.f32.mrb[0].mxu0
        %v3518 = vadd.f32 %v3356, %v3517
        %3519 = vdwg.mxu0
        %3520 = vmatprep.subr.mxu0 %v3284
        %3521 = vmatpush1.msra.mxu0 %v3283
        %3522 = vmatprep.subr.mxu0 %v3286
        %3523 = vmatpush1.msra.mxu0 %v3285
        %3524 = vmatprep.subr.mxu0 %v3288
        %3525 = vmatpush1.msra.mxu0 %v3287
        %3526 = vmatprep.subr.mxu0 %v3290
        %3527 = vmatpush1.msra.mxu0 %v3289
        %3528 = vmatprep.subr.mxu0 %v3292
        %3529 = vmatpush1.msra.mxu0 %v3291
        %3530 = vmatprep.subr.mxu0 %v3294
        %3531 = vmatpush1.msra.mxu0 %v3293
        %3532 = vmatprep.subr.mxu0 %v3296
        %3533 = vmatpush1.msra.mxu0 %v3295
        %3534 = vmatprep.subr.mxu0 %v3298
        %3535 = vmatpush1.msra.mxu0 %v3297
        %3536 = vmatprep.subr.mxu0 %v3300
        %3537 = vmatpush1.msra.mxu0 %v3299
        %3538 = vmatprep.subr.mxu0 %v3302
        %3539 = vmatpush1.msra.mxu0 %v3301
        %3540 = vmatprep.subr.mxu0 %v3304
        %3541 = vmatpush1.msra.mxu0 %v3303
        %3542 = vmatprep.subr.mxu0 %v3306
        %3543 = vmatpush1.msra.mxu0 %v3305
        %3544 = vmatprep.subr.mxu0 %v3308
        %3545 = vmatpush1.msra.mxu0 %v3307
        %3546 = vmatprep.subr.mxu0 %v3310
        %3547 = vmatpush1.msra.mxu0 %v3309
        %3548 = vmatprep.subr.mxu0 %v3312
        %3549 = vmatpush1.msra.mxu0 %v3311
        %3550 = vmatprep.subr.mxu0 %v3314
        %3551 = vmatpush1.msra.mxu0 %v3313
        %3552 = vmatprep.subr.mxu0 %v3316
        %3553 = vmatpush1.msra.mxu0 %v3315
        %3554 = vmatprep.subr.mxu0 %v3318
        %3555 = vmatpush1.msra.mxu0 %v3317
        %3556 = vmatprep.subr.mxu0 %v3320
        %3557 = vmatpush1.msra.mxu0 %v3319
        %3558 = vmatprep.subr.mxu0 %v3322
        %3559 = vmatpush1.msra.mxu0 %v3321
        %3560 = vmatprep.subr.mxu0 %v3324
        %3561 = vmatpush1.msra.mxu0 %v3323
        %3562 = vmatprep.subr.mxu0 %v3326
        %3563 = vmatpush1.msra.mxu0 %v3325
        %3564 = vmatprep.subr.mxu0 %v3328
        %3565 = vmatpush1.msra.mxu0 %v3327
        %3566 = vmatprep.subr.mxu0 %v3330
        %3567 = vmatpush1.msra.mxu0 %v3329
        %3568 = vmatprep.subr.mxu0 %v3332
        %3569 = vmatpush1.msra.mxu0 %v3331
        %3570 = vmatprep.subr.mxu0 %v3334
        %3571 = vmatpush1.msra.mxu0 %v3333
        %3572 = vmatprep.subr.mxu0 %v3336
        %3573 = vmatpush1.msra.mxu0 %v3335
        %3574 = vmatprep.subr.mxu0 %v3338
        %3575 = vmatpush1.msra.mxu0 %v3337
        %3576 = vmatprep.subr.mxu0 %v3340
        %3577 = vmatpush1.msra.mxu0 %v3339
        %3578 = vmatprep.subr.mxu0 %v3342
        %3579 = vmatpush1.msra.mxu0 %v3341
        %3580 = vmatprep.subr.mxu0 %v3344
        %3581 = vmatpush1.msra.mxu0 %v3343
        %3582 = vmatprep.subr.mxu0 %v3346
        %3583 = vmatpush1.msra.mxu0 %v3345
        %3584 = vmatprep.mubr.f32.mxu0 %v3158
        %3585 = vmatmul.mubr.f32.gmra.mrb[0].mxu0 %v3157
        %v3586 = vpop.f32.mrb[0].mxu0
        %v3587 = vadd.f32 %v3426, %v3586
        %v3588 = vpop.f32.mrb[0].mxu0
        %v3589 = vadd.f32 %v3428, %v3588
        %3590 = vmatprep.mubr.f32.mxu0 %v3162
        %3591 = vmatmul.mubr.f32.gmra.mrb[0].mxu0 %v3161
        %v3592 = vpop.f32.mrb[0].mxu0
        %v3593 = vadd.f32 %v3432, %v3592
        %v3594 = vpop.f32.mrb[0].mxu0
        %v3595 = vadd.f32 %v3434, %v3594
        %3596 = vmatprep.mubr.f32.mxu0 %v3166
        %3597 = vmatmul.mubr.f32.gmra.mrb[0].mxu0 %v3165
        %v3598 = vpop.f32.mrb[0].mxu0
        %v3599 = vadd.f32 %v3438, %v3598
        %v3600 = vpop.f32.mrb[0].mxu0
        %v3601 = vadd.f32 %v3440, %v3600
        %3602 = vmatprep.mubr.f32.mxu0 %v3170
        %3603 = vmatmul.mubr.f32.gmra.mrb[0].mxu0 %v3169
        %v3604 = vpop.f32.mrb[0].mxu0
        %v3605 = vadd.f32 %v3444, %v3604
        %v3606 = vpop.f32.mrb[0].mxu0
        %v3607 = vadd.f32 %v3446, %v3606
        %3608 = vmatprep.mubr.f32.mxu0 %v3174
        %3609 = vmatmul.mubr.f32.gmra.mrb[0].mxu0 %v3173
        %v3610 = vpop.f32.mrb[0].mxu0
        %v3611 = vadd.f32 %v3450, %v3610
        %v3612 = vpop.f32.mrb[0].mxu0
        %v3613 = vadd.f32 %v3452, %v3612
        %3614 = vmatprep.mubr.f32.mxu0 %v3178
        %3615 = vmatmul.mubr.f32.gmra.mrb[0].mxu0 %v3177
        %v3616 = vpop.f32.mrb[0].mxu0
        %v3617 = vadd.f32 %v3456, %v3616
        %v3618 = vpop.f32.mrb[0].mxu0
        %v3619 = vadd.f32 %v3458, %v3618
        %3620 = vmatprep.mubr.f32.mxu0 %v3182
        %3621 = vmatmul.mubr.f32.gmra.mrb[0].mxu0 %v3181
        %v3622 = vpop.f32.mrb[0].mxu0
        %v3623 = vadd.f32 %v3462, %v3622
        %v3624 = vpop.f32.mrb[0].mxu0
        %v3625 = vadd.f32 %v3464, %v3624
        %3626 = vmatprep.mubr.f32.mxu0 %v3186
        %3627 = vmatmul.mubr.f32.gmra.mrb[0].mxu0 %v3185
        %v3628 = vpop.f32.mrb[0].mxu0
        %v3629 = vadd.f32 %v3468, %v3628
        %v3630 = vpop.f32.mrb[0].mxu0
        %v3631 = vadd.f32 %v3470, %v3630
        %3632 = vmatprep.mubr.f32.mxu0 %v3190
        %3633 = vmatmul.mubr.f32.gmra.mrb[0].mxu0 %v3189
        %v3634 = vpop.f32.mrb[0].mxu0
        %v3635 = vadd.f32 %v3474, %v3634
        %v3636 = vpop.f32.mrb[0].mxu0
        %v3637 = vadd.f32 %v3476, %v3636
        %3638 = vmatprep.mubr.f32.mxu0 %v3194
        %3639 = vmatmul.mubr.f32.gmra.mrb[0].mxu0 %v3193
        %v3640 = vpop.f32.mrb[0].mxu0
        %v3641 = vadd.f32 %v3480, %v3640
        %v3642 = vpop.f32.mrb[0].mxu0
        %v3643 = vadd.f32 %v3482, %v3642
        %3644 = vmatprep.mubr.f32.mxu0 %v3198
        %3645 = vmatmul.mubr.f32.gmra.mrb[0].mxu0 %v3197
        %v3646 = vpop.f32.mrb[0].mxu0
        %v3647 = vadd.f32 %v3486, %v3646
        %v3648 = vpop.f32.mrb[0].mxu0
        %v3649 = vadd.f32 %v3488, %v3648
        %3650 = vmatprep.mubr.f32.mxu0 %v3202
        %3651 = vmatmul.mubr.f32.gmra.mrb[0].mxu0 %v3201
        %v3652 = vpop.f32.mrb[0].mxu0
        %v3653 = vadd.f32 %v3492, %v3652
        %v3654 = vpop.f32.mrb[0].mxu0
        %v3655 = vadd.f32 %v3494, %v3654
        %3656 = vmatprep.mubr.f32.mxu0 %v3206
        %3657 = vmatmul.mubr.f32.gmra.mrb[0].mxu0 %v3205
        %v3658 = vpop.f32.mrb[0].mxu0
        %v3659 = vadd.f32 %v3498, %v3658
        %v3660 = vpop.f32.mrb[0].mxu0
        %v3661 = vadd.f32 %v3500, %v3660
        %3662 = vmatprep.mubr.f32.mxu0 %v3210
        %3663 = vmatmul.mubr.f32.gmra.mrb[0].mxu0 %v3209
        %v3664 = vpop.f32.mrb[0].mxu0
        %v3665 = vadd.f32 %v3504, %v3664
        %v3666 = vpop.f32.mrb[0].mxu0
        %v3667 = vadd.f32 %v3506, %v3666
        %3668 = vmatprep.mubr.f32.mxu0 %v3214
        %3669 = vmatmul.mubr.f32.gmra.mrb[0].mxu0 %v3213
        %v3670 = vpop.f32.mrb[0].mxu0
        %v3671 = vadd.f32 %v3510, %v3670
        %v3672 = vpop.f32.mrb[0].mxu0
        %v3673 = vadd.f32 %v3512, %v3672
        %3674 = vmatprep.mubr.f32.mxu0 %v3218
        %3675 = vmatmul.mubr.f32.gmra.mrb[0].mxu0 %v3217
        %v3676 = vpop.f32.mrb[0].mxu0
        %v3677 = vadd.f32 %v3516, %v3676
        %v3678 = vpop.f32.mrb[0].mxu0
        %v3679 = vadd.f32 %v3518, %v3678
        %3680 = vdwg.mxu0
        %v3681 = vxor.u32 %v3587, 2147483648
        %v3682 = vxor.u32 %v3589, 2147483648
        %v3683 = vxor.u32 %v3593, 2147483648
        %v3684 = vxor.u32 %v3595, 2147483648
        %v3685 = vxor.u32 %v3599, 2147483648
        %v3686 = vxor.u32 %v3601, 2147483648
        %v3687 = vxor.u32 %v3605, 2147483648
        %v3688 = vxor.u32 %v3607, 2147483648
        %v3689 = vxor.u32 %v3611, 2147483648
        %v3690 = vxor.u32 %v3613, 2147483648
        %v3691 = vxor.u32 %v3617, 2147483648
        %v3692 = vxor.u32 %v3619, 2147483648
        %v3693 = vxor.u32 %v3623, 2147483648
        %v3694 = vxor.u32 %v3625, 2147483648
        %v3695 = vxor.u32 %v3629, 2147483648
        %v3696 = vxor.u32 %v3631, 2147483648
        %v3697 = vxor.u32 %v3635, 2147483648
        %v3698 = vxor.u32 %v3637, 2147483648
        %v3699 = vxor.u32 %v3641, 2147483648
        %v3700 = vxor.u32 %v3643, 2147483648
        %v3701 = vxor.u32 %v3647, 2147483648
        %v3702 = vxor.u32 %v3649, 2147483648
        %v3703 = vxor.u32 %v3653, 2147483648
        %v3704 = vxor.u32 %v3655, 2147483648
        %v3705 = vxor.u32 %v3659, 2147483648
        %v3706 = vxor.u32 %v3661, 2147483648
        %v3707 = vxor.u32 %v3665, 2147483648
        %v3708 = vxor.u32 %v3667, 2147483648
        %v3709 = vxor.u32 %v3671, 2147483648
        %v3710 = vxor.u32 %v3673, 2147483648
        %v3711 = vxor.u32 %v3677, 2147483648
        %v3712 = vxor.u32 %v3679, 2147483648
        %v3713 = vmul.f32 %v3681, 1.442695
        %v3714 = vpow.pop %v3713
        %v3715 = vmul.f32 %v3682, 1.442695
        %v3716 = vpow.pop %v3715
        %v3717 = vmul.f32 %v3683, 1.442695
        %v3718 = vpow.pop %v3717
        %v3719 = vmul.f32 %v3684, 1.442695
        %v3720 = vpow.pop %v3719
        %v3721 = vmul.f32 %v3685, 1.442695
        %v3722 = vpow.pop %v3721
        %v3723 = vmul.f32 %v3686, 1.442695
        %v3724 = vpow.pop %v3723
        %v3725 = vmul.f32 %v3687, 1.442695
        %v3726 = vpow.pop %v3725
        %v3727 = vmul.f32 %v3688, 1.442695
        %v3728 = vpow.pop %v3727
        %v3729 = vmul.f32 %v3689, 1.442695
        %v3730 = vpow.pop %v3729
        %v3731 = vmul.f32 %v3690, 1.442695
        %v3732 = vpow.pop %v3731
        %v3733 = vmul.f32 %v3691, 1.442695
        %v3734 = vpow.pop %v3733
        %v3735 = vmul.f32 %v3692, 1.442695
        %v3736 = vpow.pop %v3735
        %v3737 = vmul.f32 %v3693, 1.442695
        %v3738 = vpow.pop %v3737
        %v3739 = vmul.f32 %v3694, 1.442695
        %v3740 = vpow.pop %v3739
        %v3741 = vmul.f32 %v3695, 1.442695
        %v3742 = vpow.pop %v3741
        %v3743 = vmul.f32 %v3696, 1.442695
        %v3744 = vpow.pop %v3743
        %v3745 = vmul.f32 %v3697, 1.442695
        %v3746 = vpow.pop %v3745
        %v3747 = vmul.f32 %v3698, 1.442695
        %v3748 = vpow.pop %v3747
        %v3749 = vmul.f32 %v3699, 1.442695
        %v3750 = vpow.pop %v3749
        %v3751 = vmul.f32 %v3700, 1.442695
        %v3752 = vpow.pop %v3751
        %v3753 = vmul.f32 %v3701, 1.442695
        %v3754 = vpow.pop %v3753
        %v3755 = vmul.f32 %v3702, 1.442695
        %v3756 = vpow.pop %v3755
        %v3757 = vmul.f32 %v3703, 1.442695
        %v3758 = vpow.pop %v3757
        %v3759 = vmul.f32 %v3704, 1.442695
        %v3760 = vpow.pop %v3759
        %v3761 = vmul.f32 %v3705, 1.442695
        %v3762 = vpow.pop %v3761
        %v3763 = vmul.f32 %v3706, 1.442695
        %v3764 = vpow.pop %v3763
        %v3765 = vmul.f32 %v3707, 1.442695
        %v3766 = vpow.pop %v3765
        %v3767 = vmul.f32 %v3708, 1.442695
        %v3768 = vpow.pop %v3767
        %v3769 = vmul.f32 %v3709, 1.442695
        %v3770 = vpow.pop %v3769
        %v3771 = vmul.f32 %v3710, 1.442695
        %v3772 = vpow.pop %v3771
        %v3773 = vmul.f32 %v3711, 1.442695
        %v3774 = vpow.pop %v3773
        %v3775 = vmul.f32 %v3712, 1.442695
        %v3776 = vpow.pop %v3775
        %v3777 = vadd.f32 %v3714, 1.0
        %v3778 = vadd.f32 %v3716, 1.0
        %v3779 = vadd.f32 %v3718, 1.0
        %v3780 = vadd.f32 %v3720, 1.0
        %v3781 = vadd.f32 %v3722, 1.0
        %v3782 = vadd.f32 %v3724, 1.0
        %v3783 = vadd.f32 %v3726, 1.0
        %v3784 = vadd.f32 %v3728, 1.0
        %v3785 = vadd.f32 %v3730, 1.0
        %v3786 = vadd.f32 %v3732, 1.0
        %v3787 = vadd.f32 %v3734, 1.0
        %v3788 = vadd.f32 %v3736, 1.0
        %v3789 = vadd.f32 %v3738, 1.0
        %v3790 = vadd.f32 %v3740, 1.0
        %v3791 = vadd.f32 %v3742, 1.0
        %v3792 = vadd.f32 %v3744, 1.0
        %v3793 = vadd.f32 %v3746, 1.0
        %v3794 = vadd.f32 %v3748, 1.0
        %v3795 = vadd.f32 %v3750, 1.0
        %v3796 = vadd.f32 %v3752, 1.0
        %v3797 = vadd.f32 %v3754, 1.0
        %v3798 = vadd.f32 %v3756, 1.0
        %v3799 = vadd.f32 %v3758, 1.0
        %v3800 = vadd.f32 %v3760, 1.0
        %v3801 = vadd.f32 %v3762, 1.0
        %v3802 = vadd.f32 %v3764, 1.0
        %v3803 = vadd.f32 %v3766, 1.0
        %v3804 = vadd.f32 %v3768, 1.0
        %v3805 = vadd.f32 %v3770, 1.0
        %v3806 = vadd.f32 %v3772, 1.0
        %v3807 = vadd.f32 %v3774, 1.0
        %v3808 = vadd.f32 %v3776, 1.0
        %v3809 = vrcp.pop %v3777
        %v3810 = vmul.f32 1.0, %v3809
        %v3811 = vrcp.pop %v3778
        %v3812 = vmul.f32 1.0, %v3811
        %v3813 = vrcp.pop %v3779
        %v3814 = vmul.f32 1.0, %v3813
        %v3815 = vrcp.pop %v3780
        %v3816 = vmul.f32 1.0, %v3815
        %v3817 = vrcp.pop %v3781
        %v3818 = vmul.f32 1.0, %v3817
        %v3819 = vrcp.pop %v3782
        %v3820 = vmul.f32 1.0, %v3819
        %v3821 = vrcp.pop %v3783
        %v3822 = vmul.f32 1.0, %v3821
        %v3823 = vrcp.pop %v3784
        %v3824 = vmul.f32 1.0, %v3823
        %v3825 = vrcp.pop %v3785
        %v3826 = vmul.f32 1.0, %v3825
        %v3827 = vrcp.pop %v3786
        %v3828 = vmul.f32 1.0, %v3827
        %v3829 = vrcp.pop %v3787
        %v3830 = vmul.f32 1.0, %v3829
        %v3831 = vrcp.pop %v3788
        %v3832 = vmul.f32 1.0, %v3831
        %v3833 = vrcp.pop %v3789
        %v3834 = vmul.f32 1.0, %v3833
        %v3835 = vrcp.pop %v3790
        %v3836 = vmul.f32 1.0, %v3835
        %v3837 = vrcp.pop %v3791
        %v3838 = vmul.f32 1.0, %v3837
        %v3839 = vrcp.pop %v3792
        %v3840 = vmul.f32 1.0, %v3839
        %v3841 = vrcp.pop %v3793
        %v3842 = vmul.f32 1.0, %v3841
        %v3843 = vrcp.pop %v3794
        %v3844 = vmul.f32 1.0, %v3843
        %v3845 = vrcp.pop %v3795
        %v3846 = vmul.f32 1.0, %v3845
        %v3847 = vrcp.pop %v3796
        %v3848 = vmul.f32 1.0, %v3847
        %v3849 = vrcp.pop %v3797
        %v3850 = vmul.f32 1.0, %v3849
        %v3851 = vrcp.pop %v3798
        %v3852 = vmul.f32 1.0, %v3851
        %v3853 = vrcp.pop %v3799
        %v3854 = vmul.f32 1.0, %v3853
        %v3855 = vrcp.pop %v3800
        %v3856 = vmul.f32 1.0, %v3855
        %v3857 = vrcp.pop %v3801
        %v3858 = vmul.f32 1.0, %v3857
        %v3859 = vrcp.pop %v3802
        %v3860 = vmul.f32 1.0, %v3859
        %v3861 = vrcp.pop %v3803
        %v3862 = vmul.f32 1.0, %v3861
        %v3863 = vrcp.pop %v3804
        %v3864 = vmul.f32 1.0, %v3863
        %v3865 = vrcp.pop %v3805
        %v3866 = vmul.f32 1.0, %v3865
        %v3867 = vrcp.pop %v3806
        %v3868 = vmul.f32 1.0, %v3867
        %v3869 = vrcp.pop %v3807
        %v3870 = vmul.f32 1.0, %v3869
        %v3871 = vrcp.pop %v3808
        %v3872 = vmul.f32 1.0, %v3871
        %v3873 = vmul.f32 %v3810, %v3810
        %v3874 = vmul.f32 %v3812, %v3812
        %v3875 = vmul.f32 %v3814, %v3814
        %v3876 = vmul.f32 %v3816, %v3816
        %v3877 = vmul.f32 %v3818, %v3818
        %v3878 = vmul.f32 %v3820, %v3820
        %v3879 = vmul.f32 %v3822, %v3822
        %v3880 = vmul.f32 %v3824, %v3824
        %v3881 = vmul.f32 %v3826, %v3826
        %v3882 = vmul.f32 %v3828, %v3828
        %v3883 = vmul.f32 %v3830, %v3830
        %v3884 = vmul.f32 %v3832, %v3832
        %v3885 = vmul.f32 %v3834, %v3834
        %v3886 = vmul.f32 %v3836, %v3836
        %v3887 = vmul.f32 %v3838, %v3838
        %v3888 = vmul.f32 %v3840, %v3840
        %v3889 = vmul.f32 %v3842, %v3842
        %v3890 = vmul.f32 %v3844, %v3844
        %v3891 = vmul.f32 %v3846, %v3846
        %v3892 = vmul.f32 %v3848, %v3848
        %v3893 = vmul.f32 %v3850, %v3850
        %v3894 = vmul.f32 %v3852, %v3852
        %v3895 = vmul.f32 %v3854, %v3854
        %v3896 = vmul.f32 %v3856, %v3856
        %v3897 = vmul.f32 %v3858, %v3858
        %v3898 = vmul.f32 %v3860, %v3860
        %v3899 = vmul.f32 %v3862, %v3862
        %v3900 = vmul.f32 %v3864, %v3864
        %v3901 = vmul.f32 %v3866, %v3866
        %v3902 = vmul.f32 %v3868, %v3868
        %v3903 = vmul.f32 %v3870, %v3870
        %v3904 = vmul.f32 %v3872, %v3872
        %v3905 = vsub.f32 0.0, %v3873
        %v3906 = vsub.f32 0.0, %v3874
        %v3907 = vsub.f32 0.0, %v3875
        %v3908 = vsub.f32 0.0, %v3876
        %v3909 = vsub.f32 0.0, %v3877
        %v3910 = vsub.f32 0.0, %v3878
        %v3911 = vsub.f32 0.0, %v3879
        %v3912 = vsub.f32 0.0, %v3880
        %v3913 = vsub.f32 0.0, %v3881
        %v3914 = vsub.f32 0.0, %v3882
        %v3915 = vsub.f32 0.0, %v3883
        %v3916 = vsub.f32 0.0, %v3884
        %v3917 = vsub.f32 0.0, %v3885
        %v3918 = vsub.f32 0.0, %v3886
        %v3919 = vsub.f32 0.0, %v3887
        %v3920 = vsub.f32 0.0, %v3888
        %v3921 = vsub.f32 0.0, %v3889
        %v3922 = vsub.f32 0.0, %v3890
        %v3923 = vsub.f32 0.0, %v3891
        %v3924 = vsub.f32 0.0, %v3892
        %v3925 = vsub.f32 0.0, %v3893
        %v3926 = vsub.f32 0.0, %v3894
        %v3927 = vsub.f32 0.0, %v3895
        %v3928 = vsub.f32 0.0, %v3896
        %v3929 = vsub.f32 0.0, %v3897
        %v3930 = vsub.f32 0.0, %v3898
        %v3931 = vsub.f32 0.0, %v3899
        %v3932 = vsub.f32 0.0, %v3900
        %v3933 = vsub.f32 0.0, %v3901
        %v3934 = vsub.f32 0.0, %v3902
        %v3935 = vsub.f32 0.0, %v3903
        %v3936 = vsub.f32 0.0, %v3904
        %v3937 = vmul.f32 %v3905, 1.442695
        %v3938 = vpow.pop %v3937
        %v3939 = vmul.f32 %v3906, 1.442695
        %v3940 = vpow.pop %v3939
        %v3941 = vmul.f32 %v3907, 1.442695
        %v3942 = vpow.pop %v3941
        %v3943 = vmul.f32 %v3908, 1.442695
        %v3944 = vpow.pop %v3943
        %v3945 = vmul.f32 %v3909, 1.442695
        %v3946 = vpow.pop %v3945
        %v3947 = vmul.f32 %v3910, 1.442695
        %v3948 = vpow.pop %v3947
        %v3949 = vmul.f32 %v3911, 1.442695
        %v3950 = vpow.pop %v3949
        %v3951 = vmul.f32 %v3912, 1.442695
        %v3952 = vpow.pop %v3951
        %v3953 = vmul.f32 %v3913, 1.442695
        %v3954 = vpow.pop %v3953
        %v3955 = vmul.f32 %v3914, 1.442695
        %v3956 = vpow.pop %v3955
        %v3957 = vmul.f32 %v3915, 1.442695
        %v3958 = vpow.pop %v3957
        %v3959 = vmul.f32 %v3916, 1.442695
        %v3960 = vpow.pop %v3959
        %v3961 = vmul.f32 %v3917, 1.442695
        %v3962 = vpow.pop %v3961
        %v3963 = vmul.f32 %v3918, 1.442695
        %v3964 = vpow.pop %v3963
        %v3965 = vmul.f32 %v3919, 1.442695
        %v3966 = vpow.pop %v3965
        %v3967 = vmul.f32 %v3920, 1.442695
        %v3968 = vpow.pop %v3967
        %v3969 = vmul.f32 %v3921, 1.442695
        %v3970 = vpow.pop %v3969
        %v3971 = vmul.f32 %v3922, 1.442695
        %v3972 = vpow.pop %v3971
        %v3973 = vmul.f32 %v3923, 1.442695
        %v3974 = vpow.pop %v3973
        %v3975 = vmul.f32 %v3924, 1.442695
        %v3976 = vpow.pop %v3975
        %v3977 = vmul.f32 %v3925, 1.442695
        %v3978 = vpow.pop %v3977
        %v3979 = vmul.f32 %v3926, 1.442695
        %v3980 = vpow.pop %v3979
        %v3981 = vmul.f32 %v3927, 1.442695
        %v3982 = vpow.pop %v3981
        %v3983 = vmul.f32 %v3928, 1.442695
        %v3984 = vpow.pop %v3983
        %v3985 = vmul.f32 %v3929, 1.442695
        %v3986 = vpow.pop %v3985
        %v3987 = vmul.f32 %v3930, 1.442695
        %v3988 = vpow.pop %v3987
        %v3989 = vmul.f32 %v3931, 1.442695
        %v3990 = vpow.pop %v3989
        %v3991 = vmul.f32 %v3932, 1.442695
        %v3992 = vpow.pop %v3991
        %v3993 = vmul.f32 %v3933, 1.442695
        %v3994 = vpow.pop %v3993
        %v3995 = vmul.f32 %v3934, 1.442695
        %v3996 = vpow.pop %v3995
        %v3997 = vmul.f32 %v3935, 1.442695
        %v3998 = vpow.pop %v3997
        %v3999 = vmul.f32 %v3936, 1.442695
        %v4000 = vpow.pop %v3999
        %v4001 = vsub.f32 1.0, %v3938
        %v4002 = vsub.f32 1.0, %v3940
        %v4003 = vsub.f32 1.0, %v3942
        %v4004 = vsub.f32 1.0, %v3944
        %v4005 = vsub.f32 1.0, %v3946
        %v4006 = vsub.f32 1.0, %v3948
        %v4007 = vsub.f32 1.0, %v3950
        %v4008 = vsub.f32 1.0, %v3952
        %v4009 = vsub.f32 1.0, %v3954
        %v4010 = vsub.f32 1.0, %v3956
        %v4011 = vsub.f32 1.0, %v3958
        %v4012 = vsub.f32 1.0, %v3960
        %v4013 = vsub.f32 1.0, %v3962
        %v4014 = vsub.f32 1.0, %v3964
        %v4015 = vsub.f32 1.0, %v3966
        %v4016 = vsub.f32 1.0, %v3968
        %v4017 = vsub.f32 1.0, %v3970
        %v4018 = vsub.f32 1.0, %v3972
        %v4019 = vsub.f32 1.0, %v3974
        %v4020 = vsub.f32 1.0, %v3976
        %v4021 = vsub.f32 1.0, %v3978
        %v4022 = vsub.f32 1.0, %v3980
        %v4023 = vsub.f32 1.0, %v3982
        %v4024 = vsub.f32 1.0, %v3984
        %v4025 = vsub.f32 1.0, %v3986
        %v4026 = vsub.f32 1.0, %v3988
        %v4027 = vsub.f32 1.0, %v3990
        %v4028 = vsub.f32 1.0, %v3992
        %v4029 = vsub.f32 1.0, %v3994
        %v4030 = vsub.f32 1.0, %v3996
        %v4031 = vsub.f32 1.0, %v3998
        %v4032 = vsub.f32 1.0, %v4000
        %v4033 = vadd.f32 %v4001, 1e-20
        %v4034 = vadd.f32 %v4002, 1e-20
        %v4035 = vadd.f32 %v4003, 1e-20
        %v4036 = vadd.f32 %v4004, 1e-20
        %v4037 = vadd.f32 %v4005, 1e-20
        %v4038 = vadd.f32 %v4006, 1e-20
        %v4039 = vadd.f32 %v4007, 1e-20
        %v4040 = vadd.f32 %v4008, 1e-20
        %v4041 = vadd.f32 %v4009, 1e-20
        %v4042 = vadd.f32 %v4010, 1e-20
        %v4043 = vadd.f32 %v4011, 1e-20
        %v4044 = vadd.f32 %v4012, 1e-20
        %v4045 = vadd.f32 %v4013, 1e-20
        %v4046 = vadd.f32 %v4014, 1e-20
        %v4047 = vadd.f32 %v4015, 1e-20
        %v4048 = vadd.f32 %v4016, 1e-20
        %v4049 = vadd.f32 %v4017, 1e-20
        %v4050 = vadd.f32 %v4018, 1e-20
        %v4051 = vadd.f32 %v4019, 1e-20
        %v4052 = vadd.f32 %v4020, 1e-20
        %v4053 = vadd.f32 %v4021, 1e-20
        %v4054 = vadd.f32 %v4022, 1e-20
        %v4055 = vadd.f32 %v4023, 1e-20
        %v4056 = vadd.f32 %v4024, 1e-20
        %v4057 = vadd.f32 %v4025, 1e-20
        %v4058 = vadd.f32 %v4026, 1e-20
        %v4059 = vadd.f32 %v4027, 1e-20
        %v4060 = vadd.f32 %v4028, 1e-20
        %v4061 = vadd.f32 %v4029, 1e-20
        %v4062 = vadd.f32 %v4030, 1e-20
        %v4063 = vadd.f32 %v4031, 1e-20
        %v4064 = vadd.f32 %v4032, 1e-20
        %v4065 = vlog2.pop %v4033
        %v4066 = vmul.f32 %v4065, 0.6931472
        %v4067 = vlog2.pop %v4034
        %v4068 = vmul.f32 %v4067, 0.6931472
        %v4069 = vlog2.pop %v4035
        %v4070 = vmul.f32 %v4069, 0.6931472
        %v4071 = vlog2.pop %v4036
        %v4072 = vmul.f32 %v4071, 0.6931472
        %v4073 = vlog2.pop %v4037
        %v4074 = vmul.f32 %v4073, 0.6931472
        %v4075 = vlog2.pop %v4038
        %v4076 = vmul.f32 %v4075, 0.6931472
        %v4077 = vlog2.pop %v4039
        %v4078 = vmul.f32 %v4077, 0.6931472
        %v4079 = vlog2.pop %v4040
        %v4080 = vmul.f32 %v4079, 0.6931472
        %v4081 = vlog2.pop %v4041
        %v4082 = vmul.f32 %v4081, 0.6931472
        %v4083 = vlog2.pop %v4042
        %v4084 = vmul.f32 %v4083, 0.6931472
        %v4085 = vlog2.pop %v4043
        %v4086 = vmul.f32 %v4085, 0.6931472
        %v4087 = vlog2.pop %v4044
        %v4088 = vmul.f32 %v4087, 0.6931472
        %v4089 = vlog2.pop %v4045
        %v4090 = vmul.f32 %v4089, 0.6931472
        %v4091 = vlog2.pop %v4046
        %v4092 = vmul.f32 %v4091, 0.6931472
        %v4093 = vlog2.pop %v4047
        %v4094 = vmul.f32 %v4093, 0.6931472
        %v4095 = vlog2.pop %v4048
        %v4096 = vmul.f32 %v4095, 0.6931472
        %v4097 = vlog2.pop %v4049
        %v4098 = vmul.f32 %v4097, 0.6931472
        %v4099 = vlog2.pop %v4050
        %v4100 = vmul.f32 %v4099, 0.6931472
        %v4101 = vlog2.pop %v4051
        %v4102 = vmul.f32 %v4101, 0.6931472
        %v4103 = vlog2.pop %v4052
        %v4104 = vmul.f32 %v4103, 0.6931472
        %v4105 = vlog2.pop %v4053
        %v4106 = vmul.f32 %v4105, 0.6931472
        %v4107 = vlog2.pop %v4054
        %v4108 = vmul.f32 %v4107, 0.6931472
        %v4109 = vlog2.pop %v4055
        %v4110 = vmul.f32 %v4109, 0.6931472
        %v4111 = vlog2.pop %v4056
        %v4112 = vmul.f32 %v4111, 0.6931472
        %v4113 = vlog2.pop %v4057
        %v4114 = vmul.f32 %v4113, 0.6931472
        %v4115 = vlog2.pop %v4058
        %v4116 = vmul.f32 %v4115, 0.6931472
        %v4117 = vlog2.pop %v4059
        %v4118 = vmul.f32 %v4117, 0.6931472
        %v4119 = vlog2.pop %v4060
        %v4120 = vmul.f32 %v4119, 0.6931472
        %v4121 = vlog2.pop %v4061
        %v4122 = vmul.f32 %v4121, 0.6931472
        %v4123 = vlog2.pop %v4062
        %v4124 = vmul.f32 %v4123, 0.6931472
        %v4125 = vlog2.pop %v4063
        %v4126 = vmul.f32 %v4125, 0.6931472
        %v4127 = vlog2.pop %v4064
        %v4128 = vmul.f32 %v4127, 0.6931472
        %v4129 = vld [vmem:[%s814] sm:$0xff]
        %v4130 = vld [vmem:[%s814 + $0x8] sm:$0xff]
        %v4131 = vld [vmem:[%s814 + $0x10] sm:$0xff]
        %v4132 = vld [vmem:[%s814 + $0x18] sm:$0xff]
        %v4133 = vld [vmem:[%s814 + $0x20] sm:$0xff]
        %v4134 = vld [vmem:[%s814 + $0x28] sm:$0xff]
        %v4135 = vld [vmem:[%s814 + $0x30] sm:$0xff]
        %v4136 = vld [vmem:[%s814 + $0x38] sm:$0xff]
        %v4137 = vld [vmem:[%s814 + $0x40] sm:$0xff]
        %v4138 = vld [vmem:[%s814 + $0x48] sm:$0xff]
        %v4139 = vld [vmem:[%s814 + $0x50] sm:$0xff]
        %v4140 = vld [vmem:[%s814 + $0x58] sm:$0xff]
        %v4141 = vld [vmem:[%s814 + $0x60] sm:$0xff]
        %v4142 = vld [vmem:[%s814 + $0x68] sm:$0xff]
        %v4143 = vld [vmem:[%s814 + $0x70] sm:$0xff]
        %v4144 = vld [vmem:[%s814 + $0x78] sm:$0xff]
        %v4145 = vld [vmem:[%s814 + $0x80] sm:$0xff]
        %v4146 = vld [vmem:[%s814 + $0x88] sm:$0xff]
        %v4147 = vld [vmem:[%s814 + $0x90] sm:$0xff]
        %v4148 = vld [vmem:[%s814 + $0x98] sm:$0xff]
        %v4149 = vld [vmem:[%s814 + $0xa0] sm:$0xff]
        %v4150 = vld [vmem:[%s814 + $0xa8] sm:$0xff]
        %v4151 = vld [vmem:[%s814 + $0xb0] sm:$0xff]
        %v4152 = vld [vmem:[%s814 + $0xb8] sm:$0xff]
        %v4153 = vld [vmem:[%s814 + $0xc0] sm:$0xff]
        %v4154 = vld [vmem:[%s814 + $0xc8] sm:$0xff]
        %v4155 = vld [vmem:[%s814 + $0xd0] sm:$0xff]
        %v4156 = vld [vmem:[%s814 + $0xd8] sm:$0xff]
        %v4157 = vld [vmem:[%s814 + $0xe0] sm:$0xff]
        %v4158 = vld [vmem:[%s814 + $0xe8] sm:$0xff]
        %v4159 = vld [vmem:[%s814 + $0xf0] sm:$0xff]
        %v4160 = vld [vmem:[%s814 + $0xf8] sm:$0xff]
        %v4161 = vmul.f32 %v4066, %v4129
        %v4162 = vmul.f32 %v4068, %v4130
        %v4163 = vmul.f32 %v4070, %v4131
        %v4164 = vmul.f32 %v4072, %v4132
        %v4165 = vmul.f32 %v4074, %v4133
        %v4166 = vmul.f32 %v4076, %v4134
        %v4167 = vmul.f32 %v4078, %v4135
        %v4168 = vmul.f32 %v4080, %v4136
        %v4169 = vmul.f32 %v4082, %v4137
        %v4170 = vmul.f32 %v4084, %v4138
        %v4171 = vmul.f32 %v4086, %v4139
        %v4172 = vmul.f32 %v4088, %v4140
        %v4173 = vmul.f32 %v4090, %v4141
        %v4174 = vmul.f32 %v4092, %v4142
        %v4175 = vmul.f32 %v4094, %v4143
        %v4176 = vmul.f32 %v4096, %v4144
        %v4177 = vmul.f32 %v4098, %v4145
        %v4178 = vmul.f32 %v4100, %v4146
        %v4179 = vmul.f32 %v4102, %v4147
        %v4180 = vmul.f32 %v4104, %v4148
        %v4181 = vmul.f32 %v4106, %v4149
        %v4182 = vmul.f32 %v4108, %v4150
        %v4183 = vmul.f32 %v4110, %v4151
        %v4184 = vmul.f32 %v4112, %v4152
        %v4185 = vmul.f32 %v4114, %v4153
        %v4186 = vmul.f32 %v4116, %v4154
        %v4187 = vmul.f32 %v4118, %v4155
        %v4188 = vmul.f32 %v4120, %v4156
        %v4189 = vmul.f32 %v4122, %v4157
        %v4190 = vmul.f32 %v4124, %v4158
        %v4191 = vmul.f32 %v4126, %v4159
        %v4192 = vmul.f32 %v4128, %v4160
        %v4193 = vld [vmem:[%s823] sm:$0xff]
        %v4194 = vld [vmem:[%s823 + $0x8] sm:$0xff]
        %v4195 = vld [vmem:[%s823 + $0x10] sm:$0xff]
        %v4196 = vld [vmem:[%s823 + $0x18] sm:$0xff]
        %v4197 = vld [vmem:[%s823 + $0x20] sm:$0xff]
        %v4198 = vld [vmem:[%s823 + $0x28] sm:$0xff]
        %v4199 = vld [vmem:[%s823 + $0x30] sm:$0xff]
        %v4200 = vld [vmem:[%s823 + $0x38] sm:$0xff]
        %v4201 = vld [vmem:[%s823 + $0x40] sm:$0xff]
        %v4202 = vld [vmem:[%s823 + $0x48] sm:$0xff]
        %v4203 = vld [vmem:[%s823 + $0x50] sm:$0xff]
        %v4204 = vld [vmem:[%s823 + $0x58] sm:$0xff]
        %v4205 = vld [vmem:[%s823 + $0x60] sm:$0xff]
        %v4206 = vld [vmem:[%s823 + $0x68] sm:$0xff]
        %v4207 = vld [vmem:[%s823 + $0x70] sm:$0xff]
        %v4208 = vld [vmem:[%s823 + $0x78] sm:$0xff]
        %v4209 = vld [vmem:[%s823 + $0x80] sm:$0xff]
        %v4210 = vld [vmem:[%s823 + $0x88] sm:$0xff]
        %v4211 = vld [vmem:[%s823 + $0x90] sm:$0xff]
        %v4212 = vld [vmem:[%s823 + $0x98] sm:$0xff]
        %v4213 = vld [vmem:[%s823 + $0xa0] sm:$0xff]
        %v4214 = vld [vmem:[%s823 + $0xa8] sm:$0xff]
        %v4215 = vld [vmem:[%s823 + $0xb0] sm:$0xff]
        %v4216 = vld [vmem:[%s823 + $0xb8] sm:$0xff]
        %v4217 = vld [vmem:[%s823 + $0xc0] sm:$0xff]
        %v4218 = vld [vmem:[%s823 + $0xc8] sm:$0xff]
        %v4219 = vld [vmem:[%s823 + $0xd0] sm:$0xff]
        %v4220 = vld [vmem:[%s823 + $0xd8] sm:$0xff]
        %v4221 = vld [vmem:[%s823 + $0xe0] sm:$0xff]
        %v4222 = vld [vmem:[%s823 + $0xe8] sm:$0xff]
        %v4223 = vld [vmem:[%s823 + $0xf0] sm:$0xff]
        %v4224 = vld [vmem:[%s823 + $0xf8] sm:$0xff]
        %v4225 = vadd.f32 %v4161, %v4193
        %v4226 = vadd.f32 %v4162, %v4194
        %v4227 = vadd.f32 %v4163, %v4195
        %v4228 = vadd.f32 %v4164, %v4196
        %v4229 = vadd.f32 %v4165, %v4197
        %v4230 = vadd.f32 %v4166, %v4198
        %v4231 = vadd.f32 %v4167, %v4199
        %v4232 = vadd.f32 %v4168, %v4200
        %v4233 = vadd.f32 %v4169, %v4201
        %v4234 = vadd.f32 %v4170, %v4202
        %v4235 = vadd.f32 %v4171, %v4203
        %v4236 = vadd.f32 %v4172, %v4204
        %v4237 = vadd.f32 %v4173, %v4205
        %v4238 = vadd.f32 %v4174, %v4206
        %v4239 = vadd.f32 %v4175, %v4207
        %v4240 = vadd.f32 %v4176, %v4208
        %v4241 = vadd.f32 %v4177, %v4209
        %v4242 = vadd.f32 %v4178, %v4210
        %v4243 = vadd.f32 %v4179, %v4211
        %v4244 = vadd.f32 %v4180, %v4212
        %v4245 = vadd.f32 %v4181, %v4213
        %v4246 = vadd.f32 %v4182, %v4214
        %v4247 = vadd.f32 %v4183, %v4215
        %v4248 = vadd.f32 %v4184, %v4216
        %v4249 = vadd.f32 %v4185, %v4217
        %v4250 = vadd.f32 %v4186, %v4218
        %v4251 = vadd.f32 %v4187, %v4219
        %v4252 = vadd.f32 %v4188, %v4220
        %v4253 = vadd.f32 %v4189, %v4221
        %v4254 = vadd.f32 %v4190, %v4222
        %v4255 = vadd.f32 %v4191, %v4223
        %v4256 = vadd.f32 %v4192, %v4224
        %4257 = vst [vmem:[%s932] sm:$0xff] %v4225
        %4258 = vst [vmem:[%s932 + $0x8] sm:$0xff] %v4226
        %4259 = vst [vmem:[%s932 + $0x10] sm:$0xff] %v4227
        %4260 = vst [vmem:[%s932 + $0x18] sm:$0xff] %v4228
        %4261 = vst [vmem:[%s932 + $0x20] sm:$0xff] %v4229
        %4262 = vst [vmem:[%s932 + $0x28] sm:$0xff] %v4230
        %4263 = vst [vmem:[%s932 + $0x30] sm:$0xff] %v4231
        %4264 = vst [vmem:[%s932 + $0x38] sm:$0xff] %v4232
        %4265 = vst [vmem:[%s932 + $0x40] sm:$0xff] %v4233
        %4266 = vst [vmem:[%s932 + $0x48] sm:$0xff] %v4234
        %4267 = vst [vmem:[%s932 + $0x50] sm:$0xff] %v4235
        %4268 = vst [vmem:[%s932 + $0x58] sm:$0xff] %v4236
        %4269 = vst [vmem:[%s932 + $0x60] sm:$0xff] %v4237
        %4270 = vst [vmem:[%s932 + $0x68] sm:$0xff] %v4238
        %4271 = vst [vmem:[%s932 + $0x70] sm:$0xff] %v4239
        %4272 = vst [vmem:[%s932 + $0x78] sm:$0xff] %v4240
        %4273 = vst [vmem:[%s932 + $0x80] sm:$0xff] %v4241
        %4274 = vst [vmem:[%s932 + $0x88] sm:$0xff] %v4242
        %4275 = vst [vmem:[%s932 + $0x90] sm:$0xff] %v4243
        %4276 = vst [vmem:[%s932 + $0x98] sm:$0xff] %v4244
        %4277 = vst [vmem:[%s932 + $0xa0] sm:$0xff] %v4245
        %4278 = vst [vmem:[%s932 + $0xa8] sm:$0xff] %v4246
        %4279 = vst [vmem:[%s932 + $0xb0] sm:$0xff] %v4247
        %4280 = vst [vmem:[%s932 + $0xb8] sm:$0xff] %v4248
        %4281 = vst [vmem:[%s932 + $0xc0] sm:$0xff] %v4249
        %4282 = vst [vmem:[%s932 + $0xc8] sm:$0xff] %v4250
        %4283 = vst [vmem:[%s932 + $0xd0] sm:$0xff] %v4251
        %4284 = vst [vmem:[%s932 + $0xd8] sm:$0xff] %v4252
        %4285 = vst [vmem:[%s932 + $0xe0] sm:$0xff] %v4253
        %4286 = vst [vmem:[%s932 + $0xe8] sm:$0xff] %v4254
        %4287 = vst [vmem:[%s932 + $0xf0] sm:$0xff] %v4255
        %4288 = vst [vmem:[%s932 + $0xf8] sm:$0xff] %v4256
        %s4289 = sand.u32 %s526, 1
        %s4290 = scalar_lea.sflag [#allocation4], %s4289
        %s4291 = sand.u32 %s526, 1
        %s4292 = smul.addr %s4291, 128
        %s4293 = scalar_lea.vmem [#allocation19], %s4292
        %s4294 = sand.u32 %s552, 1
        %s4295 = scalar_lea.sflag [#allocation21], %s4294
        %s4296 = sand.u32 %s552, 1
        %s4297 = smul.addr %s4296, 256
        %s4298 = scalar_lea.vmem [#allocation20], %s4297
        // Predicated region
        $region145: #{tpu_custom_call.1} parent=103 // pred_check
          %p4299 = pneg %p536
        $region146: #{tpu_custom_call.1} parent=103 // pred_check_branch
          %4301 = sbr.rel (%p4299) target = $region148
        $region147: #{tpu_custom_call.1} parent=103 // pred_region
          %s4302 = smul.u32 16, %s52
          %s4304 = ssub.s32 2048, 2048
          %4305 = vsyncadd %s4290, %s4304
          %s4306 = smul.addr %s4302, 128
          %s4307 = scalar_lea.hbm %s21, %s4306
          %s4308 = sshll.u32 %s4293, 4
          %s4309 = int_to_ptr.vmem [resolvable:$true] %s4308
          %4314 = dma.vmem_to_hbm [thread:$0]  %s4309, 2048, %s4307, %s4290, 128, 128, 8
        $region148: #{tpu_custom_call.1} parent=103 // pred_fallthru
          _
        // Predicated region
        $region149: #{tpu_custom_call.1} parent=103 // pred_check
          %p4315 = pneg %p562
        $region150: #{tpu_custom_call.1} parent=103 // pred_check_branch
          %4317 = sbr.rel (%p4315) target = $region152
        $region151: #{tpu_custom_call.1} parent=103 // pred_region
          %s4318 = smul.u32 16, %s52
          %s4320 = ssub.s32 4096, 4096
          %4321 = vsyncadd %s4295, %s4320
          %s4322 = smul.addr %s4318, 2
          %s4323 = smul.addr %s4322, 128
          %s4324 = scalar_lea.hbm %s22, %s4323
          %s4325 = sshll.u32 %s4298, 4
          %s4326 = int_to_ptr.vmem [resolvable:$true] %s4325
          %4331 = dma.vmem_to_hbm [thread:$0]  %s4326, 4096, %s4324, %s4295, 256, 256, 16
        $region152: #{tpu_custom_call.1} parent=103 // pred_fallthru
          _
      $region104: #{tpu_custom_call.1} parent=5 // pred_fallthru
        _
      %p4332 = scmp.le.s32.totalorder 2, %s47
      // Predicated region
      $region153: #{tpu_custom_call.1} parent=5 // pred_check
        %p4333 = pneg %p4332
      $region154: #{tpu_custom_call.1} parent=5 // pred_check_branch
        %4335 = sbr.rel (%p4333) target = $region156
      $region155: #{tpu_custom_call.1} parent=5 // pred_region
        %s4336 = ssub.s32 %s47, 2
        // Predicated region
        $region157: #{tpu_custom_call.1} parent=155 // pred_check
          %p4337 = pneg %p542
        $region158: #{tpu_custom_call.1} parent=155 // pred_check_branch
          %4339 = sbr.rel (%p4337) target = $region160
        $region159: #{tpu_custom_call.1} parent=155 // pred_region
          %s4340 = sand.u32 %s527, 1
          %s4341 = scalar_lea.sflag [#allocation4], %s4340
          %s4342 = sand.u32 %s527, 1
          %s4343 = smul.addr %s4342, 128
          %s4344 = scalar_lea.vmem [#allocation19], %s4343
          %4345 = dma.done %s4341, 2048
        $region160: #{tpu_custom_call.1} parent=155 // pred_fallthru
          _
        // Predicated region
        $region161: #{tpu_custom_call.1} parent=155 // pred_check
          %p4346 = pneg %p568
        $region162: #{tpu_custom_call.1} parent=155 // pred_check_branch
          %4348 = sbr.rel (%p4346) target = $region164
        $region163: #{tpu_custom_call.1} parent=155 // pred_region
          %s4349 = sand.u32 %s553, 1
          %s4350 = scalar_lea.sflag [#allocation21], %s4349
          %s4351 = sand.u32 %s553, 1
          %s4352 = smul.addr %s4351, 256
          %s4353 = scalar_lea.vmem [#allocation20], %s4352
          %4354 = dma.done %s4350, 4096
        $region164: #{tpu_custom_call.1} parent=155 // pred_fallthru
          _
      $region156: #{tpu_custom_call.1} parent=5 // pred_fallthru
        _
    $region6: #{tpu_custom_call.1} parent=1 // loop_footer
      %s51 = sadd.s32 1, %s47
    $region7: #{tpu_custom_call.1} parent=1 // loop_footer_branch
      %46 = sbr.rel target = $region3
    $region8: #{tpu_custom_call.1} parent=1 // loop_exit
      _
    %4355 = vsyncpa [#allocation3], 1
    %s4356 = scalar_lea.sflag [#allocation3], 1
    %4357 = vsyncpa %s4356, 1
    %4358 = vsyncpa [#allocation6], 1
    %s4359 = scalar_lea.sflag [#allocation6], 1
    %4360 = vsyncpa %s4359, 1
    %4361 = vsyncpa [#allocation9], 1
    %s4362 = scalar_lea.sflag [#allocation9], 1
    %4363 = vsyncpa %s4362, 1
    %4364 = vsyncpa [#allocation12], 1
    %4365 = vsyncpa [#allocation15], 1
    %4366 = vsyncpa [#allocation18], 1
    %4367 = vsyncpa [#allocation4], 1
    %s4368 = scalar_lea.sflag [#allocation4], 1
    %4369 = vsyncpa %s4368, 1
    %4370 = vsyncpa [#allocation21], 1
    %s4371 = scalar_lea.sflag [#allocation21], 1
    %4372 = vsyncpa %s4371, 1

</llo_original>
